<compile_context>
chip_gen: v6e
topology: v6e:2x2x1
jax: 0.10.0
libtpu: 0.0.40
codegen_flags: <defaults>
</compile_context>

<pallas_src>
import functools

import jax
import jax.numpy as jnp
from jax import lax
from jax.experimental import pallas as pl
from jax.experimental.pallas import tpu as pltpu


# ---------------------------------------------------------------------------
# Fused kernel (one batch element per grid step)
# ---------------------------------------------------------------------------
def _residual_fused_kernel(
    x_ref, w1_ref, w2_ref, wsk_ref,
    s1_ref, b1_ref, s2_ref, b2_ref, ss_ref, bs_ref,
    o_ref,
    xpad_ref, p1_ref, rpad_ref, p2_ref,
    *, k, stride, pad, ho, wo, conv_skip):
    """Fused residual block.

    x_ref  : (1, Cin, H, W)            input tile (NCHW, channel-major)
    w1_ref : (Cout, k*k*Cin)  bf16     conv1 weights, rows = (kh, kw, ci)
    w2_ref : (Cout, k*k*Cout) bf16     conv2 weights
    wsk_ref: (Cout, Cin)      bf16     1x1 skip-conv weights
    s*/b*  : (Cout, 1) f32             folded BN scale / bias
    o_ref  : (1, Cout, Ho*Wo) f32      lane-dense channel-major output
    scratch: xpad (Cin, H+2p, W+2p) f32, p1 (k*k*Cin, Ho*Wo) bf16,
             rpad (Cout, Ho+2p, Wo+2p) f32, p2 (k*k*Cout, Ho*Wo) bf16
    """
    Cin = x_ref.shape[1]
    H, W = x_ref.shape[2], x_ref.shape[3]
    Cout = o_ref.shape[1]
    HWo = ho * wo

    # ---- zero-pad the input tile in VMEM (padding never touches HBM) -------
    xpad_ref[...] = jnp.zeros(xpad_ref.shape, xpad_ref.dtype)
    xpad_ref[:, pad:pad + H, pad:pad + W] = x_ref[0]

    # ---- im2col for conv1: rows = (kh, kw, ci), cols = output pixels -------
    xpad = xpad_ref[...]
    for kh in range(k):
        for kw in range(k):
            t = kh * k + kw
            patch = xpad[:, kh:kh + (ho - 1) * stride + 1:stride,
                            kw:kw + (wo - 1) * stride + 1:stride]
            p1_ref[t * Cin:(t + 1) * Cin, :] = (
                patch.reshape(Cin, HWo).astype(p1_ref.dtype))

    # ---- conv1 + BN1 + ReLU: (Cout, k*k*Cin) @ (k*k*Cin, Ho*Wo) on the MXU --
    acc1 = jnp.dot(w1_ref[...], p1_ref[...], preferred_element_type=jnp.float32)
    r1 = jnp.maximum(acc1 * s1_ref[...] + b1_ref[...], 0.0)   # (Cout, HWo) f32

    # ---- relu1 stays resident in VMEM, re-padded for conv2 -----------------
    rpad_ref[...] = jnp.zeros(rpad_ref.shape, rpad_ref.dtype)
    rpad_ref[:, pad:pad + ho, pad:pad + wo] = r1.reshape(Cout, ho, wo)

    rpad = rpad_ref[...]
    for kh in range(k):
        for kw in range(k):
            t = kh * k + kw
            patch = rpad[:, kh:kh + ho, kw:kw + wo]
            p2_ref[t * Cout:(t + 1) * Cout, :] = (
                patch.reshape(Cout, HWo).astype(p2_ref.dtype))

    # ---- conv2 + BN2 --------------------------------------------------------
    acc2 = jnp.dot(w2_ref[...], p2_ref[...], preferred_element_type=jnp.float32)
    main = acc2 * s2_ref[...] + b2_ref[...]

    # ---- skip path shares the already-resident input tile ------------------
    xin = x_ref[0]
    if stride > 1:
        xin = xin[:, ::stride, ::stride][:, :ho, :wo]
    xs = xin.reshape(Cin, HWo)
    if conv_skip:
        skip = jnp.dot(wsk_ref[...], xs.astype(wsk_ref.dtype),
                       preferred_element_type=jnp.float32)
        skip = skip * ss_ref[...] + bs_ref[...]
    else:
        skip = xs  # identity skip (stride == 1 and Cin == Cout)

    # ---- residual add + ReLU, lane-dense store ------------------------------
    o_ref[0] = jnp.maximum(main + skip, 0.0).astype(o_ref.dtype)


# ---------------------------------------------------------------------------
# Wrapper
# ---------------------------------------------------------------------------
def residual_forward(x_nchw, params, *, k=3, stride=1):
    x = x_nchw.astype(jnp.float32)                      # keep NCHW (channel-major)
    N, Cin, H, W = x.shape
    Cout = params["w1"].shape[-1]
    pad = (k - 1) // 2
    Ho = (H + 2 * pad - k) // stride + 1
    Wo = (W + 2 * pad - k) // stride + 1
    HWo = Ho * Wo
    conv_skip = (stride != 1) or (Cin != Cout)

    # One-time weight re-layouts for the channel-major matmuls (bf16 MXU inputs).
    w1_cm = jnp.transpose(params["w1"], (3, 0, 1, 2)).reshape(Cout, k * k * Cin)
    w2_cm = jnp.transpose(params["w2"], (3, 0, 1, 2)).reshape(Cout, k * k * Cout)
    wsk_cm = jnp.transpose(params["wskip"], (1, 0))
    w1_cm = w1_cm.astype(jnp.bfloat16)
    w2_cm = w2_cm.astype(jnp.bfloat16)
    wsk_cm = wsk_cm.astype(jnp.bfloat16)

    def col(v):  # per-channel scale/bias as (Cout, 1): sublane-broadcast on lanes
        return v.reshape(Cout, 1).astype(jnp.float32)

    scalar_spec = pl.BlockSpec((Cout, 1), lambda n: (0, 0))

    out = pl.pallas_call(
        functools.partial(_residual_fused_kernel, k=k, stride=stride, pad=pad,
                          ho=Ho, wo=Wo, conv_skip=conv_skip),
        out_shape=jax.ShapeDtypeStruct((N, Cout, HWo), jnp.float32),
        grid=(N,),
        in_specs=[
            pl.BlockSpec((1, Cin, H, W), lambda n: (n, 0, 0, 0)),
            pl.BlockSpec((Cout, k * k * Cin), lambda n: (0, 0)),
            pl.BlockSpec((Cout, k * k * Cout), lambda n: (0, 0)),
            pl.BlockSpec((Cout, Cin), lambda n: (0, 0)),
            scalar_spec, scalar_spec, scalar_spec, scalar_spec,
            scalar_spec, scalar_spec,
        ],
        out_specs=pl.BlockSpec((1, Cout, HWo), lambda n: (n, 0, 0)),
        scratch_shapes=[
            pltpu.VMEM((Cin, H + 2 * pad, W + 2 * pad), jnp.float32),   # xpad
            pltpu.VMEM((k * k * Cin, HWo), jnp.bfloat16),               # im2col 1
            pltpu.VMEM((Cout, Ho + 2 * pad, Wo + 2 * pad), jnp.float32),# relu1 pad
            pltpu.VMEM((k * k * Cout, HWo), jnp.bfloat16),              # im2col 2
        ],
        compiler_params=pltpu.CompilerParams(
            dimension_semantics=("parallel",),
            vmem_limit_bytes=64 * 1024 * 1024),
    )(x, w1_cm, w2_cm, wsk_cm,
      col(params["scale1"]), col(params["bias1"]),
      col(params["scale2"]), col(params["bias2"]),
      col(params["scales"]), col(params["biass"]))

    # (N, Cout, Ho*Wo) -> NCHW is a free contiguous reshape (no transpose).
    return out.reshape(N, Cout, Ho, Wo)


# ---------------------------------------------------------------------------
# Deterministic synthetic parameters (BN folded into scale/bias, eps = 1e-5)
# ---------------------------------------------------------------------------
def init_params(key, inp_dim, out_dim, k=3, eps=1e-5):
    ks = jax.random.split(key, 6)

    def bn(bkey):
        g, b, m, v = jax.random.split(bkey, 4)
        gamma = 1.0 + 0.1 * jax.random.normal(g, (out_dim,), jnp.float32)
        beta = 0.1 * jax.random.normal(b, (out_dim,), jnp.float32)
        mean = 0.1 * jax.random.normal(m, (out_dim,), jnp.float32)
        var = jnp.abs(jax.random.normal(v, (out_dim,), jnp.float32)) + 0.5
        scale = gamma / jnp.sqrt(var + eps)
        bias = beta - mean * scale
        return scale, bias

    w1 = 0.1 * jax.random.normal(ks[0], (k, k, inp_dim, out_dim), jnp.float32)
    w2 = 0.1 * jax.random.normal(ks[1], (k, k, out_dim, out_dim), jnp.float32)
    wskip = 0.1 * jax.random.normal(ks[2], (inp_dim, out_dim), jnp.float32)
    s1, b1 = bn(ks[3])
    s2, b2 = bn(ks[4])
    ss, bs = bn(ks[5])
    return dict(w1=w1, w2=w2, wskip=wskip,
                scale1=s1, bias1=b1, scale2=s2, bias2=b2, scales=ss, biass=bs)


# ---------------------------------------------------------------------------
# Pure-JAX f32 reference (same math) for verification
# ---------------------------------------------------------------------------
def ref_forward(x_nchw, p, *, k=3, stride=1):
    x = jnp.transpose(x_nchw, (0, 2, 3, 1)).astype(jnp.float32)  # NHWC
    pad = (k - 1) // 2
    dn = ("NHWC", "HWIO", "NHWC")
    c1 = lax.conv_general_dilated(x, p["w1"], (stride, stride),
                                  ((pad, pad), (pad, pad)), dimension_numbers=dn)
    r1 = jnp.maximum(c1 * p["scale1"] + p["bias1"], 0.0)
    c2 = lax.conv_general_dilated(r1, p["w2"], (1, 1),
                                  ((pad, pad), (pad, pad)), dimension_numbers=dn)
    main = c2 * p["scale2"] + p["bias2"]
    inp_dim, out_dim = x.shape[-1], p["w1"].shape[-1]
    if stride != 1 or inp_dim != out_dim:
        sk = jnp.einsum("nhwc,cd->nhwd", x[:, ::stride, ::stride, :], p["wskip"])
        sk = sk * p["scales"] + p["biass"]
    else:
        sk = x[:, ::stride, ::stride, :]
    return jnp.transpose(jnp.maximum(main + sk, 0.0), (0, 3, 1, 2))


if __name__ == "__main__":
    key = jax.random.PRNGKey(0)
    kx, kp = jax.random.split(key)

    # residual(inp_dim=4, out_dim=8, k=3, stride=1) -> skip = 1x1 conv + BN
    N, Cin, H, W = 2, 4, 16, 16
    Cout = 8

    x_nchw = jax.random.normal(kx, (N, Cin, H, W), jnp.float32)
    params = init_params(kp, Cin, Cout, k=3)

    out = residual_forward(x_nchw, params, k=3, stride=1)
    out = jax.block_until_ready(out)

    ref = ref_forward(x_nchw, params, k=3, stride=1)
    assert out.shape == (N, Cout, H, W), out.shape
    max_err = float(jnp.max(jnp.abs(out - ref)))
    # bf16 MXU operands with f32 accumulation -> loosened tolerance vs f32 ref
    assert jnp.allclose(out, ref, atol=5e-2, rtol=5e-2), max_err

    print("KERNEL_OK")
</pallas_src>

<mosaic_0001>
module attributes {stable_mosaic.version = 11 : i64} {
  func.func @_residual_fused_kernel(%arg0: i32, %arg1: memref<1x4x16x16xf32, #tpu.memory_space<vmem>>, %arg2: memref<8x36xbf16, #tpu.memory_space<vmem>>, %arg3: memref<8x72xbf16, #tpu.memory_space<vmem>>, %arg4: memref<8x4xbf16, #tpu.memory_space<vmem>>, %arg5: memref<8x1xf32, #tpu.memory_space<vmem>>, %arg6: memref<8x1xf32, #tpu.memory_space<vmem>>, %arg7: memref<8x1xf32, #tpu.memory_space<vmem>>, %arg8: memref<8x1xf32, #tpu.memory_space<vmem>>, %arg9: memref<8x1xf32, #tpu.memory_space<vmem>>, %arg10: memref<8x1xf32, #tpu.memory_space<vmem>>, %arg11: memref<1x8x256xf32, #tpu.memory_space<vmem>>, %arg12: memref<4x18x18xf32, #tpu.memory_space<vmem>>, %arg13: memref<36x256xbf16, #tpu.memory_space<vmem>>, %arg14: memref<8x18x18xf32, #tpu.memory_space<vmem>>, %arg15: memref<72x256xbf16, #tpu.memory_space<vmem>>) attributes {dimension_semantics = [#tpu.dimension_semantics<parallel>], iteration_bounds = array<i64: 2>, scalar_prefetch = 0 : i64, scratch_operands = 4 : i64, tpu.core_type = #tpu.core_type<tc>, window_params = [{transform_indices = @transform_0, window_bounds = array<i64: 1, 4, 16, 16>}, {pipeline_mode = #tpu.pipeline_mode<synchronous>, transform_indices = @transform_1, window_bounds = array<i64: 8, 36>}, {pipeline_mode = #tpu.pipeline_mode<synchronous>, transform_indices = @transform_2, window_bounds = array<i64: 8, 72>}, {pipeline_mode = #tpu.pipeline_mode<synchronous>, transform_indices = @transform_3, window_bounds = array<i64: 8, 4>}, {pipeline_mode = #tpu.pipeline_mode<synchronous>, transform_indices = @transform_4, window_bounds = array<i64: 8, 1>}, {pipeline_mode = #tpu.pipeline_mode<synchronous>, transform_indices = @transform_5, window_bounds = array<i64: 8, 1>}, {pipeline_mode = #tpu.pipeline_mode<synchronous>, transform_indices = @transform_6, window_bounds = array<i64: 8, 1>}, {pipeline_mode = #tpu.pipeline_mode<synchronous>, transform_indices = @transform_7, window_bounds = array<i64: 8, 1>}, {pipeline_mode = #tpu.pipeline_mode<synchronous>, transform_indices = @transform_8, window_bounds = array<i64: 8, 1>}, {pipeline_mode = #tpu.pipeline_mode<synchronous>, transform_indices = @transform_9, window_bounds = array<i64: 8, 1>}, {transform_indices = @transform_10, window_bounds = array<i64: 1, 8, 256>}]} {
    %cst = arith.constant 0.000000e+00 : f32
    %0 = vector.broadcast %cst : f32 to vector<4x18x18xf32>
    %c0 = arith.constant 0 : index
    %c0_0 = arith.constant 0 : index
    %c0_1 = arith.constant 0 : index
    %1 = vector.load %arg12[%c0, %c0_0, %c0_1] : memref<4x18x18xf32, #tpu.memory_space<vmem>>, vector<4x18x18xf32>
    tpu.vector_store %arg12[%c0, %c0_0, %c0_1], %0 {strides = array<i32>} : memref<4x18x18xf32, #tpu.memory_space<vmem>>, vector<4x18x18xf32>,
    %c0_2 = arith.constant 0 : index
    %c0_3 = arith.constant 0 : index
    %c0_4 = arith.constant 0 : index
    %c0_5 = arith.constant 0 : index
    %2 = vector.load %arg1[%c0_2, %c0_3, %c0_4, %c0_5] : memref<1x4x16x16xf32, #tpu.memory_space<vmem>>, vector<1x4x16x16xf32>
    %3 = vector.shape_cast %2 : vector<1x4x16x16xf32> to vector<4x16x16xf32>
    %c0_6 = arith.constant 0 : index
    %c1 = arith.constant 1 : index
    %c1_7 = arith.constant 1 : index
    %4 = vector.load %arg12[%c0_6, %c1, %c1_7] : memref<4x18x18xf32, #tpu.memory_space<vmem>>, vector<4x16x16xf32>
    tpu.vector_store %arg12[%c0_6, %c1, %c1_7], %3 {strides = array<i32>} : memref<4x18x18xf32, #tpu.memory_space<vmem>>, vector<4x16x16xf32>,
    %c0_8 = arith.constant 0 : index
    %c0_9 = arith.constant 0 : index
    %c0_10 = arith.constant 0 : index
    %5 = vector.load %arg12[%c0_8, %c0_9, %c0_10] : memref<4x18x18xf32, #tpu.memory_space<vmem>>, vector<4x18x18xf32>
    %6 = vector.extract_strided_slice %5 {offsets = [0, 0, 0], sizes = [4, 16, 16], strides = [1, 1, 1]} : vector<4x18x18xf32> to vector<4x16x16xf32>
    %7 = vector.shape_cast %6 : vector<4x16x16xf32> to vector<4x256xf32>
    %8 = arith.truncf %7 : vector<4x256xf32> to vector<4x256xbf16>
    %c0_11 = arith.constant 0 : index
    %c0_12 = arith.constant 0 : index
    %9 = vector.load %arg13[%c0_11, %c0_12] : memref<36x256xbf16, #tpu.memory_space<vmem>>, vector<4x256xbf16>
    tpu.vector_store %arg13[%c0_11, %c0_12], %8 {strides = array<i32>} : memref<36x256xbf16, #tpu.memory_space<vmem>>, vector<4x256xbf16>,
    %10 = vector.extract_strided_slice %5 {offsets = [0, 0, 1], sizes = [4, 16, 16], strides = [1, 1, 1]} : vector<4x18x18xf32> to vector<4x16x16xf32>
    %11 = vector.shape_cast %10 : vector<4x16x16xf32> to vector<4x256xf32>
    %12 = arith.truncf %11 : vector<4x256xf32> to vector<4x256xbf16>
    %c4 = arith.constant 4 : index
    %c0_13 = arith.constant 0 : index
    %13 = vector.load %arg13[%c4, %c0_13] : memref<36x256xbf16, #tpu.memory_space<vmem>>, vector<4x256xbf16>
    tpu.vector_store %arg13[%c4, %c0_13], %12 {strides = array<i32>} : memref<36x256xbf16, #tpu.memory_space<vmem>>, vector<4x256xbf16>,
    %14 = vector.extract_strided_slice %5 {offsets = [0, 0, 2], sizes = [4, 16, 16], strides = [1, 1, 1]} : vector<4x18x18xf32> to vector<4x16x16xf32>
    %15 = vector.shape_cast %14 : vector<4x16x16xf32> to vector<4x256xf32>
    %16 = arith.truncf %15 : vector<4x256xf32> to vector<4x256xbf16>
    %c8 = arith.constant 8 : index
    %c0_14 = arith.constant 0 : index
    %17 = vector.load %arg13[%c8, %c0_14] : memref<36x256xbf16, #tpu.memory_space<vmem>>, vector<4x256xbf16>
    tpu.vector_store %arg13[%c8, %c0_14], %16 {strides = array<i32>} : memref<36x256xbf16, #tpu.memory_space<vmem>>, vector<4x256xbf16>,
    %18 = vector.extract_strided_slice %5 {offsets = [0, 1, 0], sizes = [4, 16, 16], strides = [1, 1, 1]} : vector<4x18x18xf32> to vector<4x16x16xf32>
    %19 = vector.shape_cast %18 : vector<4x16x16xf32> to vector<4x256xf32>
    %20 = arith.truncf %19 : vector<4x256xf32> to vector<4x256xbf16>
    %c12 = arith.constant 12 : index
    %c0_15 = arith.constant 0 : index
    %21 = vector.load %arg13[%c12, %c0_15] : memref<36x256xbf16, #tpu.memory_space<vmem>>, vector<4x256xbf16>
    tpu.vector_store %arg13[%c12, %c0_15], %20 {strides = array<i32>} : memref<36x256xbf16, #tpu.memory_space<vmem>>, vector<4x256xbf16>,
    %22 = vector.extract_strided_slice %5 {offsets = [0, 1, 1], sizes = [4, 16, 16], strides = [1, 1, 1]} : vector<4x18x18xf32> to vector<4x16x16xf32>
    %23 = vector.shape_cast %22 : vector<4x16x16xf32> to vector<4x256xf32>
    %24 = arith.truncf %23 : vector<4x256xf32> to vector<4x256xbf16>
    %c16 = arith.constant 16 : index
    %c0_16 = arith.constant 0 : index
    %25 = vector.load %arg13[%c16, %c0_16] : memref<36x256xbf16, #tpu.memory_space<vmem>>, vector<4x256xbf16>
    tpu.vector_store %arg13[%c16, %c0_16], %24 {strides = array<i32>} : memref<36x256xbf16, #tpu.memory_space<vmem>>, vector<4x256xbf16>,
    %26 = vector.extract_strided_slice %5 {offsets = [0, 1, 2], sizes = [4, 16, 16], strides = [1, 1, 1]} : vector<4x18x18xf32> to vector<4x16x16xf32>
    %27 = vector.shape_cast %26 : vector<4x16x16xf32> to vector<4x256xf32>
    %28 = arith.truncf %27 : vector<4x256xf32> to vector<4x256xbf16>
    %c20 = arith.constant 20 : index
    %c0_17 = arith.constant 0 : index
    %29 = vector.load %arg13[%c20, %c0_17] : memref<36x256xbf16, #tpu.memory_space<vmem>>, vector<4x256xbf16>
    tpu.vector_store %arg13[%c20, %c0_17], %28 {strides = array<i32>} : memref<36x256xbf16, #tpu.memory_space<vmem>>, vector<4x256xbf16>,
    %30 = vector.extract_strided_slice %5 {offsets = [0, 2, 0], sizes = [4, 16, 16], strides = [1, 1, 1]} : vector<4x18x18xf32> to vector<4x16x16xf32>
    %31 = vector.shape_cast %30 : vector<4x16x16xf32> to vector<4x256xf32>
    %32 = arith.truncf %31 : vector<4x256xf32> to vector<4x256xbf16>
    %c24 = arith.constant 24 : index
    %c0_18 = arith.constant 0 : index
    %33 = vector.load %arg13[%c24, %c0_18] : memref<36x256xbf16, #tpu.memory_space<vmem>>, vector<4x256xbf16>
    tpu.vector_store %arg13[%c24, %c0_18], %32 {strides = array<i32>} : memref<36x256xbf16, #tpu.memory_space<vmem>>, vector<4x256xbf16>,
    %34 = vector.extract_strided_slice %5 {offsets = [0, 2, 1], sizes = [4, 16, 16], strides = [1, 1, 1]} : vector<4x18x18xf32> to vector<4x16x16xf32>
    %35 = vector.shape_cast %34 : vector<4x16x16xf32> to vector<4x256xf32>
    %36 = arith.truncf %35 : vector<4x256xf32> to vector<4x256xbf16>
    %c28 = arith.constant 28 : index
    %c0_19 = arith.constant 0 : index
    %37 = vector.load %arg13[%c28, %c0_19] : memref<36x256xbf16, #tpu.memory_space<vmem>>, vector<4x256xbf16>
    tpu.vector_store %arg13[%c28, %c0_19], %36 {strides = array<i32>} : memref<36x256xbf16, #tpu.memory_space<vmem>>, vector<4x256xbf16>,
    %38 = vector.extract_strided_slice %5 {offsets = [0, 2, 2], sizes = [4, 16, 16], strides = [1, 1, 1]} : vector<4x18x18xf32> to vector<4x16x16xf32>
    %39 = vector.shape_cast %38 : vector<4x16x16xf32> to vector<4x256xf32>
    %40 = arith.truncf %39 : vector<4x256xf32> to vector<4x256xbf16>
    %c32 = arith.constant 32 : index
    %c0_20 = arith.constant 0 : index
    %41 = vector.load %arg13[%c32, %c0_20] : memref<36x256xbf16, #tpu.memory_space<vmem>>, vector<4x256xbf16>
    tpu.vector_store %arg13[%c32, %c0_20], %40 {strides = array<i32>} : memref<36x256xbf16, #tpu.memory_space<vmem>>, vector<4x256xbf16>,
    %c0_21 = arith.constant 0 : index
    %c0_22 = arith.constant 0 : index
    %42 = vector.load %arg2[%c0_21, %c0_22] : memref<8x36xbf16, #tpu.memory_space<vmem>>, vector<8x36xbf16>
    %c0_23 = arith.constant 0 : index
    %c0_24 = arith.constant 0 : index
    %43 = vector.load %arg13[%c0_23, %c0_24] : memref<36x256xbf16, #tpu.memory_space<vmem>>, vector<36x256xbf16>
    %cst_25 = arith.constant dense<0.000000e+00> : vector<8x256xf32>
    %44 = tpu.matmul %42, %43, %cst_25 {dimension_numbers = #tpu.dot_dimension_numbers<[1], [0], [0], [1], [0, 0, 1, 1], [], []>} : vector<8x36xbf16>, vector<36x256xbf16>, vector<8x256xf32> -> vector<8x256xf32>
    %c0_26 = arith.constant 0 : index
    %c0_27 = arith.constant 0 : index
    %45 = vector.load %arg5[%c0_26, %c0_27] : memref<8x1xf32, #tpu.memory_space<vmem>>, vector<8x1xf32>
    %46 = vector.broadcast %45 : vector<8x1xf32> to vector<8x256xf32>
    %47 = arith.mulf %44, %46 : vector<8x256xf32>
    %c0_28 = arith.constant 0 : index
    %c0_29 = arith.constant 0 : index
    %48 = vector.load %arg6[%c0_28, %c0_29] : memref<8x1xf32, #tpu.memory_space<vmem>>, vector<8x1xf32>
    %49 = vector.broadcast %48 : vector<8x1xf32> to vector<8x256xf32>
    %50 = arith.addf %47, %49 : vector<8x256xf32>
    %cst_30 = arith.constant 0.000000e+00 : f32
    %51 = vector.broadcast %cst_30 : f32 to vector<8x256xf32>
    %52 = arith.maximumf %50, %51 : vector<8x256xf32>
    %cst_31 = arith.constant 0.000000e+00 : f32
    %53 = vector.broadcast %cst_31 : f32 to vector<8x18x18xf32>
    %c0_32 = arith.constant 0 : index
    %c0_33 = arith.constant 0 : index
    %c0_34 = arith.constant 0 : index
    %54 = vector.load %arg14[%c0_32, %c0_33, %c0_34] : memref<8x18x18xf32, #tpu.memory_space<vmem>>, vector<8x18x18xf32>
    tpu.vector_store %arg14[%c0_32, %c0_33, %c0_34], %53 {strides = array<i32>} : memref<8x18x18xf32, #tpu.memory_space<vmem>>, vector<8x18x18xf32>,
    %55 = vector.shape_cast %52 : vector<8x256xf32> to vector<8x16x16xf32>
    %c0_35 = arith.constant 0 : index
    %c1_36 = arith.constant 1 : index
    %c1_37 = arith.constant 1 : index
    %56 = vector.load %arg14[%c0_35, %c1_36, %c1_37] : memref<8x18x18xf32, #tpu.memory_space<vmem>>, vector<8x16x16xf32>
    tpu.vector_store %arg14[%c0_35, %c1_36, %c1_37], %55 {strides = array<i32>} : memref<8x18x18xf32, #tpu.memory_space<vmem>>, vector<8x16x16xf32>,
    %c0_38 = arith.constant 0 : index
    %c0_39 = arith.constant 0 : index
    %c0_40 = arith.constant 0 : index
    %57 = vector.load %arg14[%c0_38, %c0_39, %c0_40] : memref<8x18x18xf32, #tpu.memory_space<vmem>>, vector<8x18x18xf32>
    %58 = vector.extract_strided_slice %57 {offsets = [0, 0, 0], sizes = [8, 16, 16], strides = [1, 1, 1]} : vector<8x18x18xf32> to vector<8x16x16xf32>
    %59 = vector.shape_cast %58 : vector<8x16x16xf32> to vector<8x256xf32>
    %60 = arith.truncf %59 : vector<8x256xf32> to vector<8x256xbf16>
    %c0_41 = arith.constant 0 : index
    %c0_42 = arith.constant 0 : index
    %61 = vector.load %arg15[%c0_41, %c0_42] : memref<72x256xbf16, #tpu.memory_space<vmem>>, vector<8x256xbf16>
    tpu.vector_store %arg15[%c0_41, %c0_42], %60 {strides = array<i32>} : memref<72x256xbf16, #tpu.memory_space<vmem>>, vector<8x256xbf16>,
    %62 = vector.extract_strided_slice %57 {offsets = [0, 0, 1], sizes = [8, 16, 16], strides = [1, 1, 1]} : vector<8x18x18xf32> to vector<8x16x16xf32>
    %63 = vector.shape_cast %62 : vector<8x16x16xf32> to vector<8x256xf32>
    %64 = arith.truncf %63 : vector<8x256xf32> to vector<8x256xbf16>
    %c8_43 = arith.constant 8 : index
    %c0_44 = arith.constant 0 : index
    %65 = vector.load %arg15[%c8_43, %c0_44] : memref<72x256xbf16, #tpu.memory_space<vmem>>, vector<8x256xbf16>
    tpu.vector_store %arg15[%c8_43, %c0_44], %64 {strides = array<i32>} : memref<72x256xbf16, #tpu.memory_space<vmem>>, vector<8x256xbf16>,
    %66 = vector.extract_strided_slice %57 {offsets = [0, 0, 2], sizes = [8, 16, 16], strides = [1, 1, 1]} : vector<8x18x18xf32> to vector<8x16x16xf32>
    %67 = vector.shape_cast %66 : vector<8x16x16xf32> to vector<8x256xf32>
    %68 = arith.truncf %67 : vector<8x256xf32> to vector<8x256xbf16>
    %c16_45 = arith.constant 16 : index
    %c0_46 = arith.constant 0 : index
    %69 = vector.load %arg15[%c16_45, %c0_46] : memref<72x256xbf16, #tpu.memory_space<vmem>>, vector<8x256xbf16>
    tpu.vector_store %arg15[%c16_45, %c0_46], %68 {strides = array<i32>} : memref<72x256xbf16, #tpu.memory_space<vmem>>, vector<8x256xbf16>,
    %70 = vector.extract_strided_slice %57 {offsets = [0, 1, 0], sizes = [8, 16, 16], strides = [1, 1, 1]} : vector<8x18x18xf32> to vector<8x16x16xf32>
    %71 = vector.shape_cast %70 : vector<8x16x16xf32> to vector<8x256xf32>
    %72 = arith.truncf %71 : vector<8x256xf32> to vector<8x256xbf16>
    %c24_47 = arith.constant 24 : index
    %c0_48 = arith.constant 0 : index
    %73 = vector.load %arg15[%c24_47, %c0_48] : memref<72x256xbf16, #tpu.memory_space<vmem>>, vector<8x256xbf16>
    tpu.vector_store %arg15[%c24_47, %c0_48], %72 {strides = array<i32>} : memref<72x256xbf16, #tpu.memory_space<vmem>>, vector<8x256xbf16>,
    %74 = vector.extract_strided_slice %57 {offsets = [0, 1, 1], sizes = [8, 16, 16], strides = [1, 1, 1]} : vector<8x18x18xf32> to vector<8x16x16xf32>
    %75 = vector.shape_cast %74 : vector<8x16x16xf32> to vector<8x256xf32>
    %76 = arith.truncf %75 : vector<8x256xf32> to vector<8x256xbf16>
    %c32_49 = arith.constant 32 : index
    %c0_50 = arith.constant 0 : index
    %77 = vector.load %arg15[%c32_49, %c0_50] : memref<72x256xbf16, #tpu.memory_space<vmem>>, vector<8x256xbf16>
    tpu.vector_store %arg15[%c32_49, %c0_50], %76 {strides = array<i32>} : memref<72x256xbf16, #tpu.memory_space<vmem>>, vector<8x256xbf16>,
    %78 = vector.extract_strided_slice %57 {offsets = [0, 1, 2], sizes = [8, 16, 16], strides = [1, 1, 1]} : vector<8x18x18xf32> to vector<8x16x16xf32>
    %79 = vector.shape_cast %78 : vector<8x16x16xf32> to vector<8x256xf32>
    %80 = arith.truncf %79 : vector<8x256xf32> to vector<8x256xbf16>
    %c40 = arith.constant 40 : index
    %c0_51 = arith.constant 0 : index
    %81 = vector.load %arg15[%c40, %c0_51] : memref<72x256xbf16, #tpu.memory_space<vmem>>, vector<8x256xbf16>
    tpu.vector_store %arg15[%c40, %c0_51], %80 {strides = array<i32>} : memref<72x256xbf16, #tpu.memory_space<vmem>>, vector<8x256xbf16>,
    %82 = vector.extract_strided_slice %57 {offsets = [0, 2, 0], sizes = [8, 16, 16], strides = [1, 1, 1]} : vector<8x18x18xf32> to vector<8x16x16xf32>
    %83 = vector.shape_cast %82 : vector<8x16x16xf32> to vector<8x256xf32>
    %84 = arith.truncf %83 : vector<8x256xf32> to vector<8x256xbf16>
    %c48 = arith.constant 48 : index
    %c0_52 = arith.constant 0 : index
    %85 = vector.load %arg15[%c48, %c0_52] : memref<72x256xbf16, #tpu.memory_space<vmem>>, vector<8x256xbf16>
    tpu.vector_store %arg15[%c48, %c0_52], %84 {strides = array<i32>} : memref<72x256xbf16, #tpu.memory_space<vmem>>, vector<8x256xbf16>,
    %86 = vector.extract_strided_slice %57 {offsets = [0, 2, 1], sizes = [8, 16, 16], strides = [1, 1, 1]} : vector<8x18x18xf32> to vector<8x16x16xf32>
    %87 = vector.shape_cast %86 : vector<8x16x16xf32> to vector<8x256xf32>
    %88 = arith.truncf %87 : vector<8x256xf32> to vector<8x256xbf16>
    %c56 = arith.constant 56 : index
    %c0_53 = arith.constant 0 : index
    %89 = vector.load %arg15[%c56, %c0_53] : memref<72x256xbf16, #tpu.memory_space<vmem>>, vector<8x256xbf16>
    tpu.vector_store %arg15[%c56, %c0_53], %88 {strides = array<i32>} : memref<72x256xbf16, #tpu.memory_space<vmem>>, vector<8x256xbf16>,
    %90 = vector.extract_strided_slice %57 {offsets = [0, 2, 2], sizes = [8, 16, 16], strides = [1, 1, 1]} : vector<8x18x18xf32> to vector<8x16x16xf32>
    %91 = vector.shape_cast %90 : vector<8x16x16xf32> to vector<8x256xf32>
    %92 = arith.truncf %91 : vector<8x256xf32> to vector<8x256xbf16>
    %c64 = arith.constant 64 : index
    %c0_54 = arith.constant 0 : index
    %93 = vector.load %arg15[%c64, %c0_54] : memref<72x256xbf16, #tpu.memory_space<vmem>>, vector<8x256xbf16>
    tpu.vector_store %arg15[%c64, %c0_54], %92 {strides = array<i32>} : memref<72x256xbf16, #tpu.memory_space<vmem>>, vector<8x256xbf16>,
    %c0_55 = arith.constant 0 : index
    %c0_56 = arith.constant 0 : index
    %94 = vector.load %arg3[%c0_55, %c0_56] : memref<8x72xbf16, #tpu.memory_space<vmem>>, vector<8x72xbf16>
    %c0_57 = arith.constant 0 : index
    %c0_58 = arith.constant 0 : index
    %95 = vector.load %arg15[%c0_57, %c0_58] : memref<72x256xbf16, #tpu.memory_space<vmem>>, vector<72x256xbf16>
    %cst_59 = arith.constant dense<0.000000e+00> : vector<8x256xf32>
    %96 = tpu.matmul %94, %95, %cst_59 {dimension_numbers = #tpu.dot_dimension_numbers<[1], [0], [0], [1], [0, 0, 1, 1], [], []>} : vector<8x72xbf16>, vector<72x256xbf16>, vector<8x256xf32> -> vector<8x256xf32>
    %c0_60 = arith.constant 0 : index
    %c0_61 = arith.constant 0 : index
    %97 = vector.load %arg7[%c0_60, %c0_61] : memref<8x1xf32, #tpu.memory_space<vmem>>, vector<8x1xf32>
    %98 = vector.broadcast %97 : vector<8x1xf32> to vector<8x256xf32>
    %99 = arith.mulf %96, %98 : vector<8x256xf32>
    %c0_62 = arith.constant 0 : index
    %c0_63 = arith.constant 0 : index
    %100 = vector.load %arg8[%c0_62, %c0_63] : memref<8x1xf32, #tpu.memory_space<vmem>>, vector<8x1xf32>
    %101 = vector.broadcast %100 : vector<8x1xf32> to vector<8x256xf32>
    %102 = arith.addf %99, %101 : vector<8x256xf32>
    %c0_64 = arith.constant 0 : index
    %c0_65 = arith.constant 0 : index
    %c0_66 = arith.constant 0 : index
    %c0_67 = arith.constant 0 : index
    %103 = vector.load %arg1[%c0_64, %c0_65, %c0_66, %c0_67] : memref<1x4x16x16xf32, #tpu.memory_space<vmem>>, vector<1x4x16x16xf32>
    %104 = vector.shape_cast %103 : vector<1x4x16x16xf32> to vector<4x16x16xf32>
    %105 = vector.shape_cast %104 : vector<4x16x16xf32> to vector<4x256xf32>
    %c0_68 = arith.constant 0 : index
    %c0_69 = arith.constant 0 : index
    %106 = vector.load %arg4[%c0_68, %c0_69] : memref<8x4xbf16, #tpu.memory_space<vmem>>, vector<8x4xbf16>
    %107 = arith.truncf %105 : vector<4x256xf32> to vector<4x256xbf16>
    %cst_70 = arith.constant dense<0.000000e+00> : vector<8x256xf32>
    %108 = tpu.matmul %106, %107, %cst_70 {dimension_numbers = #tpu.dot_dimension_numbers<[1], [0], [0], [1], [0, 0, 1, 1], [], []>} : vector<8x4xbf16>, vector<4x256xbf16>, vector<8x256xf32> -> vector<8x256xf32>
    %c0_71 = arith.constant 0 : index
    %c0_72 = arith.constant 0 : index
    %109 = vector.load %arg9[%c0_71, %c0_72] : memref<8x1xf32, #tpu.memory_space<vmem>>, vector<8x1xf32>
    %110 = vector.broadcast %109 : vector<8x1xf32> to vector<8x256xf32>
    %111 = arith.mulf %108, %110 : vector<8x256xf32>
    %c0_73 = arith.constant 0 : index
    %c0_74 = arith.constant 0 : index
    %112 = vector.load %arg10[%c0_73, %c0_74] : memref<8x1xf32, #tpu.memory_space<vmem>>, vector<8x1xf32>
    %113 = vector.broadcast %112 : vector<8x1xf32> to vector<8x256xf32>
    %114 = arith.addf %111, %113 : vector<8x256xf32>
    %115 = arith.addf %102, %114 : vector<8x256xf32>
    %cst_75 = arith.constant 0.000000e+00 : f32
    %116 = vector.broadcast %cst_75 : f32 to vector<8x256xf32>
    %117 = arith.maximumf %115, %116 : vector<8x256xf32>
    %c0_76 = arith.constant 0 : index
    %c0_77 = arith.constant 0 : index
    %c0_78 = arith.constant 0 : index
    %118 = vector.load %arg11[%c0_76, %c0_77, %c0_78] : memref<1x8x256xf32, #tpu.memory_space<vmem>>, vector<1x8x256xf32>
    %119 = vector.shape_cast %118 : vector<1x8x256xf32> to vector<8x256xf32>
    %120 = vector.shape_cast %117 : vector<8x256xf32> to vector<1x8x256xf32>
    tpu.vector_store %arg11[%c0_76, %c0_77, %c0_78], %120 {strides = array<i32>} : memref<1x8x256xf32, #tpu.memory_space<vmem>>, vector<1x8x256xf32>,
    return
  }
  func.func @transform_0(%arg0: i32) -> (i32, i32, i32, i32) {
    %c0_i32 = arith.constant 0 : i32
    %c0_i32_0 = arith.constant 0 : i32
    %c0_i32_1 = arith.constant 0 : i32
    %c0_i32_2 = arith.constant 0 : i32
    return %arg0, %c0_i32, %c0_i32_0, %c0_i32_1 : i32, i32, i32, i32
  }
  func.func @transform_1(%arg0: i32) -> (i32, i32) {
    %c0_i32 = arith.constant 0 : i32
    %c0_i32_0 = arith.constant 0 : i32
    %c0_i32_1 = arith.constant 0 : i32
    return %c0_i32, %c0_i32_0 : i32, i32
  }
  func.func @transform_2(%arg0: i32) -> (i32, i32) {
    %c0_i32 = arith.constant 0 : i32
    %c0_i32_0 = arith.constant 0 : i32
    %c0_i32_1 = arith.constant 0 : i32
    return %c0_i32, %c0_i32_0 : i32, i32
  }
  func.func @transform_3(%arg0: i32) -> (i32, i32) {
    %c0_i32 = arith.constant 0 : i32
    %c0_i32_0 = arith.constant 0 : i32
    %c0_i32_1 = arith.constant 0 : i32
    return %c0_i32, %c0_i32_0 : i32, i32
  }
  func.func @transform_4(%arg0: i32) -> (i32, i32) {
    %c0_i32 = arith.constant 0 : i32
    %c0_i32_0 = arith.constant 0 : i32
    %c0_i32_1 = arith.constant 0 : i32
    return %c0_i32, %c0_i32_0 : i32, i32
  }
  func.func @transform_5(%arg0: i32) -> (i32, i32) {
    %c0_i32 = arith.constant 0 : i32
    %c0_i32_0 = arith.constant 0 : i32
    %c0_i32_1 = arith.constant 0 : i32
    return %c0_i32, %c0_i32_0 : i32, i32
  }
  func.func @transform_6(%arg0: i32) -> (i32, i32) {
    %c0_i32 = arith.constant 0 : i32
    %c0_i32_0 = arith.constant 0 : i32
    %c0_i32_1 = arith.constant 0 : i32
    return %c0_i32, %c0_i32_0 : i32, i32
  }
  func.func @transform_7(%arg0: i32) -> (i32, i32) {
    %c0_i32 = arith.constant 0 : i32
    %c0_i32_0 = arith.constant 0 : i32
    %c0_i32_1 = arith.constant 0 : i32
    return %c0_i32, %c0_i32_0 : i32, i32
  }
  func.func @transform_8(%arg0: i32) -> (i32, i32) {
    %c0_i32 = arith.constant 0 : i32
    %c0_i32_0 = arith.constant 0 : i32
    %c0_i32_1 = arith.constant 0 : i32
    return %c0_i32, %c0_i32_0 : i32, i32
  }
  func.func @transform_9(%arg0: i32) -> (i32, i32) {
    %c0_i32 = arith.constant 0 : i32
    %c0_i32_0 = arith.constant 0 : i32
    %c0_i32_1 = arith.constant 0 : i32
    return %c0_i32, %c0_i32_0 : i32, i32
  }
  func.func @transform_10(%arg0: i32) -> (i32, i32, i32) {
    %c0_i32 = arith.constant 0 : i32
    %c0_i32_0 = arith.constant 0 : i32
    %c0_i32_1 = arith.constant 0 : i32
    return %arg0, %c0_i32, %c0_i32_0 : i32, i32, i32
  }
}

</mosaic_0001>

<llo_original>
// kernel: tpu_custom_call.1
$region0: #{tpu_custom_call.1}
  #allocation0 [shape = 'u32[]', space=smem, size = 0x4, offset = 0x4, fixed_abs, tag = 'smem constant byte address 0x4 - core index']
  #allocation1 [shape = 'u32[144,128]{1,0:T(1,128)}', space=vmem, size = 0x12000, scoped, tag = 'internal scratch']
  #allocation2 [shape = 'f32[4,18,18]{2,1,0:T(8,128)}', space=vmem, size = 0xc000, scoped, tag = 'scratch operand']
  #allocation3 [shape = 'bf16[36,256]{1,0:T(8,128)(2,1)}', space=vmem, size = 0x5000, scoped, tag = 'scratch operand']
  #allocation4 [shape = 'f32[8,18,18]{2,1,0:T(8,128)}', space=vmem, size = 0x18000, scoped, tag = 'scratch operand']
  #allocation5 [shape = 'bf16[72,256]{1,0:T(8,128)(2,1)}', space=vmem, size = 0x9000, scoped, tag = 'scratch operand']
  %s0 = inlined_call_operand.hbm [shape: f32[2,4,16,16], index: 0, kind: input, shape index: {}]
  %s1 = inlined_call_operand.vmem [shape: bf16[8,36], index: 1, kind: input, shape index: {}]
  %s2 = inlined_call_operand.vmem [shape: bf16[8,72], index: 2, kind: input, shape index: {}]
  %s3 = inlined_call_operand.vmem [shape: bf16[8,4], index: 3, kind: input, shape index: {}]
  %s4 = inlined_call_operand.vmem [shape: f32[8,1], index: 4, kind: input, shape index: {}]
  %s5 = inlined_call_operand.vmem [shape: f32[8,1], index: 5, kind: input, shape index: {}]
  %s6 = inlined_call_operand.vmem [shape: f32[8,1], index: 6, kind: input, shape index: {}]
  %s7 = inlined_call_operand.vmem [shape: f32[8,1], index: 7, kind: input, shape index: {}]
  %s8 = inlined_call_operand.vmem [shape: f32[8,1], index: 8, kind: input, shape index: {}]
  %s9 = inlined_call_operand.vmem [shape: f32[8,1], index: 9, kind: input, shape index: {}]
  %s10 = inlined_call_operand.hbm [shape: f32[2,8,256], index: 10, kind: output, shape index: {}]
  %s11 = sld [smem:[#allocation0]]
  $region77: #{tpu_custom_call.1} parent=0
    _
  %s13 = ssub.s32 1, %s11
  %s14 = scalar_select 0, %s13, %s11
  $region1: #{tpu_custom_call.1} parent=0
    #allocation6 [shape = 'u8[65536]{0}', space=vmem, size = 0x10000, scoped, tag = 'input window, operand 0']
    #allocation7 [shape = 's32[2]{0}', space=sflag, size = 0x8, scoped, tag = 'scoped memory for tpu_custom_call.1']
    #allocation8 [shape = 's32[2]{0}', space=sflag, size = 0x8, scoped, tag = 'scoped memory for tpu_custom_call.1']
    #allocation9 [shape = 'u8[16384]{0}', space=vmem, size = 0x4000, scoped, tag = 'output window, operand 0']
    %15 = vsyncpa [#allocation7], 0
    %s16 = scalar_lea.sflag [#allocation7], 1
    %17 = vsyncpa %s16, 0
    %18 = vsyncpa [#allocation8], 0
    %s19 = scalar_lea.sflag [#allocation8], 1
    %20 = vsyncpa %s19, 0
    loop: start=0, step=1, limit=4
    $region2: #{tpu_custom_call.1} parent=1 // loop_pre_header
      _
    $region3: #{tpu_custom_call.1} parent=1 // loop_header
      %s22 = sphi 0, %s26
      %p23 = scmp.ge.s32.totalorder %s22, 4
      %s32 = sphi 0, %s34
      %s35 = sphi 0, %s32
      %s36 = sphi 0, %s35
      %s52 = sphi 0, %s36
      %s56 = sphi 0, %s56
      %s58 = sphi 0, %s56
      %s59 = sphi 0, %s58
      %s73 = sphi 0, %s59
      %s77 = sphi 0, %s77
      %s79 = sphi 0, %s77
      %s80 = sphi 0, %s79
      %s94 = sphi 0, %s80
      %s98 = sphi 0, %s98
      %s100 = sphi 0, %s98
      %s101 = sphi 0, %s100
      %s115 = sphi 0, %s101
      %s119 = sphi 0, %s119
      %s121 = sphi 0, %s119
      %s122 = sphi 0, %s121
      %s136 = sphi 0, %s122
      %s140 = sphi 0, %s140
      %s142 = sphi 0, %s140
      %s143 = sphi 0, %s142
      %s157 = sphi 0, %s143
      %s161 = sphi 0, %s161
      %s163 = sphi 0, %s161
      %s164 = sphi 0, %s163
      %s178 = sphi 0, %s164
      %s182 = sphi 0, %s182
      %s184 = sphi 0, %s182
      %s185 = sphi 0, %s184
      %s199 = sphi 0, %s185
      %s203 = sphi 0, %s203
      %s205 = sphi 0, %s203
      %s206 = sphi 0, %s205
      %s220 = sphi 0, %s206
      %s224 = sphi 0, %s224
      %s226 = sphi 0, %s224
      %s227 = sphi 0, %s226
      %s241 = sphi 0, %s227
      %s247 = sphi 0, %s249
      %s250 = sphi 0, %s247
      %s251 = sphi 0, %s250
      %s267 = sphi 0, %s251
    $region4: #{tpu_custom_call.1} parent=1 // loop_header_branch
      %25 = sbr.rel (%p23) target = $region8
    $region5: #{tpu_custom_call.1} parent=1 // loop_body
      %s27 = ssub.s32 %s22, 1
      %s28 = ssub.s32 %s22, 2
      %s29 = sadd.s32 %s22, 1
      %s30 = ssub.s32 %s22, %s29
      %p31 = scmp.eq.s32.totalorder %s30, 0
      %s33 = sadd.s32 %s32, 1
      %s34 = scalar_select %p31, %s32, %s33
      %p37 = pneg %p31
      %p38 = scmp.eq.s32.totalorder %s22, 1
      %p39 = por %p37, %p38
      %p40 = scmp.ne.s32.totalorder %s32, %s35
      %p41 = scmp.eq.s32.totalorder %s22, 0
      %p42 = por %p40, %p41
      %p43 = scmp.ne.s32.totalorder %s32, %s35
      %p44 = scmp.eq.s32.totalorder %s27, 1
      %p45 = por %p43, %p44
      %p46 = scmp.ne.s32.totalorder %s35, %s36
      %p47 = scmp.eq.s32.totalorder %s27, 0
      %p48 = por %p46, %p47
      %p49 = scmp.ne.s32.totalorder %s35, %s36
      %p50 = scmp.eq.s32.totalorder %s28, 1
      %p51 = por %p49, %p50
      %p53 = scmp.ne.s32.totalorder %s36, %s52
      %p54 = scmp.eq.s32.totalorder %s28, 0
      %p55 = por %p53, %p54
      %s57 = sadd.s32 %s56, 1
      %p60 = scmp.eq.s32.totalorder %s22, 1
      %p61 = scmp.ne.s32.totalorder %s56, %s58
      %p62 = scmp.eq.s32.totalorder %s22, 0
      %p63 = por %p61, %p62
      %p64 = scmp.ne.s32.totalorder %s56, %s58
      %p65 = scmp.eq.s32.totalorder %s27, 1
      %p66 = por %p64, %p65
      %p67 = scmp.ne.s32.totalorder %s58, %s59
      %p68 = scmp.eq.s32.totalorder %s27, 0
      %p69 = por %p67, %p68
      %p70 = scmp.ne.s32.totalorder %s58, %s59
      %p71 = scmp.eq.s32.totalorder %s28, 1
      %p72 = por %p70, %p71
      %p74 = scmp.ne.s32.totalorder %s59, %s73
      %p75 = scmp.eq.s32.totalorder %s28, 0
      %p76 = por %p74, %p75
      %s78 = sadd.s32 %s77, 1
      %p81 = scmp.eq.s32.totalorder %s22, 1
      %p82 = scmp.ne.s32.totalorder %s77, %s79
      %p83 = scmp.eq.s32.totalorder %s22, 0
      %p84 = por %p82, %p83
      %p85 = scmp.ne.s32.totalorder %s77, %s79
      %p86 = scmp.eq.s32.totalorder %s27, 1
      %p87 = por %p85, %p86
      %p88 = scmp.ne.s32.totalorder %s79, %s80
      %p89 = scmp.eq.s32.totalorder %s27, 0
      %p90 = por %p88, %p89
      %p91 = scmp.ne.s32.totalorder %s79, %s80
      %p92 = scmp.eq.s32.totalorder %s28, 1
      %p93 = por %p91, %p92
      %p95 = scmp.ne.s32.totalorder %s80, %s94
      %p96 = scmp.eq.s32.totalorder %s28, 0
      %p97 = por %p95, %p96
      %s99 = sadd.s32 %s98, 1
      %p102 = scmp.eq.s32.totalorder %s22, 1
      %p103 = scmp.ne.s32.totalorder %s98, %s100
      %p104 = scmp.eq.s32.totalorder %s22, 0
      %p105 = por %p103, %p104
      %p106 = scmp.ne.s32.totalorder %s98, %s100
      %p107 = scmp.eq.s32.totalorder %s27, 1
      %p108 = por %p106, %p107
      %p109 = scmp.ne.s32.totalorder %s100, %s101
      %p110 = scmp.eq.s32.totalorder %s27, 0
      %p111 = por %p109, %p110
      %p112 = scmp.ne.s32.totalorder %s100, %s101
      %p113 = scmp.eq.s32.totalorder %s28, 1
      %p114 = por %p112, %p113
      %p116 = scmp.ne.s32.totalorder %s101, %s115
      %p117 = scmp.eq.s32.totalorder %s28, 0
      %p118 = por %p116, %p117
      %s120 = sadd.s32 %s119, 1
      %p123 = scmp.eq.s32.totalorder %s22, 1
      %p124 = scmp.ne.s32.totalorder %s119, %s121
      %p125 = scmp.eq.s32.totalorder %s22, 0
      %p126 = por %p124, %p125
      %p127 = scmp.ne.s32.totalorder %s119, %s121
      %p128 = scmp.eq.s32.totalorder %s27, 1
      %p129 = por %p127, %p128
      %p130 = scmp.ne.s32.totalorder %s121, %s122
      %p131 = scmp.eq.s32.totalorder %s27, 0
      %p132 = por %p130, %p131
      %p133 = scmp.ne.s32.totalorder %s121, %s122
      %p134 = scmp.eq.s32.totalorder %s28, 1
      %p135 = por %p133, %p134
      %p137 = scmp.ne.s32.totalorder %s122, %s136
      %p138 = scmp.eq.s32.totalorder %s28, 0
      %p139 = por %p137, %p138
      %s141 = sadd.s32 %s140, 1
      %p144 = scmp.eq.s32.totalorder %s22, 1
      %p145 = scmp.ne.s32.totalorder %s140, %s142
      %p146 = scmp.eq.s32.totalorder %s22, 0
      %p147 = por %p145, %p146
      %p148 = scmp.ne.s32.totalorder %s140, %s142
      %p149 = scmp.eq.s32.totalorder %s27, 1
      %p150 = por %p148, %p149
      %p151 = scmp.ne.s32.totalorder %s142, %s143
      %p152 = scmp.eq.s32.totalorder %s27, 0
      %p153 = por %p151, %p152
      %p154 = scmp.ne.s32.totalorder %s142, %s143
      %p155 = scmp.eq.s32.totalorder %s28, 1
      %p156 = por %p154, %p155
      %p158 = scmp.ne.s32.totalorder %s143, %s157
      %p159 = scmp.eq.s32.totalorder %s28, 0
      %p160 = por %p158, %p159
      %s162 = sadd.s32 %s161, 1
      %p165 = scmp.eq.s32.totalorder %s22, 1
      %p166 = scmp.ne.s32.totalorder %s161, %s163
      %p167 = scmp.eq.s32.totalorder %s22, 0
      %p168 = por %p166, %p167
      %p169 = scmp.ne.s32.totalorder %s161, %s163
      %p170 = scmp.eq.s32.totalorder %s27, 1
      %p171 = por %p169, %p170
      %p172 = scmp.ne.s32.totalorder %s163, %s164
      %p173 = scmp.eq.s32.totalorder %s27, 0
      %p174 = por %p172, %p173
      %p175 = scmp.ne.s32.totalorder %s163, %s164
      %p176 = scmp.eq.s32.totalorder %s28, 1
      %p177 = por %p175, %p176
      %p179 = scmp.ne.s32.totalorder %s164, %s178
      %p180 = scmp.eq.s32.totalorder %s28, 0
      %p181 = por %p179, %p180
      %s183 = sadd.s32 %s182, 1
      %p186 = scmp.eq.s32.totalorder %s22, 1
      %p187 = scmp.ne.s32.totalorder %s182, %s184
      %p188 = scmp.eq.s32.totalorder %s22, 0
      %p189 = por %p187, %p188
      %p190 = scmp.ne.s32.totalorder %s182, %s184
      %p191 = scmp.eq.s32.totalorder %s27, 1
      %p192 = por %p190, %p191
      %p193 = scmp.ne.s32.totalorder %s184, %s185
      %p194 = scmp.eq.s32.totalorder %s27, 0
      %p195 = por %p193, %p194
      %p196 = scmp.ne.s32.totalorder %s184, %s185
      %p197 = scmp.eq.s32.totalorder %s28, 1
      %p198 = por %p196, %p197
      %p200 = scmp.ne.s32.totalorder %s185, %s199
      %p201 = scmp.eq.s32.totalorder %s28, 0
      %p202 = por %p200, %p201
      %s204 = sadd.s32 %s203, 1
      %p207 = scmp.eq.s32.totalorder %s22, 1
      %p208 = scmp.ne.s32.totalorder %s203, %s205
      %p209 = scmp.eq.s32.totalorder %s22, 0
      %p210 = por %p208, %p209
      %p211 = scmp.ne.s32.totalorder %s203, %s205
      %p212 = scmp.eq.s32.totalorder %s27, 1
      %p213 = por %p211, %p212
      %p214 = scmp.ne.s32.totalorder %s205, %s206
      %p215 = scmp.eq.s32.totalorder %s27, 0
      %p216 = por %p214, %p215
      %p217 = scmp.ne.s32.totalorder %s205, %s206
      %p218 = scmp.eq.s32.totalorder %s28, 1
      %p219 = por %p217, %p218
      %p221 = scmp.ne.s32.totalorder %s206, %s220
      %p222 = scmp.eq.s32.totalorder %s28, 0
      %p223 = por %p221, %p222
      %s225 = sadd.s32 %s224, 1
      %p228 = scmp.eq.s32.totalorder %s22, 1
      %p229 = scmp.ne.s32.totalorder %s224, %s226
      %p230 = scmp.eq.s32.totalorder %s22, 0
      %p231 = por %p229, %p230
      %p232 = scmp.ne.s32.totalorder %s224, %s226
      %p233 = scmp.eq.s32.totalorder %s27, 1
      %p234 = por %p232, %p233
      %p235 = scmp.ne.s32.totalorder %s226, %s227
      %p236 = scmp.eq.s32.totalorder %s27, 0
      %p237 = por %p235, %p236
      %p238 = scmp.ne.s32.totalorder %s226, %s227
      %p239 = scmp.eq.s32.totalorder %s28, 1
      %p240 = por %p238, %p239
      %p242 = scmp.ne.s32.totalorder %s227, %s241
      %p243 = scmp.eq.s32.totalorder %s28, 0
      %p244 = por %p242, %p243
      %s245 = ssub.s32 %s22, %s29
      %p246 = scmp.eq.s32.totalorder %s245, 0
      %s248 = sadd.s32 %s247, 1
      %s249 = scalar_select %p246, %s247, %s248
      %p252 = pneg %p246
      %p253 = scmp.eq.s32.totalorder %s22, 1
      %p254 = por %p252, %p253
      %p255 = scmp.ne.s32.totalorder %s247, %s250
      %p256 = scmp.eq.s32.totalorder %s22, 0
      %p257 = por %p255, %p256
      %p258 = scmp.ne.s32.totalorder %s247, %s250
      %p259 = scmp.eq.s32.totalorder %s27, 1
      %p260 = por %p258, %p259
      %p261 = scmp.ne.s32.totalorder %s250, %s251
      %p262 = scmp.eq.s32.totalorder %s27, 0
      %p263 = por %p261, %p262
      %p264 = scmp.ne.s32.totalorder %s250, %s251
      %p265 = scmp.eq.s32.totalorder %s28, 1
      %p266 = por %p264, %p265
      %p268 = scmp.ne.s32.totalorder %s251, %s267
      %p269 = scmp.eq.s32.totalorder %s28, 0
      %p270 = por %p268, %p269
      %p271 = scmp.le.s32.totalorder 1, %s22
      %p272 = scmp.lt.s32.totalorder %s22, 3
      %p273 = pnand %p271, %p272
      %p274 = pneg %p273
      // Predicated region
      $region9: #{tpu_custom_call.1} parent=5 // pred_check
        _
      $region10: #{tpu_custom_call.1} parent=5 // pred_check_branch
        %276 = sbr.rel (%p273) target = $region12
      $region11: #{tpu_custom_call.1} parent=5 // pred_region
        %s277 = ssub.s32 %s22, 1
        // Predicated region
        $region13: #{tpu_custom_call.1} parent=11 // pred_check
          %p278 = pneg %p69
        $region14: #{tpu_custom_call.1} parent=11 // pred_check_branch
          %280 = sbr.rel (%p278) target = $region16
        $region15: #{tpu_custom_call.1} parent=11 // pred_region
          _
        $region16: #{tpu_custom_call.1} parent=11 // pred_fallthru
          _
        // Predicated region
        $region17: #{tpu_custom_call.1} parent=11 // pred_check
          %p281 = pneg %p90
        $region18: #{tpu_custom_call.1} parent=11 // pred_check_branch
          %283 = sbr.rel (%p281) target = $region20
        $region19: #{tpu_custom_call.1} parent=11 // pred_region
          _
        $region20: #{tpu_custom_call.1} parent=11 // pred_fallthru
          _
        // Predicated region
        $region21: #{tpu_custom_call.1} parent=11 // pred_check
          %p284 = pneg %p111
        $region22: #{tpu_custom_call.1} parent=11 // pred_check_branch
          %286 = sbr.rel (%p284) target = $region24
        $region23: #{tpu_custom_call.1} parent=11 // pred_region
          _
        $region24: #{tpu_custom_call.1} parent=11 // pred_fallthru
          _
        // Predicated region
        $region25: #{tpu_custom_call.1} parent=11 // pred_check
          %p287 = pneg %p132
        $region26: #{tpu_custom_call.1} parent=11 // pred_check_branch
          %289 = sbr.rel (%p287) target = $region28
        $region27: #{tpu_custom_call.1} parent=11 // pred_region
          _
        $region28: #{tpu_custom_call.1} parent=11 // pred_fallthru
          _
        // Predicated region
        $region29: #{tpu_custom_call.1} parent=11 // pred_check
          %p290 = pneg %p153
        $region30: #{tpu_custom_call.1} parent=11 // pred_check_branch
          %292 = sbr.rel (%p290) target = $region32
        $region31: #{tpu_custom_call.1} parent=11 // pred_region
          _
        $region32: #{tpu_custom_call.1} parent=11 // pred_fallthru
          _
        // Predicated region
        $region33: #{tpu_custom_call.1} parent=11 // pred_check
          %p293 = pneg %p174
        $region34: #{tpu_custom_call.1} parent=11 // pred_check_branch
          %295 = sbr.rel (%p293) target = $region36
        $region35: #{tpu_custom_call.1} parent=11 // pred_region
          _
        $region36: #{tpu_custom_call.1} parent=11 // pred_fallthru
          _
        // Predicated region
        $region37: #{tpu_custom_call.1} parent=11 // pred_check
          %p296 = pneg %p195
        $region38: #{tpu_custom_call.1} parent=11 // pred_check_branch
          %298 = sbr.rel (%p296) target = $region40
        $region39: #{tpu_custom_call.1} parent=11 // pred_region
          _
        $region40: #{tpu_custom_call.1} parent=11 // pred_fallthru
          _
        // Predicated region
        $region41: #{tpu_custom_call.1} parent=11 // pred_check
          %p299 = pneg %p216
        $region42: #{tpu_custom_call.1} parent=11 // pred_check_branch
          %301 = sbr.rel (%p299) target = $region44
        $region43: #{tpu_custom_call.1} parent=11 // pred_region
          _
        $region44: #{tpu_custom_call.1} parent=11 // pred_fallthru
          _
        // Predicated region
        $region45: #{tpu_custom_call.1} parent=11 // pred_check
          %p302 = pneg %p237
        $region46: #{tpu_custom_call.1} parent=11 // pred_check_branch
          %304 = sbr.rel (%p302) target = $region48
        $region47: #{tpu_custom_call.1} parent=11 // pred_region
          _
        $region48: #{tpu_custom_call.1} parent=11 // pred_fallthru
          _
      $region12: #{tpu_custom_call.1} parent=5 // pred_fallthru
        _
      %p305 = scmp.lt.s32.totalorder %s22, 2
      // Predicated region
      $region49: #{tpu_custom_call.1} parent=5 // pred_check
        %p306 = pneg %p305
      $region50: #{tpu_custom_call.1} parent=5 // pred_check_branch
        %308 = sbr.rel (%p306) target = $region52
      $region51: #{tpu_custom_call.1} parent=5 // pred_region
        // Predicated region
        $region53: #{tpu_custom_call.1} parent=51 // pred_check
          %p309 = pneg %p42
        $region54: #{tpu_custom_call.1} parent=51 // pred_check_branch
          %311 = sbr.rel (%p309) target = $region56
        $region55: #{tpu_custom_call.1} parent=51 // pred_region
          %s312 = sand.u32 %s32, 1
          %s313 = scalar_lea.sflag [#allocation7], %s312
          %s314 = sand.u32 %s32, 1
          %s315 = smul.addr %s314, 64
          %s316 = scalar_lea.vmem [#allocation6], %s315
          %s318 = ssub.s32 1024, 1024
          %319 = vsyncadd %s313, %s318
          %s320 = smul.addr %s22, 8
          %s321 = smul.addr %s320, 128
          %s322 = scalar_lea.hbm %s0, %s321
          %s323 = sshll.u32 %s316, 4
          %s324 = int_to_ptr.vmem [resolvable:$true] %s323
          %329 = dma.hbm_to_vmem [thread:$0]  %s322, 1024, %s324, %s313, 128, 128, 8
        $region56: #{tpu_custom_call.1} parent=51 // pred_fallthru
          _
      $region52: #{tpu_custom_call.1} parent=5 // pred_fallthru
        _
      %p330 = scmp.le.s32.totalorder 1, %s22
      %p331 = scmp.lt.s32.totalorder %s22, 3
      %p332 = pnand %p330, %p331
      %p333 = pneg %p332
      // Predicated region
      $region57: #{tpu_custom_call.1} parent=5 // pred_check
        _
      $region58: #{tpu_custom_call.1} parent=5 // pred_check_branch
        %335 = sbr.rel (%p332) target = $region60
      $region59: #{tpu_custom_call.1} parent=5 // pred_region
        %s336 = ssub.s32 %s22, 1
        %s337 = sand.u32 %s35, 1
        %s338 = scalar_lea.sflag [#allocation7], %s337
        %s339 = sand.u32 %s35, 1
        %s340 = smul.addr %s339, 64
        %s341 = scalar_lea.vmem [#allocation6], %s340
        // Predicated region
        $region61: #{tpu_custom_call.1} parent=59 // pred_check
          %p342 = pneg %p48
        $region62: #{tpu_custom_call.1} parent=59 // pred_check_branch
          %344 = sbr.rel (%p342) target = $region64
        $region63: #{tpu_custom_call.1} parent=59 // pred_region
          %345 = dma.done %s338, 1024
        $region64: #{tpu_custom_call.1} parent=59 // pred_fallthru
          _
        %s346 = sand.u32 %s35, 1
        %s347 = scalar_lea.sflag [#allocation7], %s346
        %s348 = sand.u32 %s35, 1
        %s349 = smul.addr %s348, 64
        %s350 = scalar_lea.vmem [#allocation6], %s349
        %p351 = pneg %p48
        %p352 = pneg %p45
        %p353 = pneg %p69
        %p354 = pneg %p66
        %p355 = pneg %p90
        %p356 = pneg %p87
        %p357 = pneg %p111
        %p358 = pneg %p108
        %p359 = pneg %p132
        %p360 = pneg %p129
        %p361 = pneg %p153
        %p362 = pneg %p150
        %p363 = pneg %p174
        %p364 = pneg %p171
        %p365 = pneg %p195
        %p366 = pneg %p192
        %p367 = pneg %p216
        %p368 = pneg %p213
        %p369 = pneg %p237
        %p370 = pneg %p234
        %p371 = pneg %p263
        %p372 = pneg %p260
        %s373 = sand.u32 %s250, 1
        %s374 = scalar_lea.sflag [#allocation8], %s373
        %s375 = sand.u32 %s250, 1
        %s376 = smul.addr %s375, 16
        %s377 = scalar_lea.vmem [#allocation9], %s376
        %vm379 = vcmask 146432
        %380 = vst.msk [vmem:[#allocation2] sm:$0xff] %vm379, 0.0
        %381 = vst.msk [vmem:[#allocation2 + $0x8] sm:$0xff] %vm379, 0.0
        %vm382 = vcmask 140288
        %383 = vst.msk [vmem:[#allocation2 + $0x10] sm:$0x3] %vm382, 0.0
        %384 = vst.msk [vmem:[#allocation2 + $0x18] sm:$0xff] %vm379, 0.0
        %385 = vst.msk [vmem:[#allocation2 + $0x20] sm:$0xff] %vm379, 0.0
        %386 = vst.msk [vmem:[#allocation2 + $0x28] sm:$0x3] %vm382, 0.0
        %387 = vst.msk [vmem:[#allocation2 + $0x30] sm:$0xff] %vm379, 0.0
        %388 = vst.msk [vmem:[#allocation2 + $0x38] sm:$0xff] %vm379, 0.0
        %389 = vst.msk [vmem:[#allocation2 + $0x40] sm:$0x3] %vm382, 0.0
        %390 = vst.msk [vmem:[#allocation2 + $0x48] sm:$0xff] %vm379, 0.0
        %391 = vst.msk [vmem:[#allocation2 + $0x50] sm:$0xff] %vm379, 0.0
        %392 = vst.msk [vmem:[#allocation2 + $0x58] sm:$0x3] %vm382, 0.0
        %v393 = vld [vmem:[%s341] sm:$0xff]
        %v394 = vld [vmem:[%s341 + $0x8] sm:$0xff]
        %v395 = vld [vmem:[%s341 + $0x10] sm:$0xff]
        %v396 = vld [vmem:[%s341 + $0x18] sm:$0xff]
        %v397 = vld [vmem:[%s341 + $0x20] sm:$0xff]
        %v398 = vld [vmem:[%s341 + $0x28] sm:$0xff]
        %v399 = vld [vmem:[%s341 + $0x30] sm:$0xff]
        %v400 = vld [vmem:[%s341 + $0x38] sm:$0xff]
        %409 = vrot.lane.b32.xlu0 %v393, 1
        %v410 = vpop.permute.xlu0 %409
        %411 = vrot.lane.b32.xlu0 %v394, 1
        %v412 = vpop.permute.xlu0 %411
        %413 = vrot.lane.b32.xlu0 %v395, 1
        %v414 = vpop.permute.xlu0 %413
        %415 = vrot.lane.b32.xlu0 %v396, 1
        %v416 = vpop.permute.xlu0 %415
        %417 = vrot.lane.b32.xlu0 %v397, 1
        %v418 = vpop.permute.xlu0 %417
        %419 = vrot.lane.b32.xlu0 %v398, 1
        %v420 = vpop.permute.xlu0 %419
        %421 = vrot.lane.b32.xlu0 %v399, 1
        %v422 = vpop.permute.xlu0 %421
        %423 = vrot.lane.b32.xlu0 %v400, 1
        %v424 = vpop.permute.xlu0 %423
        %vm433 = vcmask 138248
        %434 = vst.msk [vmem:[#allocation2 + $0x1] sm:$0xff] %vm433, %v410
        %435 = vst.msk [vmem:[#allocation2 + $0x9] sm:$0xff] %vm433, %v412
        %436 = vst.msk [vmem:[#allocation2 + $0x19] sm:$0xff] %vm433, %v414
        %437 = vst.msk [vmem:[#allocation2 + $0x21] sm:$0xff] %vm433, %v416
        %438 = vst.msk [vmem:[#allocation2 + $0x31] sm:$0xff] %vm433, %v418
        %439 = vst.msk [vmem:[#allocation2 + $0x39] sm:$0xff] %vm433, %v420
        %440 = vst.msk [vmem:[#allocation2 + $0x49] sm:$0xff] %vm433, %v422
        %441 = vst.msk [vmem:[#allocation2 + $0x51] sm:$0xff] %vm433, %v424
        %v442 = vld [vmem:[#allocation2] sm:$0xff]
        %v443 = vld [vmem:[#allocation2 + $0x8] sm:$0xff]
        %v444 = vld [vmem:[#allocation2 + $0x10] sm:$0x3]
        %v445 = vld [vmem:[#allocation2 + $0x18] sm:$0xff]
        %v446 = vld [vmem:[#allocation2 + $0x20] sm:$0xff]
        %v447 = vld [vmem:[#allocation2 + $0x28] sm:$0x3]
        %v448 = vld [vmem:[#allocation2 + $0x30] sm:$0xff]
        %v449 = vld [vmem:[#allocation2 + $0x38] sm:$0xff]
        %v450 = vld [vmem:[#allocation2 + $0x40] sm:$0x3]
        %v451 = vld [vmem:[#allocation2 + $0x48] sm:$0xff]
        %v452 = vld [vmem:[#allocation2 + $0x50] sm:$0xff]
        %v453 = vld [vmem:[#allocation2 + $0x58] sm:$0x3]
        %v454 = vcombine.low %v442, %v448
        %v455 = vcombine.high %v442, %v448
        %v457 = vunpack.c.l.s4 1983009808
        %v458 = vunpack.c.0.s8 %v457
        %v459 = vlaneseq
        %v460 = vshrl.u32 %v459, 7
        %v461 = vsub.s32 %v458, %v460
        %v462 = vrot.slane %v454, %v461
        %v464 = vunpack.c.l.s4 1983009808
        %v465 = vunpack.c.0.s8 %v464
        %v466 = vlaneseq
        %v467 = vshrl.u32 %v466, 7
        %v468 = vsub.s32 %v465, %v467
        %v469 = vrot.slane %v455, %v468
        %v470 = vcombine.low %v445, %v451
        %v471 = vcombine.high %v445, %v451
        %v473 = vunpack.c.l.s4 1983009808
        %v474 = vunpack.c.0.s8 %v473
        %v475 = vlaneseq
        %v476 = vshrl.u32 %v475, 7
        %v477 = vsub.s32 %v474, %v476
        %v478 = vrot.slane %v470, %v477
        %v480 = vunpack.c.l.s4 1983009808
        %v481 = vunpack.c.0.s8 %v480
        %v482 = vlaneseq
        %v483 = vshrl.u32 %v482, 7
        %v484 = vsub.s32 %v481, %v483
        %v485 = vrot.slane %v471, %v484
        %v486 = vcombine.low %v462, %v478
        %v487 = vcombine.high %v462, %v478
        %v489 = vunpack.c.l.s4 1934713408
        %v490 = vunpack.c.0.s8 %v489
        %v491 = vlaneseq
        %v492 = vshrl.u32 %v491, 7
        %v493 = vsub.s32 %v490, %v492
        %v494 = vrot.slane %v486, %v493
        %v496 = vunpack.c.l.s4 1934713408
        %v497 = vunpack.c.0.s8 %v496
        %v498 = vlaneseq
        %v499 = vshrl.u32 %v498, 7
        %v500 = vsub.s32 %v497, %v499
        %v501 = vrot.slane %v487, %v500
        %v502 = vcombine.low %v469, %v485
        %v503 = vcombine.high %v469, %v485
        %v505 = vunpack.c.l.s4 1934713408
        %v506 = vunpack.c.0.s8 %v505
        %v507 = vlaneseq
        %v508 = vshrl.u32 %v507, 7
        %v509 = vsub.s32 %v506, %v508
        %v510 = vrot.slane %v502, %v509
        %v512 = vunpack.c.l.s4 1934713408
        %v513 = vunpack.c.0.s8 %v512
        %v514 = vlaneseq
        %v515 = vshrl.u32 %v514, 7
        %v516 = vsub.s32 %v513, %v515
        %v517 = vrot.slane %v503, %v516
        %v518 = vcombine.high %v494, 0.0
        %v519 = vcombine.high %v501, 0.0
        %v520 = vcombine.high %v510, 0.0
        %v521 = vcombine.high %v517, 0.0
        %v522 = vcombine.low %v443, %v449
        %v523 = vcombine.high %v443, %v449
        %v525 = vunpack.c.l.s4 1983009808
        %v526 = vunpack.c.0.s8 %v525
        %v527 = vlaneseq
        %v528 = vshrl.u32 %v527, 7
        %v529 = vsub.s32 %v526, %v528
        %v530 = vrot.slane %v522, %v529
        %v532 = vunpack.c.l.s4 1983009808
        %v533 = vunpack.c.0.s8 %v532
        %v534 = vlaneseq
        %v535 = vshrl.u32 %v534, 7
        %v536 = vsub.s32 %v533, %v535
        %v537 = vrot.slane %v523, %v536
        %v538 = vcombine.low %v446, %v452
        %v539 = vcombine.high %v446, %v452
        %v541 = vunpack.c.l.s4 1983009808
        %v542 = vunpack.c.0.s8 %v541
        %v543 = vlaneseq
        %v544 = vshrl.u32 %v543, 7
        %v545 = vsub.s32 %v542, %v544
        %v546 = vrot.slane %v538, %v545
        %v548 = vunpack.c.l.s4 1983009808
        %v549 = vunpack.c.0.s8 %v548
        %v550 = vlaneseq
        %v551 = vshrl.u32 %v550, 7
        %v552 = vsub.s32 %v549, %v551
        %v553 = vrot.slane %v539, %v552
        %v554 = vcombine.low %v530, %v546
        %v555 = vcombine.high %v530, %v546
        %v557 = vunpack.c.l.s4 1934713408
        %v558 = vunpack.c.0.s8 %v557
        %v559 = vlaneseq
        %v560 = vshrl.u32 %v559, 7
        %v561 = vsub.s32 %v558, %v560
        %v562 = vrot.slane %v554, %v561
        %v564 = vunpack.c.l.s4 1934713408
        %v565 = vunpack.c.0.s8 %v564
        %v566 = vlaneseq
        %v567 = vshrl.u32 %v566, 7
        %v568 = vsub.s32 %v565, %v567
        %v569 = vrot.slane %v555, %v568
        %v570 = vcombine.low %v537, %v553
        %v571 = vcombine.high %v537, %v553
        %v573 = vunpack.c.l.s4 1934713408
        %v574 = vunpack.c.0.s8 %v573
        %v575 = vlaneseq
        %v576 = vshrl.u32 %v575, 7
        %v577 = vsub.s32 %v574, %v576
        %v578 = vrot.slane %v570, %v577
        %v580 = vunpack.c.l.s4 1934713408
        %v581 = vunpack.c.0.s8 %v580
        %v582 = vlaneseq
        %v583 = vshrl.u32 %v582, 7
        %v584 = vsub.s32 %v581, %v583
        %v585 = vrot.slane %v571, %v584
        %v586 = vcombine.high %v562, 0.0
        %v587 = vcombine.high %v569, 0.0
        %v588 = vcombine.high %v578, 0.0
        %v589 = vcombine.high %v585, 0.0
        %591 = vrot.lane.b32.xlu0 %v518, 16
        %v592 = vpop.permute.xlu0 %591
        %595 = vrot.lane.b32.xlu0 %v501, 32
        %v596 = vpop.permute.xlu0 %595
        %599 = vrot.lane.b32.xlu0 %v519, 48
        %v600 = vpop.permute.xlu0 %599
        %603 = vrot.lane.b32.xlu0 %v510, 64
        %v604 = vpop.permute.xlu0 %603
        %607 = vrot.lane.b32.xlu0 %v520, 80
        %v608 = vpop.permute.xlu0 %607
        %611 = vrot.lane.b32.xlu0 %v517, 96
        %v612 = vpop.permute.xlu0 %611
        %615 = vrot.lane.b32.xlu0 %v521, 112
        %v616 = vpop.permute.xlu0 %615
        %619 = vrot.lane.b32.xlu0 %v586, 16
        %v620 = vpop.permute.xlu0 %619
        %623 = vrot.lane.b32.xlu0 %v569, 32
        %v624 = vpop.permute.xlu0 %623
        %627 = vrot.lane.b32.xlu0 %v587, 48
        %v628 = vpop.permute.xlu0 %627
        %631 = vrot.lane.b32.xlu0 %v578, 64
        %v632 = vpop.permute.xlu0 %631
        %635 = vrot.lane.b32.xlu0 %v588, 80
        %v636 = vpop.permute.xlu0 %635
        %639 = vrot.lane.b32.xlu0 %v585, 96
        %v640 = vpop.permute.xlu0 %639
        %643 = vrot.lane.b32.xlu0 %v589, 112
        %v644 = vpop.permute.xlu0 %643
        %vm646 = vcmask 130048
        %v647 = vsel %vm646, %v494, %v592
        %vm648 = vcmask 261120
        %v649 = vsel %vm648, %v647, %v596
        %vm650 = vcmask 392192
        %v651 = vsel %vm650, %v649, %v600
        %vm652 = vcmask 523264
        %v653 = vsel %vm652, %v651, %v604
        %vm654 = vcmask 654336
        %v655 = vsel %vm654, %v653, %v608
        %vm656 = vcmask 785408
        %v657 = vsel %vm656, %v655, %v612
        %vm658 = vcmask 916480
        %v659 = vsel %vm658, %v657, %v616
        %v660 = vsel %vm646, %v562, %v620
        %v661 = vsel %vm648, %v660, %v624
        %v662 = vsel %vm650, %v661, %v628
        %v663 = vsel %vm652, %v662, %v632
        %v664 = vsel %vm654, %v663, %v636
        %v665 = vsel %vm656, %v664, %v640
        %v666 = vsel %vm658, %v665, %v644
        %v667 = vpack.c.bf16 %v659, %v659
        %v668 = vpack.c.bf16 %v666, %v666
        %v671 = vunpack.c.l.b16 %v667
        %v672 = vunpack.c.l.b16 %v668
        %v673 = vpack.c.b16 %v672, %v671
        %675 = vst [vmem:[#allocation3] sm:$0x33] %v673
        %684 = vrot.lane.b32.xlu0 %v442, 127
        %v685 = vpop.permute.xlu0 %684
        %686 = vrot.lane.b32.xlu0 %v443, 127
        %v687 = vpop.permute.xlu0 %686
        %688 = vrot.lane.b32.xlu0 %v445, 127
        %v689 = vpop.permute.xlu0 %688
        %690 = vrot.lane.b32.xlu0 %v446, 127
        %v691 = vpop.permute.xlu0 %690
        %692 = vrot.lane.b32.xlu0 %v448, 127
        %v693 = vpop.permute.xlu0 %692
        %694 = vrot.lane.b32.xlu0 %v449, 127
        %v695 = vpop.permute.xlu0 %694
        %696 = vrot.lane.b32.xlu0 %v451, 127
        %v697 = vpop.permute.xlu0 %696
        %698 = vrot.lane.b32.xlu0 %v452, 127
        %v699 = vpop.permute.xlu0 %698
        %v708 = vcombine.low %v685, %v693
        %v709 = vcombine.high %v685, %v693
        %v711 = vunpack.c.l.s4 1983009808
        %v712 = vunpack.c.0.s8 %v711
        %v713 = vlaneseq
        %v714 = vshrl.u32 %v713, 7
        %v715 = vsub.s32 %v712, %v714
        %v716 = vrot.slane %v708, %v715
        %v718 = vunpack.c.l.s4 1983009808
        %v719 = vunpack.c.0.s8 %v718
        %v720 = vlaneseq
        %v721 = vshrl.u32 %v720, 7
        %v722 = vsub.s32 %v719, %v721
        %v723 = vrot.slane %v709, %v722
        %v724 = vcombine.low %v689, %v697
        %v725 = vcombine.high %v689, %v697
        %v727 = vunpack.c.l.s4 1983009808
        %v728 = vunpack.c.0.s8 %v727
        %v729 = vlaneseq
        %v730 = vshrl.u32 %v729, 7
        %v731 = vsub.s32 %v728, %v730
        %v732 = vrot.slane %v724, %v731
        %v734 = vunpack.c.l.s4 1983009808
        %v735 = vunpack.c.0.s8 %v734
        %v736 = vlaneseq
        %v737 = vshrl.u32 %v736, 7
        %v738 = vsub.s32 %v735, %v737
        %v739 = vrot.slane %v725, %v738
        %v740 = vcombine.low %v716, %v732
        %v741 = vcombine.high %v716, %v732
        %v743 = vunpack.c.l.s4 1934713408
        %v744 = vunpack.c.0.s8 %v743
        %v745 = vlaneseq
        %v746 = vshrl.u32 %v745, 7
        %v747 = vsub.s32 %v744, %v746
        %v748 = vrot.slane %v740, %v747
        %v750 = vunpack.c.l.s4 1934713408
        %v751 = vunpack.c.0.s8 %v750
        %v752 = vlaneseq
        %v753 = vshrl.u32 %v752, 7
        %v754 = vsub.s32 %v751, %v753
        %v755 = vrot.slane %v741, %v754
        %v756 = vcombine.low %v723, %v739
        %v757 = vcombine.high %v723, %v739
        %v759 = vunpack.c.l.s4 1934713408
        %v760 = vunpack.c.0.s8 %v759
        %v761 = vlaneseq
        %v762 = vshrl.u32 %v761, 7
        %v763 = vsub.s32 %v760, %v762
        %v764 = vrot.slane %v756, %v763
        %v766 = vunpack.c.l.s4 1934713408
        %v767 = vunpack.c.0.s8 %v766
        %v768 = vlaneseq
        %v769 = vshrl.u32 %v768, 7
        %v770 = vsub.s32 %v767, %v769
        %v771 = vrot.slane %v757, %v770
        %v772 = vcombine.high %v748, 0.0
        %v773 = vcombine.high %v755, 0.0
        %v774 = vcombine.high %v764, 0.0
        %v775 = vcombine.high %v771, 0.0
        %v776 = vcombine.low %v687, %v695
        %v777 = vcombine.high %v687, %v695
        %v779 = vunpack.c.l.s4 1983009808
        %v780 = vunpack.c.0.s8 %v779
        %v781 = vlaneseq
        %v782 = vshrl.u32 %v781, 7
        %v783 = vsub.s32 %v780, %v782
        %v784 = vrot.slane %v776, %v783
        %v786 = vunpack.c.l.s4 1983009808
        %v787 = vunpack.c.0.s8 %v786
        %v788 = vlaneseq
        %v789 = vshrl.u32 %v788, 7
        %v790 = vsub.s32 %v787, %v789
        %v791 = vrot.slane %v777, %v790
        %v792 = vcombine.low %v691, %v699
        %v793 = vcombine.high %v691, %v699
        %v795 = vunpack.c.l.s4 1983009808
        %v796 = vunpack.c.0.s8 %v795
        %v797 = vlaneseq
        %v798 = vshrl.u32 %v797, 7
        %v799 = vsub.s32 %v796, %v798
        %v800 = vrot.slane %v792, %v799
        %v802 = vunpack.c.l.s4 1983009808
        %v803 = vunpack.c.0.s8 %v802
        %v804 = vlaneseq
        %v805 = vshrl.u32 %v804, 7
        %v806 = vsub.s32 %v803, %v805
        %v807 = vrot.slane %v793, %v806
        %v808 = vcombine.low %v784, %v800
        %v809 = vcombine.high %v784, %v800
        %v811 = vunpack.c.l.s4 1934713408
        %v812 = vunpack.c.0.s8 %v811
        %v813 = vlaneseq
        %v814 = vshrl.u32 %v813, 7
        %v815 = vsub.s32 %v812, %v814
        %v816 = vrot.slane %v808, %v815
        %v818 = vunpack.c.l.s4 1934713408
        %v819 = vunpack.c.0.s8 %v818
        %v820 = vlaneseq
        %v821 = vshrl.u32 %v820, 7
        %v822 = vsub.s32 %v819, %v821
        %v823 = vrot.slane %v809, %v822
        %v824 = vcombine.low %v791, %v807
        %v825 = vcombine.high %v791, %v807
        %v827 = vunpack.c.l.s4 1934713408
        %v828 = vunpack.c.0.s8 %v827
        %v829 = vlaneseq
        %v830 = vshrl.u32 %v829, 7
        %v831 = vsub.s32 %v828, %v830
        %v832 = vrot.slane %v824, %v831
        %v834 = vunpack.c.l.s4 1934713408
        %v835 = vunpack.c.0.s8 %v834
        %v836 = vlaneseq
        %v837 = vshrl.u32 %v836, 7
        %v838 = vsub.s32 %v835, %v837
        %v839 = vrot.slane %v825, %v838
        %v840 = vcombine.high %v816, 0.0
        %v841 = vcombine.high %v823, 0.0
        %v842 = vcombine.high %v832, 0.0
        %v843 = vcombine.high %v839, 0.0
        %845 = vrot.lane.b32.xlu0 %v772, 16
        %v846 = vpop.permute.xlu0 %845
        %849 = vrot.lane.b32.xlu0 %v755, 32
        %v850 = vpop.permute.xlu0 %849
        %853 = vrot.lane.b32.xlu0 %v773, 48
        %v854 = vpop.permute.xlu0 %853
        %857 = vrot.lane.b32.xlu0 %v764, 64
        %v858 = vpop.permute.xlu0 %857
        %861 = vrot.lane.b32.xlu0 %v774, 80
        %v862 = vpop.permute.xlu0 %861
        %865 = vrot.lane.b32.xlu0 %v771, 96
        %v866 = vpop.permute.xlu0 %865
        %869 = vrot.lane.b32.xlu0 %v775, 112
        %v870 = vpop.permute.xlu0 %869
        %873 = vrot.lane.b32.xlu0 %v840, 16
        %v874 = vpop.permute.xlu0 %873
        %877 = vrot.lane.b32.xlu0 %v823, 32
        %v878 = vpop.permute.xlu0 %877
        %881 = vrot.lane.b32.xlu0 %v841, 48
        %v882 = vpop.permute.xlu0 %881
        %885 = vrot.lane.b32.xlu0 %v832, 64
        %v886 = vpop.permute.xlu0 %885
        %889 = vrot.lane.b32.xlu0 %v842, 80
        %v890 = vpop.permute.xlu0 %889
        %893 = vrot.lane.b32.xlu0 %v839, 96
        %v894 = vpop.permute.xlu0 %893
        %897 = vrot.lane.b32.xlu0 %v843, 112
        %v898 = vpop.permute.xlu0 %897
        %v900 = vsel %vm646, %v748, %v846
        %v901 = vsel %vm648, %v900, %v850
        %v902 = vsel %vm650, %v901, %v854
        %v903 = vsel %vm652, %v902, %v858
        %v904 = vsel %vm654, %v903, %v862
        %v905 = vsel %vm656, %v904, %v866
        %v906 = vsel %vm658, %v905, %v870
        %v907 = vsel %vm646, %v816, %v874
        %v908 = vsel %vm648, %v907, %v878
        %v909 = vsel %vm650, %v908, %v882
        %v910 = vsel %vm652, %v909, %v886
        %v911 = vsel %vm654, %v910, %v890
        %v912 = vsel %vm656, %v911, %v894
        %v913 = vsel %vm658, %v912, %v898
        %v914 = vpack.c.bf16 %v906, %v906
        %v915 = vpack.c.bf16 %v913, %v913
        %v918 = vunpack.c.l.b16 %v914
        %v919 = vunpack.c.l.b16 %v915
        %v920 = vpack.c.b16 %v919, %v918
        %v921 = vrot.slane %v920, 6
        %923 = vst [vmem:[#allocation3] sm:$0xcc] %v921
        %924 = vrot.lane.b32.xlu0 %v442, 126
        %v925 = vpop.permute.xlu0 %924
        %926 = vrot.lane.b32.xlu0 %v443, 126
        %v927 = vpop.permute.xlu0 %926
        %928 = vrot.lane.b32.xlu0 %v445, 126
        %v929 = vpop.permute.xlu0 %928
        %930 = vrot.lane.b32.xlu0 %v446, 126
        %v931 = vpop.permute.xlu0 %930
        %932 = vrot.lane.b32.xlu0 %v448, 126
        %v933 = vpop.permute.xlu0 %932
        %934 = vrot.lane.b32.xlu0 %v449, 126
        %v935 = vpop.permute.xlu0 %934
        %936 = vrot.lane.b32.xlu0 %v451, 126
        %v937 = vpop.permute.xlu0 %936
        %938 = vrot.lane.b32.xlu0 %v452, 126
        %v939 = vpop.permute.xlu0 %938
        %v948 = vcombine.low %v925, %v933
        %v949 = vcombine.high %v925, %v933
        %v951 = vunpack.c.l.s4 1983009808
        %v952 = vunpack.c.0.s8 %v951
        %v953 = vlaneseq
        %v954 = vshrl.u32 %v953, 7
        %v955 = vsub.s32 %v952, %v954
        %v956 = vrot.slane %v948, %v955
        %v958 = vunpack.c.l.s4 1983009808
        %v959 = vunpack.c.0.s8 %v958
        %v960 = vlaneseq
        %v961 = vshrl.u32 %v960, 7
        %v962 = vsub.s32 %v959, %v961
        %v963 = vrot.slane %v949, %v962
        %v964 = vcombine.low %v929, %v937
        %v965 = vcombine.high %v929, %v937
        %v967 = vunpack.c.l.s4 1983009808
        %v968 = vunpack.c.0.s8 %v967
        %v969 = vlaneseq
        %v970 = vshrl.u32 %v969, 7
        %v971 = vsub.s32 %v968, %v970
        %v972 = vrot.slane %v964, %v971
        %v974 = vunpack.c.l.s4 1983009808
        %v975 = vunpack.c.0.s8 %v974
        %v976 = vlaneseq
        %v977 = vshrl.u32 %v976, 7
        %v978 = vsub.s32 %v975, %v977
        %v979 = vrot.slane %v965, %v978
        %v980 = vcombine.low %v956, %v972
        %v981 = vcombine.high %v956, %v972
        %v983 = vunpack.c.l.s4 1934713408
        %v984 = vunpack.c.0.s8 %v983
        %v985 = vlaneseq
        %v986 = vshrl.u32 %v985, 7
        %v987 = vsub.s32 %v984, %v986
        %v988 = vrot.slane %v980, %v987
        %v990 = vunpack.c.l.s4 1934713408
        %v991 = vunpack.c.0.s8 %v990
        %v992 = vlaneseq
        %v993 = vshrl.u32 %v992, 7
        %v994 = vsub.s32 %v991, %v993
        %v995 = vrot.slane %v981, %v994
        %v996 = vcombine.low %v963, %v979
        %v997 = vcombine.high %v963, %v979
        %v999 = vunpack.c.l.s4 1934713408
        %v1000 = vunpack.c.0.s8 %v999
        %v1001 = vlaneseq
        %v1002 = vshrl.u32 %v1001, 7
        %v1003 = vsub.s32 %v1000, %v1002
        %v1004 = vrot.slane %v996, %v1003
        %v1006 = vunpack.c.l.s4 1934713408
        %v1007 = vunpack.c.0.s8 %v1006
        %v1008 = vlaneseq
        %v1009 = vshrl.u32 %v1008, 7
        %v1010 = vsub.s32 %v1007, %v1009
        %v1011 = vrot.slane %v997, %v1010
        %v1012 = vcombine.high %v988, 0.0
        %v1013 = vcombine.high %v995, 0.0
        %v1014 = vcombine.high %v1004, 0.0
        %v1015 = vcombine.high %v1011, 0.0
        %v1016 = vcombine.low %v927, %v935
        %v1017 = vcombine.high %v927, %v935
        %v1019 = vunpack.c.l.s4 1983009808
        %v1020 = vunpack.c.0.s8 %v1019
        %v1021 = vlaneseq
        %v1022 = vshrl.u32 %v1021, 7
        %v1023 = vsub.s32 %v1020, %v1022
        %v1024 = vrot.slane %v1016, %v1023
        %v1026 = vunpack.c.l.s4 1983009808
        %v1027 = vunpack.c.0.s8 %v1026
        %v1028 = vlaneseq
        %v1029 = vshrl.u32 %v1028, 7
        %v1030 = vsub.s32 %v1027, %v1029
        %v1031 = vrot.slane %v1017, %v1030
        %v1032 = vcombine.low %v931, %v939
        %v1033 = vcombine.high %v931, %v939
        %v1035 = vunpack.c.l.s4 1983009808
        %v1036 = vunpack.c.0.s8 %v1035
        %v1037 = vlaneseq
        %v1038 = vshrl.u32 %v1037, 7
        %v1039 = vsub.s32 %v1036, %v1038
        %v1040 = vrot.slane %v1032, %v1039
        %v1042 = vunpack.c.l.s4 1983009808
        %v1043 = vunpack.c.0.s8 %v1042
        %v1044 = vlaneseq
        %v1045 = vshrl.u32 %v1044, 7
        %v1046 = vsub.s32 %v1043, %v1045
        %v1047 = vrot.slane %v1033, %v1046
        %v1048 = vcombine.low %v1024, %v1040
        %v1049 = vcombine.high %v1024, %v1040
        %v1051 = vunpack.c.l.s4 1934713408
        %v1052 = vunpack.c.0.s8 %v1051
        %v1053 = vlaneseq
        %v1054 = vshrl.u32 %v1053, 7
        %v1055 = vsub.s32 %v1052, %v1054
        %v1056 = vrot.slane %v1048, %v1055
        %v1058 = vunpack.c.l.s4 1934713408
        %v1059 = vunpack.c.0.s8 %v1058
        %v1060 = vlaneseq
        %v1061 = vshrl.u32 %v1060, 7
        %v1062 = vsub.s32 %v1059, %v1061
        %v1063 = vrot.slane %v1049, %v1062
        %v1064 = vcombine.low %v1031, %v1047
        %v1065 = vcombine.high %v1031, %v1047
        %v1067 = vunpack.c.l.s4 1934713408
        %v1068 = vunpack.c.0.s8 %v1067
        %v1069 = vlaneseq
        %v1070 = vshrl.u32 %v1069, 7
        %v1071 = vsub.s32 %v1068, %v1070
        %v1072 = vrot.slane %v1064, %v1071
        %v1074 = vunpack.c.l.s4 1934713408
        %v1075 = vunpack.c.0.s8 %v1074
        %v1076 = vlaneseq
        %v1077 = vshrl.u32 %v1076, 7
        %v1078 = vsub.s32 %v1075, %v1077
        %v1079 = vrot.slane %v1065, %v1078
        %v1080 = vcombine.high %v1056, 0.0
        %v1081 = vcombine.high %v1063, 0.0
        %v1082 = vcombine.high %v1072, 0.0
        %v1083 = vcombine.high %v1079, 0.0
        %1085 = vrot.lane.b32.xlu0 %v1012, 16
        %v1086 = vpop.permute.xlu0 %1085
        %1089 = vrot.lane.b32.xlu0 %v995, 32
        %v1090 = vpop.permute.xlu0 %1089
        %1093 = vrot.lane.b32.xlu0 %v1013, 48
        %v1094 = vpop.permute.xlu0 %1093
        %1097 = vrot.lane.b32.xlu0 %v1004, 64
        %v1098 = vpop.permute.xlu0 %1097
        %1101 = vrot.lane.b32.xlu0 %v1014, 80
        %v1102 = vpop.permute.xlu0 %1101
        %1105 = vrot.lane.b32.xlu0 %v1011, 96
        %v1106 = vpop.permute.xlu0 %1105
        %1109 = vrot.lane.b32.xlu0 %v1015, 112
        %v1110 = vpop.permute.xlu0 %1109
        %1113 = vrot.lane.b32.xlu0 %v1080, 16
        %v1114 = vpop.permute.xlu0 %1113
        %1117 = vrot.lane.b32.xlu0 %v1063, 32
        %v1118 = vpop.permute.xlu0 %1117
        %1121 = vrot.lane.b32.xlu0 %v1081, 48
        %v1122 = vpop.permute.xlu0 %1121
        %1125 = vrot.lane.b32.xlu0 %v1072, 64
        %v1126 = vpop.permute.xlu0 %1125
        %1129 = vrot.lane.b32.xlu0 %v1082, 80
        %v1130 = vpop.permute.xlu0 %1129
        %1133 = vrot.lane.b32.xlu0 %v1079, 96
        %v1134 = vpop.permute.xlu0 %1133
        %1137 = vrot.lane.b32.xlu0 %v1083, 112
        %v1138 = vpop.permute.xlu0 %1137
        %v1140 = vsel %vm646, %v988, %v1086
        %v1141 = vsel %vm648, %v1140, %v1090
        %v1142 = vsel %vm650, %v1141, %v1094
        %v1143 = vsel %vm652, %v1142, %v1098
        %v1144 = vsel %vm654, %v1143, %v1102
        %v1145 = vsel %vm656, %v1144, %v1106
        %v1146 = vsel %vm658, %v1145, %v1110
        %v1147 = vsel %vm646, %v1056, %v1114
        %v1148 = vsel %vm648, %v1147, %v1118
        %v1149 = vsel %vm650, %v1148, %v1122
        %v1150 = vsel %vm652, %v1149, %v1126
        %v1151 = vsel %vm654, %v1150, %v1130
        %v1152 = vsel %vm656, %v1151, %v1134
        %v1153 = vsel %vm658, %v1152, %v1138
        %v1154 = vpack.c.bf16 %v1146, %v1146
        %v1155 = vpack.c.bf16 %v1153, %v1153
        %v1158 = vunpack.c.l.b16 %v1154
        %v1159 = vunpack.c.l.b16 %v1155
        %v1160 = vpack.c.b16 %v1159, %v1158
        %1162 = vst [vmem:[#allocation3 + $0x8] sm:$0x33] %v1160
        %vm1167 = vcmask 1046528
        %v1168 = vrot.slane %v442, 1
        %v1169 = vrot.slane %v443, 1
        %v1170 = vsel %vm1167, %v1168, %v1169
        %v1171 = vrot.slane %v444, 1
        %v1172 = vsel %vm1167, %v1169, %v1171
        %v1173 = vrot.slane %v445, 1
        %v1174 = vrot.slane %v446, 1
        %v1175 = vsel %vm1167, %v1173, %v1174
        %v1176 = vrot.slane %v447, 1
        %v1177 = vsel %vm1167, %v1174, %v1176
        %v1178 = vrot.slane %v448, 1
        %v1179 = vrot.slane %v449, 1
        %v1180 = vsel %vm1167, %v1178, %v1179
        %v1181 = vrot.slane %v450, 1
        %v1182 = vsel %vm1167, %v1179, %v1181
        %v1183 = vrot.slane %v451, 1
        %v1184 = vrot.slane %v452, 1
        %v1185 = vsel %vm1167, %v1183, %v1184
        %v1186 = vrot.slane %v453, 1
        %v1187 = vsel %vm1167, %v1184, %v1186
        %v1196 = vcombine.low %v1170, %v1180
        %v1197 = vcombine.high %v1170, %v1180
        %v1199 = vunpack.c.l.s4 1983009808
        %v1200 = vunpack.c.0.s8 %v1199
        %v1201 = vlaneseq
        %v1202 = vshrl.u32 %v1201, 7
        %v1203 = vsub.s32 %v1200, %v1202
        %v1204 = vrot.slane %v1196, %v1203
        %v1206 = vunpack.c.l.s4 1983009808
        %v1207 = vunpack.c.0.s8 %v1206
        %v1208 = vlaneseq
        %v1209 = vshrl.u32 %v1208, 7
        %v1210 = vsub.s32 %v1207, %v1209
        %v1211 = vrot.slane %v1197, %v1210
        %v1212 = vcombine.low %v1175, %v1185
        %v1213 = vcombine.high %v1175, %v1185
        %v1215 = vunpack.c.l.s4 1983009808
        %v1216 = vunpack.c.0.s8 %v1215
        %v1217 = vlaneseq
        %v1218 = vshrl.u32 %v1217, 7
        %v1219 = vsub.s32 %v1216, %v1218
        %v1220 = vrot.slane %v1212, %v1219
        %v1222 = vunpack.c.l.s4 1983009808
        %v1223 = vunpack.c.0.s8 %v1222
        %v1224 = vlaneseq
        %v1225 = vshrl.u32 %v1224, 7
        %v1226 = vsub.s32 %v1223, %v1225
        %v1227 = vrot.slane %v1213, %v1226
        %v1228 = vcombine.low %v1204, %v1220
        %v1229 = vcombine.high %v1204, %v1220
        %v1231 = vunpack.c.l.s4 1934713408
        %v1232 = vunpack.c.0.s8 %v1231
        %v1233 = vlaneseq
        %v1234 = vshrl.u32 %v1233, 7
        %v1235 = vsub.s32 %v1232, %v1234
        %v1236 = vrot.slane %v1228, %v1235
        %v1238 = vunpack.c.l.s4 1934713408
        %v1239 = vunpack.c.0.s8 %v1238
        %v1240 = vlaneseq
        %v1241 = vshrl.u32 %v1240, 7
        %v1242 = vsub.s32 %v1239, %v1241
        %v1243 = vrot.slane %v1229, %v1242
        %v1244 = vcombine.low %v1211, %v1227
        %v1245 = vcombine.high %v1211, %v1227
        %v1247 = vunpack.c.l.s4 1934713408
        %v1248 = vunpack.c.0.s8 %v1247
        %v1249 = vlaneseq
        %v1250 = vshrl.u32 %v1249, 7
        %v1251 = vsub.s32 %v1248, %v1250
        %v1252 = vrot.slane %v1244, %v1251
        %v1254 = vunpack.c.l.s4 1934713408
        %v1255 = vunpack.c.0.s8 %v1254
        %v1256 = vlaneseq
        %v1257 = vshrl.u32 %v1256, 7
        %v1258 = vsub.s32 %v1255, %v1257
        %v1259 = vrot.slane %v1245, %v1258
        %v1260 = vcombine.high %v1236, 0.0
        %v1261 = vcombine.high %v1243, 0.0
        %v1262 = vcombine.high %v1252, 0.0
        %v1263 = vcombine.high %v1259, 0.0
        %v1264 = vcombine.low %v1172, %v1182
        %v1265 = vcombine.high %v1172, %v1182
        %v1267 = vunpack.c.l.s4 1983009808
        %v1268 = vunpack.c.0.s8 %v1267
        %v1269 = vlaneseq
        %v1270 = vshrl.u32 %v1269, 7
        %v1271 = vsub.s32 %v1268, %v1270
        %v1272 = vrot.slane %v1264, %v1271
        %v1274 = vunpack.c.l.s4 1983009808
        %v1275 = vunpack.c.0.s8 %v1274
        %v1276 = vlaneseq
        %v1277 = vshrl.u32 %v1276, 7
        %v1278 = vsub.s32 %v1275, %v1277
        %v1279 = vrot.slane %v1265, %v1278
        %v1280 = vcombine.low %v1177, %v1187
        %v1281 = vcombine.high %v1177, %v1187
        %v1283 = vunpack.c.l.s4 1983009808
        %v1284 = vunpack.c.0.s8 %v1283
        %v1285 = vlaneseq
        %v1286 = vshrl.u32 %v1285, 7
        %v1287 = vsub.s32 %v1284, %v1286
        %v1288 = vrot.slane %v1280, %v1287
        %v1290 = vunpack.c.l.s4 1983009808
        %v1291 = vunpack.c.0.s8 %v1290
        %v1292 = vlaneseq
        %v1293 = vshrl.u32 %v1292, 7
        %v1294 = vsub.s32 %v1291, %v1293
        %v1295 = vrot.slane %v1281, %v1294
        %v1296 = vcombine.low %v1272, %v1288
        %v1297 = vcombine.high %v1272, %v1288
        %v1299 = vunpack.c.l.s4 1934713408
        %v1300 = vunpack.c.0.s8 %v1299
        %v1301 = vlaneseq
        %v1302 = vshrl.u32 %v1301, 7
        %v1303 = vsub.s32 %v1300, %v1302
        %v1304 = vrot.slane %v1296, %v1303
        %v1306 = vunpack.c.l.s4 1934713408
        %v1307 = vunpack.c.0.s8 %v1306
        %v1308 = vlaneseq
        %v1309 = vshrl.u32 %v1308, 7
        %v1310 = vsub.s32 %v1307, %v1309
        %v1311 = vrot.slane %v1297, %v1310
        %v1312 = vcombine.low %v1279, %v1295
        %v1313 = vcombine.high %v1279, %v1295
        %v1315 = vunpack.c.l.s4 1934713408
        %v1316 = vunpack.c.0.s8 %v1315
        %v1317 = vlaneseq
        %v1318 = vshrl.u32 %v1317, 7
        %v1319 = vsub.s32 %v1316, %v1318
        %v1320 = vrot.slane %v1312, %v1319
        %v1322 = vunpack.c.l.s4 1934713408
        %v1323 = vunpack.c.0.s8 %v1322
        %v1324 = vlaneseq
        %v1325 = vshrl.u32 %v1324, 7
        %v1326 = vsub.s32 %v1323, %v1325
        %v1327 = vrot.slane %v1313, %v1326
        %v1328 = vcombine.high %v1304, 0.0
        %v1329 = vcombine.high %v1311, 0.0
        %v1330 = vcombine.high %v1320, 0.0
        %v1331 = vcombine.high %v1327, 0.0
        %1333 = vrot.lane.b32.xlu0 %v1260, 16
        %v1334 = vpop.permute.xlu0 %1333
        %1337 = vrot.lane.b32.xlu0 %v1243, 32
        %v1338 = vpop.permute.xlu0 %1337
        %1341 = vrot.lane.b32.xlu0 %v1261, 48
        %v1342 = vpop.permute.xlu0 %1341
        %1345 = vrot.lane.b32.xlu0 %v1252, 64
        %v1346 = vpop.permute.xlu0 %1345
        %1349 = vrot.lane.b32.xlu0 %v1262, 80
        %v1350 = vpop.permute.xlu0 %1349
        %1353 = vrot.lane.b32.xlu0 %v1259, 96
        %v1354 = vpop.permute.xlu0 %1353
        %1357 = vrot.lane.b32.xlu0 %v1263, 112
        %v1358 = vpop.permute.xlu0 %1357
        %1361 = vrot.lane.b32.xlu0 %v1328, 16
        %v1362 = vpop.permute.xlu0 %1361
        %1365 = vrot.lane.b32.xlu0 %v1311, 32
        %v1366 = vpop.permute.xlu0 %1365
        %1369 = vrot.lane.b32.xlu0 %v1329, 48
        %v1370 = vpop.permute.xlu0 %1369
        %1373 = vrot.lane.b32.xlu0 %v1320, 64
        %v1374 = vpop.permute.xlu0 %1373
        %1377 = vrot.lane.b32.xlu0 %v1330, 80
        %v1378 = vpop.permute.xlu0 %1377
        %1381 = vrot.lane.b32.xlu0 %v1327, 96
        %v1382 = vpop.permute.xlu0 %1381
        %1385 = vrot.lane.b32.xlu0 %v1331, 112
        %v1386 = vpop.permute.xlu0 %1385
        %v1388 = vsel %vm646, %v1236, %v1334
        %v1389 = vsel %vm648, %v1388, %v1338
        %v1390 = vsel %vm650, %v1389, %v1342
        %v1391 = vsel %vm652, %v1390, %v1346
        %v1392 = vsel %vm654, %v1391, %v1350
        %v1393 = vsel %vm656, %v1392, %v1354
        %v1394 = vsel %vm658, %v1393, %v1358
        %v1395 = vsel %vm646, %v1304, %v1362
        %v1396 = vsel %vm648, %v1395, %v1366
        %v1397 = vsel %vm650, %v1396, %v1370
        %v1398 = vsel %vm652, %v1397, %v1374
        %v1399 = vsel %vm654, %v1398, %v1378
        %v1400 = vsel %vm656, %v1399, %v1382
        %v1401 = vsel %vm658, %v1400, %v1386
        %v1402 = vpack.c.bf16 %v1394, %v1394
        %v1403 = vpack.c.bf16 %v1401, %v1401
        %v1406 = vunpack.c.l.b16 %v1402
        %v1407 = vunpack.c.l.b16 %v1403
        %v1408 = vpack.c.b16 %v1407, %v1406
        %v1409 = vrot.slane %v1408, 6
        %1411 = vst [vmem:[#allocation3 + $0x8] sm:$0xcc] %v1409
        %1412 = vrot.lane.b32.xlu0 %v1170, 127
        %v1413 = vpop.permute.xlu0 %1412
        %1414 = vrot.lane.b32.xlu0 %v1172, 127
        %v1415 = vpop.permute.xlu0 %1414
        %1416 = vrot.lane.b32.xlu0 %v1175, 127
        %v1417 = vpop.permute.xlu0 %1416
        %1418 = vrot.lane.b32.xlu0 %v1177, 127
        %v1419 = vpop.permute.xlu0 %1418
        %1420 = vrot.lane.b32.xlu0 %v1180, 127
        %v1421 = vpop.permute.xlu0 %1420
        %1422 = vrot.lane.b32.xlu0 %v1182, 127
        %v1423 = vpop.permute.xlu0 %1422
        %1424 = vrot.lane.b32.xlu0 %v1185, 127
        %v1425 = vpop.permute.xlu0 %1424
        %1426 = vrot.lane.b32.xlu0 %v1187, 127
        %v1427 = vpop.permute.xlu0 %1426
        %v1436 = vcombine.low %v1413, %v1421
        %v1437 = vcombine.high %v1413, %v1421
        %v1439 = vunpack.c.l.s4 1983009808
        %v1440 = vunpack.c.0.s8 %v1439
        %v1441 = vlaneseq
        %v1442 = vshrl.u32 %v1441, 7
        %v1443 = vsub.s32 %v1440, %v1442
        %v1444 = vrot.slane %v1436, %v1443
        %v1446 = vunpack.c.l.s4 1983009808
        %v1447 = vunpack.c.0.s8 %v1446
        %v1448 = vlaneseq
        %v1449 = vshrl.u32 %v1448, 7
        %v1450 = vsub.s32 %v1447, %v1449
        %v1451 = vrot.slane %v1437, %v1450
        %v1452 = vcombine.low %v1417, %v1425
        %v1453 = vcombine.high %v1417, %v1425
        %v1455 = vunpack.c.l.s4 1983009808
        %v1456 = vunpack.c.0.s8 %v1455
        %v1457 = vlaneseq
        %v1458 = vshrl.u32 %v1457, 7
        %v1459 = vsub.s32 %v1456, %v1458
        %v1460 = vrot.slane %v1452, %v1459
        %v1462 = vunpack.c.l.s4 1983009808
        %v1463 = vunpack.c.0.s8 %v1462
        %v1464 = vlaneseq
        %v1465 = vshrl.u32 %v1464, 7
        %v1466 = vsub.s32 %v1463, %v1465
        %v1467 = vrot.slane %v1453, %v1466
        %v1468 = vcombine.low %v1444, %v1460
        %v1469 = vcombine.high %v1444, %v1460
        %v1471 = vunpack.c.l.s4 1934713408
        %v1472 = vunpack.c.0.s8 %v1471
        %v1473 = vlaneseq
        %v1474 = vshrl.u32 %v1473, 7
        %v1475 = vsub.s32 %v1472, %v1474
        %v1476 = vrot.slane %v1468, %v1475
        %v1478 = vunpack.c.l.s4 1934713408
        %v1479 = vunpack.c.0.s8 %v1478
        %v1480 = vlaneseq
        %v1481 = vshrl.u32 %v1480, 7
        %v1482 = vsub.s32 %v1479, %v1481
        %v1483 = vrot.slane %v1469, %v1482
        %v1484 = vcombine.low %v1451, %v1467
        %v1485 = vcombine.high %v1451, %v1467
        %v1487 = vunpack.c.l.s4 1934713408
        %v1488 = vunpack.c.0.s8 %v1487
        %v1489 = vlaneseq
        %v1490 = vshrl.u32 %v1489, 7
        %v1491 = vsub.s32 %v1488, %v1490
        %v1492 = vrot.slane %v1484, %v1491
        %v1494 = vunpack.c.l.s4 1934713408
        %v1495 = vunpack.c.0.s8 %v1494
        %v1496 = vlaneseq
        %v1497 = vshrl.u32 %v1496, 7
        %v1498 = vsub.s32 %v1495, %v1497
        %v1499 = vrot.slane %v1485, %v1498
        %v1500 = vcombine.high %v1476, 0.0
        %v1501 = vcombine.high %v1483, 0.0
        %v1502 = vcombine.high %v1492, 0.0
        %v1503 = vcombine.high %v1499, 0.0
        %v1504 = vcombine.low %v1415, %v1423
        %v1505 = vcombine.high %v1415, %v1423
        %v1507 = vunpack.c.l.s4 1983009808
        %v1508 = vunpack.c.0.s8 %v1507
        %v1509 = vlaneseq
        %v1510 = vshrl.u32 %v1509, 7
        %v1511 = vsub.s32 %v1508, %v1510
        %v1512 = vrot.slane %v1504, %v1511
        %v1514 = vunpack.c.l.s4 1983009808
        %v1515 = vunpack.c.0.s8 %v1514
        %v1516 = vlaneseq
        %v1517 = vshrl.u32 %v1516, 7
        %v1518 = vsub.s32 %v1515, %v1517
        %v1519 = vrot.slane %v1505, %v1518
        %v1520 = vcombine.low %v1419, %v1427
        %v1521 = vcombine.high %v1419, %v1427
        %v1523 = vunpack.c.l.s4 1983009808
        %v1524 = vunpack.c.0.s8 %v1523
        %v1525 = vlaneseq
        %v1526 = vshrl.u32 %v1525, 7
        %v1527 = vsub.s32 %v1524, %v1526
        %v1528 = vrot.slane %v1520, %v1527
        %v1530 = vunpack.c.l.s4 1983009808
        %v1531 = vunpack.c.0.s8 %v1530
        %v1532 = vlaneseq
        %v1533 = vshrl.u32 %v1532, 7
        %v1534 = vsub.s32 %v1531, %v1533
        %v1535 = vrot.slane %v1521, %v1534
        %v1536 = vcombine.low %v1512, %v1528
        %v1537 = vcombine.high %v1512, %v1528
        %v1539 = vunpack.c.l.s4 1934713408
        %v1540 = vunpack.c.0.s8 %v1539
        %v1541 = vlaneseq
        %v1542 = vshrl.u32 %v1541, 7
        %v1543 = vsub.s32 %v1540, %v1542
        %v1544 = vrot.slane %v1536, %v1543
        %v1546 = vunpack.c.l.s4 1934713408
        %v1547 = vunpack.c.0.s8 %v1546
        %v1548 = vlaneseq
        %v1549 = vshrl.u32 %v1548, 7
        %v1550 = vsub.s32 %v1547, %v1549
        %v1551 = vrot.slane %v1537, %v1550
        %v1552 = vcombine.low %v1519, %v1535
        %v1553 = vcombine.high %v1519, %v1535
        %v1555 = vunpack.c.l.s4 1934713408
        %v1556 = vunpack.c.0.s8 %v1555
        %v1557 = vlaneseq
        %v1558 = vshrl.u32 %v1557, 7
        %v1559 = vsub.s32 %v1556, %v1558
        %v1560 = vrot.slane %v1552, %v1559
        %v1562 = vunpack.c.l.s4 1934713408
        %v1563 = vunpack.c.0.s8 %v1562
        %v1564 = vlaneseq
        %v1565 = vshrl.u32 %v1564, 7
        %v1566 = vsub.s32 %v1563, %v1565
        %v1567 = vrot.slane %v1553, %v1566
        %v1568 = vcombine.high %v1544, 0.0
        %v1569 = vcombine.high %v1551, 0.0
        %v1570 = vcombine.high %v1560, 0.0
        %v1571 = vcombine.high %v1567, 0.0
        %1573 = vrot.lane.b32.xlu0 %v1500, 16
        %v1574 = vpop.permute.xlu0 %1573
        %1577 = vrot.lane.b32.xlu0 %v1483, 32
        %v1578 = vpop.permute.xlu0 %1577
        %1581 = vrot.lane.b32.xlu0 %v1501, 48
        %v1582 = vpop.permute.xlu0 %1581
        %1585 = vrot.lane.b32.xlu0 %v1492, 64
        %v1586 = vpop.permute.xlu0 %1585
        %1589 = vrot.lane.b32.xlu0 %v1502, 80
        %v1590 = vpop.permute.xlu0 %1589
        %1593 = vrot.lane.b32.xlu0 %v1499, 96
        %v1594 = vpop.permute.xlu0 %1593
        %1597 = vrot.lane.b32.xlu0 %v1503, 112
        %v1598 = vpop.permute.xlu0 %1597
        %1601 = vrot.lane.b32.xlu0 %v1568, 16
        %v1602 = vpop.permute.xlu0 %1601
        %1605 = vrot.lane.b32.xlu0 %v1551, 32
        %v1606 = vpop.permute.xlu0 %1605
        %1609 = vrot.lane.b32.xlu0 %v1569, 48
        %v1610 = vpop.permute.xlu0 %1609
        %1613 = vrot.lane.b32.xlu0 %v1560, 64
        %v1614 = vpop.permute.xlu0 %1613
        %1617 = vrot.lane.b32.xlu0 %v1570, 80
        %v1618 = vpop.permute.xlu0 %1617
        %1621 = vrot.lane.b32.xlu0 %v1567, 96
        %v1622 = vpop.permute.xlu0 %1621
        %1625 = vrot.lane.b32.xlu0 %v1571, 112
        %v1626 = vpop.permute.xlu0 %1625
        %v1628 = vsel %vm646, %v1476, %v1574
        %v1629 = vsel %vm648, %v1628, %v1578
        %v1630 = vsel %vm650, %v1629, %v1582
        %v1631 = vsel %vm652, %v1630, %v1586
        %v1632 = vsel %vm654, %v1631, %v1590
        %v1633 = vsel %vm656, %v1632, %v1594
        %v1634 = vsel %vm658, %v1633, %v1598
        %v1635 = vsel %vm646, %v1544, %v1602
        %v1636 = vsel %vm648, %v1635, %v1606
        %v1637 = vsel %vm650, %v1636, %v1610
        %v1638 = vsel %vm652, %v1637, %v1614
        %v1639 = vsel %vm654, %v1638, %v1618
        %v1640 = vsel %vm656, %v1639, %v1622
        %v1641 = vsel %vm658, %v1640, %v1626
        %v1642 = vpack.c.bf16 %v1634, %v1634
        %v1643 = vpack.c.bf16 %v1641, %v1641
        %v1646 = vunpack.c.l.b16 %v1642
        %v1647 = vunpack.c.l.b16 %v1643
        %v1648 = vpack.c.b16 %v1647, %v1646
        %1650 = vst [vmem:[#allocation3 + $0x10] sm:$0x33] %v1648
        %1651 = vrot.lane.b32.xlu0 %v1170, 126
        %v1652 = vpop.permute.xlu0 %1651
        %1653 = vrot.lane.b32.xlu0 %v1172, 126
        %v1654 = vpop.permute.xlu0 %1653
        %1655 = vrot.lane.b32.xlu0 %v1175, 126
        %v1656 = vpop.permute.xlu0 %1655
        %1657 = vrot.lane.b32.xlu0 %v1177, 126
        %v1658 = vpop.permute.xlu0 %1657
        %1659 = vrot.lane.b32.xlu0 %v1180, 126
        %v1660 = vpop.permute.xlu0 %1659
        %1661 = vrot.lane.b32.xlu0 %v1182, 126
        %v1662 = vpop.permute.xlu0 %1661
        %1663 = vrot.lane.b32.xlu0 %v1185, 126
        %v1664 = vpop.permute.xlu0 %1663
        %1665 = vrot.lane.b32.xlu0 %v1187, 126
        %v1666 = vpop.permute.xlu0 %1665
        %v1675 = vcombine.low %v1652, %v1660
        %v1676 = vcombine.high %v1652, %v1660
        %v1678 = vunpack.c.l.s4 1983009808
        %v1679 = vunpack.c.0.s8 %v1678
        %v1680 = vlaneseq
        %v1681 = vshrl.u32 %v1680, 7
        %v1682 = vsub.s32 %v1679, %v1681
        %v1683 = vrot.slane %v1675, %v1682
        %v1685 = vunpack.c.l.s4 1983009808
        %v1686 = vunpack.c.0.s8 %v1685
        %v1687 = vlaneseq
        %v1688 = vshrl.u32 %v1687, 7
        %v1689 = vsub.s32 %v1686, %v1688
        %v1690 = vrot.slane %v1676, %v1689
        %v1691 = vcombine.low %v1656, %v1664
        %v1692 = vcombine.high %v1656, %v1664
        %v1694 = vunpack.c.l.s4 1983009808
        %v1695 = vunpack.c.0.s8 %v1694
        %v1696 = vlaneseq
        %v1697 = vshrl.u32 %v1696, 7
        %v1698 = vsub.s32 %v1695, %v1697
        %v1699 = vrot.slane %v1691, %v1698
        %v1701 = vunpack.c.l.s4 1983009808
        %v1702 = vunpack.c.0.s8 %v1701
        %v1703 = vlaneseq
        %v1704 = vshrl.u32 %v1703, 7
        %v1705 = vsub.s32 %v1702, %v1704
        %v1706 = vrot.slane %v1692, %v1705
        %v1707 = vcombine.low %v1683, %v1699
        %v1708 = vcombine.high %v1683, %v1699
        %v1710 = vunpack.c.l.s4 1934713408
        %v1711 = vunpack.c.0.s8 %v1710
        %v1712 = vlaneseq
        %v1713 = vshrl.u32 %v1712, 7
        %v1714 = vsub.s32 %v1711, %v1713
        %v1715 = vrot.slane %v1707, %v1714
        %v1717 = vunpack.c.l.s4 1934713408
        %v1718 = vunpack.c.0.s8 %v1717
        %v1719 = vlaneseq
        %v1720 = vshrl.u32 %v1719, 7
        %v1721 = vsub.s32 %v1718, %v1720
        %v1722 = vrot.slane %v1708, %v1721
        %v1723 = vcombine.low %v1690, %v1706
        %v1724 = vcombine.high %v1690, %v1706
        %v1726 = vunpack.c.l.s4 1934713408
        %v1727 = vunpack.c.0.s8 %v1726
        %v1728 = vlaneseq
        %v1729 = vshrl.u32 %v1728, 7
        %v1730 = vsub.s32 %v1727, %v1729
        %v1731 = vrot.slane %v1723, %v1730
        %v1733 = vunpack.c.l.s4 1934713408
        %v1734 = vunpack.c.0.s8 %v1733
        %v1735 = vlaneseq
        %v1736 = vshrl.u32 %v1735, 7
        %v1737 = vsub.s32 %v1734, %v1736
        %v1738 = vrot.slane %v1724, %v1737
        %v1739 = vcombine.high %v1715, 0.0
        %v1740 = vcombine.high %v1722, 0.0
        %v1741 = vcombine.high %v1731, 0.0
        %v1742 = vcombine.high %v1738, 0.0
        %v1743 = vcombine.low %v1654, %v1662
        %v1744 = vcombine.high %v1654, %v1662
        %v1746 = vunpack.c.l.s4 1983009808
        %v1747 = vunpack.c.0.s8 %v1746
        %v1748 = vlaneseq
        %v1749 = vshrl.u32 %v1748, 7
        %v1750 = vsub.s32 %v1747, %v1749
        %v1751 = vrot.slane %v1743, %v1750
        %v1753 = vunpack.c.l.s4 1983009808
        %v1754 = vunpack.c.0.s8 %v1753
        %v1755 = vlaneseq
        %v1756 = vshrl.u32 %v1755, 7
        %v1757 = vsub.s32 %v1754, %v1756
        %v1758 = vrot.slane %v1744, %v1757
        %v1759 = vcombine.low %v1658, %v1666
        %v1760 = vcombine.high %v1658, %v1666
        %v1762 = vunpack.c.l.s4 1983009808
        %v1763 = vunpack.c.0.s8 %v1762
        %v1764 = vlaneseq
        %v1765 = vshrl.u32 %v1764, 7
        %v1766 = vsub.s32 %v1763, %v1765
        %v1767 = vrot.slane %v1759, %v1766
        %v1769 = vunpack.c.l.s4 1983009808
        %v1770 = vunpack.c.0.s8 %v1769
        %v1771 = vlaneseq
        %v1772 = vshrl.u32 %v1771, 7
        %v1773 = vsub.s32 %v1770, %v1772
        %v1774 = vrot.slane %v1760, %v1773
        %v1775 = vcombine.low %v1751, %v1767
        %v1776 = vcombine.high %v1751, %v1767
        %v1778 = vunpack.c.l.s4 1934713408
        %v1779 = vunpack.c.0.s8 %v1778
        %v1780 = vlaneseq
        %v1781 = vshrl.u32 %v1780, 7
        %v1782 = vsub.s32 %v1779, %v1781
        %v1783 = vrot.slane %v1775, %v1782
        %v1785 = vunpack.c.l.s4 1934713408
        %v1786 = vunpack.c.0.s8 %v1785
        %v1787 = vlaneseq
        %v1788 = vshrl.u32 %v1787, 7
        %v1789 = vsub.s32 %v1786, %v1788
        %v1790 = vrot.slane %v1776, %v1789
        %v1791 = vcombine.low %v1758, %v1774
        %v1792 = vcombine.high %v1758, %v1774
        %v1794 = vunpack.c.l.s4 1934713408
        %v1795 = vunpack.c.0.s8 %v1794
        %v1796 = vlaneseq
        %v1797 = vshrl.u32 %v1796, 7
        %v1798 = vsub.s32 %v1795, %v1797
        %v1799 = vrot.slane %v1791, %v1798
        %v1801 = vunpack.c.l.s4 1934713408
        %v1802 = vunpack.c.0.s8 %v1801
        %v1803 = vlaneseq
        %v1804 = vshrl.u32 %v1803, 7
        %v1805 = vsub.s32 %v1802, %v1804
        %v1806 = vrot.slane %v1792, %v1805
        %v1807 = vcombine.high %v1783, 0.0
        %v1808 = vcombine.high %v1790, 0.0
        %v1809 = vcombine.high %v1799, 0.0
        %v1810 = vcombine.high %v1806, 0.0
        %1812 = vrot.lane.b32.xlu0 %v1739, 16
        %v1813 = vpop.permute.xlu0 %1812
        %1816 = vrot.lane.b32.xlu0 %v1722, 32
        %v1817 = vpop.permute.xlu0 %1816
        %1820 = vrot.lane.b32.xlu0 %v1740, 48
        %v1821 = vpop.permute.xlu0 %1820
        %1824 = vrot.lane.b32.xlu0 %v1731, 64
        %v1825 = vpop.permute.xlu0 %1824
        %1828 = vrot.lane.b32.xlu0 %v1741, 80
        %v1829 = vpop.permute.xlu0 %1828
        %1832 = vrot.lane.b32.xlu0 %v1738, 96
        %v1833 = vpop.permute.xlu0 %1832
        %1836 = vrot.lane.b32.xlu0 %v1742, 112
        %v1837 = vpop.permute.xlu0 %1836
        %1840 = vrot.lane.b32.xlu0 %v1807, 16
        %v1841 = vpop.permute.xlu0 %1840
        %1844 = vrot.lane.b32.xlu0 %v1790, 32
        %v1845 = vpop.permute.xlu0 %1844
        %1848 = vrot.lane.b32.xlu0 %v1808, 48
        %v1849 = vpop.permute.xlu0 %1848
        %1852 = vrot.lane.b32.xlu0 %v1799, 64
        %v1853 = vpop.permute.xlu0 %1852
        %1856 = vrot.lane.b32.xlu0 %v1809, 80
        %v1857 = vpop.permute.xlu0 %1856
        %1860 = vrot.lane.b32.xlu0 %v1806, 96
        %v1861 = vpop.permute.xlu0 %1860
        %1864 = vrot.lane.b32.xlu0 %v1810, 112
        %v1865 = vpop.permute.xlu0 %1864
        %v1867 = vsel %vm646, %v1715, %v1813
        %v1868 = vsel %vm648, %v1867, %v1817
        %v1869 = vsel %vm650, %v1868, %v1821
        %v1870 = vsel %vm652, %v1869, %v1825
        %v1871 = vsel %vm654, %v1870, %v1829
        %v1872 = vsel %vm656, %v1871, %v1833
        %v1873 = vsel %vm658, %v1872, %v1837
        %v1874 = vsel %vm646, %v1783, %v1841
        %v1875 = vsel %vm648, %v1874, %v1845
        %v1876 = vsel %vm650, %v1875, %v1849
        %v1877 = vsel %vm652, %v1876, %v1853
        %v1878 = vsel %vm654, %v1877, %v1857
        %v1879 = vsel %vm656, %v1878, %v1861
        %v1880 = vsel %vm658, %v1879, %v1865
        %v1881 = vpack.c.bf16 %v1873, %v1873
        %v1882 = vpack.c.bf16 %v1880, %v1880
        %v1885 = vunpack.c.l.b16 %v1881
        %v1886 = vunpack.c.l.b16 %v1882
        %v1887 = vpack.c.b16 %v1886, %v1885
        %v1888 = vrot.slane %v1887, 6
        %1890 = vst [vmem:[#allocation3 + $0x10] sm:$0xcc] %v1888
        %vm1891 = vcmask 1045504
        %v1892 = vrot.slane %v442, 2
        %v1893 = vrot.slane %v443, 2
        %v1894 = vsel %vm1891, %v1892, %v1893
        %v1895 = vrot.slane %v444, 2
        %v1896 = vsel %vm1891, %v1893, %v1895
        %v1897 = vrot.slane %v445, 2
        %v1898 = vrot.slane %v446, 2
        %v1899 = vsel %vm1891, %v1897, %v1898
        %v1900 = vrot.slane %v447, 2
        %v1901 = vsel %vm1891, %v1898, %v1900
        %v1902 = vrot.slane %v448, 2
        %v1903 = vrot.slane %v449, 2
        %v1904 = vsel %vm1891, %v1902, %v1903
        %v1905 = vrot.slane %v450, 2
        %v1906 = vsel %vm1891, %v1903, %v1905
        %v1907 = vrot.slane %v451, 2
        %v1908 = vrot.slane %v452, 2
        %v1909 = vsel %vm1891, %v1907, %v1908
        %v1910 = vrot.slane %v453, 2
        %v1911 = vsel %vm1891, %v1908, %v1910
        %v1920 = vcombine.low %v1894, %v1904
        %v1921 = vcombine.high %v1894, %v1904
        %v1923 = vunpack.c.l.s4 1983009808
        %v1924 = vunpack.c.0.s8 %v1923
        %v1925 = vlaneseq
        %v1926 = vshrl.u32 %v1925, 7
        %v1927 = vsub.s32 %v1924, %v1926
        %v1928 = vrot.slane %v1920, %v1927
        %v1930 = vunpack.c.l.s4 1983009808
        %v1931 = vunpack.c.0.s8 %v1930
        %v1932 = vlaneseq
        %v1933 = vshrl.u32 %v1932, 7
        %v1934 = vsub.s32 %v1931, %v1933
        %v1935 = vrot.slane %v1921, %v1934
        %v1936 = vcombine.low %v1899, %v1909
        %v1937 = vcombine.high %v1899, %v1909
        %v1939 = vunpack.c.l.s4 1983009808
        %v1940 = vunpack.c.0.s8 %v1939
        %v1941 = vlaneseq
        %v1942 = vshrl.u32 %v1941, 7
        %v1943 = vsub.s32 %v1940, %v1942
        %v1944 = vrot.slane %v1936, %v1943
        %v1946 = vunpack.c.l.s4 1983009808
        %v1947 = vunpack.c.0.s8 %v1946
        %v1948 = vlaneseq
        %v1949 = vshrl.u32 %v1948, 7
        %v1950 = vsub.s32 %v1947, %v1949
        %v1951 = vrot.slane %v1937, %v1950
        %v1952 = vcombine.low %v1928, %v1944
        %v1953 = vcombine.high %v1928, %v1944
        %v1955 = vunpack.c.l.s4 1934713408
        %v1956 = vunpack.c.0.s8 %v1955
        %v1957 = vlaneseq
        %v1958 = vshrl.u32 %v1957, 7
        %v1959 = vsub.s32 %v1956, %v1958
        %v1960 = vrot.slane %v1952, %v1959
        %v1962 = vunpack.c.l.s4 1934713408
        %v1963 = vunpack.c.0.s8 %v1962
        %v1964 = vlaneseq
        %v1965 = vshrl.u32 %v1964, 7
        %v1966 = vsub.s32 %v1963, %v1965
        %v1967 = vrot.slane %v1953, %v1966
        %v1968 = vcombine.low %v1935, %v1951
        %v1969 = vcombine.high %v1935, %v1951
        %v1971 = vunpack.c.l.s4 1934713408
        %v1972 = vunpack.c.0.s8 %v1971
        %v1973 = vlaneseq
        %v1974 = vshrl.u32 %v1973, 7
        %v1975 = vsub.s32 %v1972, %v1974
        %v1976 = vrot.slane %v1968, %v1975
        %v1978 = vunpack.c.l.s4 1934713408
        %v1979 = vunpack.c.0.s8 %v1978
        %v1980 = vlaneseq
        %v1981 = vshrl.u32 %v1980, 7
        %v1982 = vsub.s32 %v1979, %v1981
        %v1983 = vrot.slane %v1969, %v1982
        %v1984 = vcombine.high %v1960, 0.0
        %v1985 = vcombine.high %v1967, 0.0
        %v1986 = vcombine.high %v1976, 0.0
        %v1987 = vcombine.high %v1983, 0.0
        %v1988 = vcombine.low %v1896, %v1906
        %v1989 = vcombine.high %v1896, %v1906
        %v1991 = vunpack.c.l.s4 1983009808
        %v1992 = vunpack.c.0.s8 %v1991
        %v1993 = vlaneseq
        %v1994 = vshrl.u32 %v1993, 7
        %v1995 = vsub.s32 %v1992, %v1994
        %v1996 = vrot.slane %v1988, %v1995
        %v1998 = vunpack.c.l.s4 1983009808
        %v1999 = vunpack.c.0.s8 %v1998
        %v2000 = vlaneseq
        %v2001 = vshrl.u32 %v2000, 7
        %v2002 = vsub.s32 %v1999, %v2001
        %v2003 = vrot.slane %v1989, %v2002
        %v2004 = vcombine.low %v1901, %v1911
        %v2005 = vcombine.high %v1901, %v1911
        %v2007 = vunpack.c.l.s4 1983009808
        %v2008 = vunpack.c.0.s8 %v2007
        %v2009 = vlaneseq
        %v2010 = vshrl.u32 %v2009, 7
        %v2011 = vsub.s32 %v2008, %v2010
        %v2012 = vrot.slane %v2004, %v2011
        %v2014 = vunpack.c.l.s4 1983009808
        %v2015 = vunpack.c.0.s8 %v2014
        %v2016 = vlaneseq
        %v2017 = vshrl.u32 %v2016, 7
        %v2018 = vsub.s32 %v2015, %v2017
        %v2019 = vrot.slane %v2005, %v2018
        %v2020 = vcombine.low %v1996, %v2012
        %v2021 = vcombine.high %v1996, %v2012
        %v2023 = vunpack.c.l.s4 1934713408
        %v2024 = vunpack.c.0.s8 %v2023
        %v2025 = vlaneseq
        %v2026 = vshrl.u32 %v2025, 7
        %v2027 = vsub.s32 %v2024, %v2026
        %v2028 = vrot.slane %v2020, %v2027
        %v2030 = vunpack.c.l.s4 1934713408
        %v2031 = vunpack.c.0.s8 %v2030
        %v2032 = vlaneseq
        %v2033 = vshrl.u32 %v2032, 7
        %v2034 = vsub.s32 %v2031, %v2033
        %v2035 = vrot.slane %v2021, %v2034
        %v2036 = vcombine.low %v2003, %v2019
        %v2037 = vcombine.high %v2003, %v2019
        %v2039 = vunpack.c.l.s4 1934713408
        %v2040 = vunpack.c.0.s8 %v2039
        %v2041 = vlaneseq
        %v2042 = vshrl.u32 %v2041, 7
        %v2043 = vsub.s32 %v2040, %v2042
        %v2044 = vrot.slane %v2036, %v2043
        %v2046 = vunpack.c.l.s4 1934713408
        %v2047 = vunpack.c.0.s8 %v2046
        %v2048 = vlaneseq
        %v2049 = vshrl.u32 %v2048, 7
        %v2050 = vsub.s32 %v2047, %v2049
        %v2051 = vrot.slane %v2037, %v2050
        %v2052 = vcombine.high %v2028, 0.0
        %v2053 = vcombine.high %v2035, 0.0
        %v2054 = vcombine.high %v2044, 0.0
        %v2055 = vcombine.high %v2051, 0.0
        %2057 = vrot.lane.b32.xlu0 %v1984, 16
        %v2058 = vpop.permute.xlu0 %2057
        %2061 = vrot.lane.b32.xlu0 %v1967, 32
        %v2062 = vpop.permute.xlu0 %2061
        %2065 = vrot.lane.b32.xlu0 %v1985, 48
        %v2066 = vpop.permute.xlu0 %2065
        %2069 = vrot.lane.b32.xlu0 %v1976, 64
        %v2070 = vpop.permute.xlu0 %2069
        %2073 = vrot.lane.b32.xlu0 %v1986, 80
        %v2074 = vpop.permute.xlu0 %2073
        %2077 = vrot.lane.b32.xlu0 %v1983, 96
        %v2078 = vpop.permute.xlu0 %2077
        %2081 = vrot.lane.b32.xlu0 %v1987, 112
        %v2082 = vpop.permute.xlu0 %2081
        %2085 = vrot.lane.b32.xlu0 %v2052, 16
        %v2086 = vpop.permute.xlu0 %2085
        %2089 = vrot.lane.b32.xlu0 %v2035, 32
        %v2090 = vpop.permute.xlu0 %2089
        %2093 = vrot.lane.b32.xlu0 %v2053, 48
        %v2094 = vpop.permute.xlu0 %2093
        %2097 = vrot.lane.b32.xlu0 %v2044, 64
        %v2098 = vpop.permute.xlu0 %2097
        %2101 = vrot.lane.b32.xlu0 %v2054, 80
        %v2102 = vpop.permute.xlu0 %2101
        %2105 = vrot.lane.b32.xlu0 %v2051, 96
        %v2106 = vpop.permute.xlu0 %2105
        %2109 = vrot.lane.b32.xlu0 %v2055, 112
        %v2110 = vpop.permute.xlu0 %2109
        %v2112 = vsel %vm646, %v1960, %v2058
        %v2113 = vsel %vm648, %v2112, %v2062
        %v2114 = vsel %vm650, %v2113, %v2066
        %v2115 = vsel %vm652, %v2114, %v2070
        %v2116 = vsel %vm654, %v2115, %v2074
        %v2117 = vsel %vm656, %v2116, %v2078
        %v2118 = vsel %vm658, %v2117, %v2082
        %v2119 = vsel %vm646, %v2028, %v2086
        %v2120 = vsel %vm648, %v2119, %v2090
        %v2121 = vsel %vm650, %v2120, %v2094
        %v2122 = vsel %vm652, %v2121, %v2098
        %v2123 = vsel %vm654, %v2122, %v2102
        %v2124 = vsel %vm656, %v2123, %v2106
        %v2125 = vsel %vm658, %v2124, %v2110
        %v2126 = vpack.c.bf16 %v2118, %v2118
        %v2127 = vpack.c.bf16 %v2125, %v2125
        %v2130 = vunpack.c.l.b16 %v2126
        %v2131 = vunpack.c.l.b16 %v2127
        %v2132 = vpack.c.b16 %v2131, %v2130
        %2134 = vst [vmem:[#allocation3 + $0x18] sm:$0x33] %v2132
        %2135 = vrot.lane.b32.xlu0 %v1894, 127
        %v2136 = vpop.permute.xlu0 %2135
        %2137 = vrot.lane.b32.xlu0 %v1896, 127
        %v2138 = vpop.permute.xlu0 %2137
        %2139 = vrot.lane.b32.xlu0 %v1899, 127
        %v2140 = vpop.permute.xlu0 %2139
        %2141 = vrot.lane.b32.xlu0 %v1901, 127
        %v2142 = vpop.permute.xlu0 %2141
        %2143 = vrot.lane.b32.xlu0 %v1904, 127
        %v2144 = vpop.permute.xlu0 %2143
        %2145 = vrot.lane.b32.xlu0 %v1906, 127
        %v2146 = vpop.permute.xlu0 %2145
        %2147 = vrot.lane.b32.xlu0 %v1909, 127
        %v2148 = vpop.permute.xlu0 %2147
        %2149 = vrot.lane.b32.xlu0 %v1911, 127
        %v2150 = vpop.permute.xlu0 %2149
        %v2159 = vcombine.low %v2136, %v2144
        %v2160 = vcombine.high %v2136, %v2144
        %v2162 = vunpack.c.l.s4 1983009808
        %v2163 = vunpack.c.0.s8 %v2162
        %v2164 = vlaneseq
        %v2165 = vshrl.u32 %v2164, 7
        %v2166 = vsub.s32 %v2163, %v2165
        %v2167 = vrot.slane %v2159, %v2166
        %v2169 = vunpack.c.l.s4 1983009808
        %v2170 = vunpack.c.0.s8 %v2169
        %v2171 = vlaneseq
        %v2172 = vshrl.u32 %v2171, 7
        %v2173 = vsub.s32 %v2170, %v2172
        %v2174 = vrot.slane %v2160, %v2173
        %v2175 = vcombine.low %v2140, %v2148
        %v2176 = vcombine.high %v2140, %v2148
        %v2178 = vunpack.c.l.s4 1983009808
        %v2179 = vunpack.c.0.s8 %v2178
        %v2180 = vlaneseq
        %v2181 = vshrl.u32 %v2180, 7
        %v2182 = vsub.s32 %v2179, %v2181
        %v2183 = vrot.slane %v2175, %v2182
        %v2185 = vunpack.c.l.s4 1983009808
        %v2186 = vunpack.c.0.s8 %v2185
        %v2187 = vlaneseq
        %v2188 = vshrl.u32 %v2187, 7
        %v2189 = vsub.s32 %v2186, %v2188
        %v2190 = vrot.slane %v2176, %v2189
        %v2191 = vcombine.low %v2167, %v2183
        %v2192 = vcombine.high %v2167, %v2183
        %v2194 = vunpack.c.l.s4 1934713408
        %v2195 = vunpack.c.0.s8 %v2194
        %v2196 = vlaneseq
        %v2197 = vshrl.u32 %v2196, 7
        %v2198 = vsub.s32 %v2195, %v2197
        %v2199 = vrot.slane %v2191, %v2198
        %v2201 = vunpack.c.l.s4 1934713408
        %v2202 = vunpack.c.0.s8 %v2201
        %v2203 = vlaneseq
        %v2204 = vshrl.u32 %v2203, 7
        %v2205 = vsub.s32 %v2202, %v2204
        %v2206 = vrot.slane %v2192, %v2205
        %v2207 = vcombine.low %v2174, %v2190
        %v2208 = vcombine.high %v2174, %v2190
        %v2210 = vunpack.c.l.s4 1934713408
        %v2211 = vunpack.c.0.s8 %v2210
        %v2212 = vlaneseq
        %v2213 = vshrl.u32 %v2212, 7
        %v2214 = vsub.s32 %v2211, %v2213
        %v2215 = vrot.slane %v2207, %v2214
        %v2217 = vunpack.c.l.s4 1934713408
        %v2218 = vunpack.c.0.s8 %v2217
        %v2219 = vlaneseq
        %v2220 = vshrl.u32 %v2219, 7
        %v2221 = vsub.s32 %v2218, %v2220
        %v2222 = vrot.slane %v2208, %v2221
        %v2223 = vcombine.high %v2199, 0.0
        %v2224 = vcombine.high %v2206, 0.0
        %v2225 = vcombine.high %v2215, 0.0
        %v2226 = vcombine.high %v2222, 0.0
        %v2227 = vcombine.low %v2138, %v2146
        %v2228 = vcombine.high %v2138, %v2146
        %v2230 = vunpack.c.l.s4 1983009808
        %v2231 = vunpack.c.0.s8 %v2230
        %v2232 = vlaneseq
        %v2233 = vshrl.u32 %v2232, 7
        %v2234 = vsub.s32 %v2231, %v2233
        %v2235 = vrot.slane %v2227, %v2234
        %v2237 = vunpack.c.l.s4 1983009808
        %v2238 = vunpack.c.0.s8 %v2237
        %v2239 = vlaneseq
        %v2240 = vshrl.u32 %v2239, 7
        %v2241 = vsub.s32 %v2238, %v2240
        %v2242 = vrot.slane %v2228, %v2241
        %v2243 = vcombine.low %v2142, %v2150
        %v2244 = vcombine.high %v2142, %v2150
        %v2246 = vunpack.c.l.s4 1983009808
        %v2247 = vunpack.c.0.s8 %v2246
        %v2248 = vlaneseq
        %v2249 = vshrl.u32 %v2248, 7
        %v2250 = vsub.s32 %v2247, %v2249
        %v2251 = vrot.slane %v2243, %v2250
        %v2253 = vunpack.c.l.s4 1983009808
        %v2254 = vunpack.c.0.s8 %v2253
        %v2255 = vlaneseq
        %v2256 = vshrl.u32 %v2255, 7
        %v2257 = vsub.s32 %v2254, %v2256
        %v2258 = vrot.slane %v2244, %v2257
        %v2259 = vcombine.low %v2235, %v2251
        %v2260 = vcombine.high %v2235, %v2251
        %v2262 = vunpack.c.l.s4 1934713408
        %v2263 = vunpack.c.0.s8 %v2262
        %v2264 = vlaneseq
        %v2265 = vshrl.u32 %v2264, 7
        %v2266 = vsub.s32 %v2263, %v2265
        %v2267 = vrot.slane %v2259, %v2266
        %v2269 = vunpack.c.l.s4 1934713408
        %v2270 = vunpack.c.0.s8 %v2269
        %v2271 = vlaneseq
        %v2272 = vshrl.u32 %v2271, 7
        %v2273 = vsub.s32 %v2270, %v2272
        %v2274 = vrot.slane %v2260, %v2273
        %v2275 = vcombine.low %v2242, %v2258
        %v2276 = vcombine.high %v2242, %v2258
        %v2278 = vunpack.c.l.s4 1934713408
        %v2279 = vunpack.c.0.s8 %v2278
        %v2280 = vlaneseq
        %v2281 = vshrl.u32 %v2280, 7
        %v2282 = vsub.s32 %v2279, %v2281
        %v2283 = vrot.slane %v2275, %v2282
        %v2285 = vunpack.c.l.s4 1934713408
        %v2286 = vunpack.c.0.s8 %v2285
        %v2287 = vlaneseq
        %v2288 = vshrl.u32 %v2287, 7
        %v2289 = vsub.s32 %v2286, %v2288
        %v2290 = vrot.slane %v2276, %v2289
        %v2291 = vcombine.high %v2267, 0.0
        %v2292 = vcombine.high %v2274, 0.0
        %v2293 = vcombine.high %v2283, 0.0
        %v2294 = vcombine.high %v2290, 0.0
        %2296 = vrot.lane.b32.xlu0 %v2223, 16
        %v2297 = vpop.permute.xlu0 %2296
        %2300 = vrot.lane.b32.xlu0 %v2206, 32
        %v2301 = vpop.permute.xlu0 %2300
        %2304 = vrot.lane.b32.xlu0 %v2224, 48
        %v2305 = vpop.permute.xlu0 %2304
        %2308 = vrot.lane.b32.xlu0 %v2215, 64
        %v2309 = vpop.permute.xlu0 %2308
        %2312 = vrot.lane.b32.xlu0 %v2225, 80
        %v2313 = vpop.permute.xlu0 %2312
        %2316 = vrot.lane.b32.xlu0 %v2222, 96
        %v2317 = vpop.permute.xlu0 %2316
        %2320 = vrot.lane.b32.xlu0 %v2226, 112
        %v2321 = vpop.permute.xlu0 %2320
        %2324 = vrot.lane.b32.xlu0 %v2291, 16
        %v2325 = vpop.permute.xlu0 %2324
        %2328 = vrot.lane.b32.xlu0 %v2274, 32
        %v2329 = vpop.permute.xlu0 %2328
        %2332 = vrot.lane.b32.xlu0 %v2292, 48
        %v2333 = vpop.permute.xlu0 %2332
        %2336 = vrot.lane.b32.xlu0 %v2283, 64
        %v2337 = vpop.permute.xlu0 %2336
        %2340 = vrot.lane.b32.xlu0 %v2293, 80
        %v2341 = vpop.permute.xlu0 %2340
        %2344 = vrot.lane.b32.xlu0 %v2290, 96
        %v2345 = vpop.permute.xlu0 %2344
        %2348 = vrot.lane.b32.xlu0 %v2294, 112
        %v2349 = vpop.permute.xlu0 %2348
        %v2351 = vsel %vm646, %v2199, %v2297
        %v2352 = vsel %vm648, %v2351, %v2301
        %v2353 = vsel %vm650, %v2352, %v2305
        %v2354 = vsel %vm652, %v2353, %v2309
        %v2355 = vsel %vm654, %v2354, %v2313
        %v2356 = vsel %vm656, %v2355, %v2317
        %v2357 = vsel %vm658, %v2356, %v2321
        %v2358 = vsel %vm646, %v2267, %v2325
        %v2359 = vsel %vm648, %v2358, %v2329
        %v2360 = vsel %vm650, %v2359, %v2333
        %v2361 = vsel %vm652, %v2360, %v2337
        %v2362 = vsel %vm654, %v2361, %v2341
        %v2363 = vsel %vm656, %v2362, %v2345
        %v2364 = vsel %vm658, %v2363, %v2349
        %v2365 = vpack.c.bf16 %v2357, %v2357
        %v2366 = vpack.c.bf16 %v2364, %v2364
        %v2369 = vunpack.c.l.b16 %v2365
        %v2370 = vunpack.c.l.b16 %v2366
        %v2371 = vpack.c.b16 %v2370, %v2369
        %v2372 = vrot.slane %v2371, 6
        %2374 = vst [vmem:[#allocation3 + $0x18] sm:$0xcc] %v2372
        %2375 = vrot.lane.b32.xlu0 %v1894, 126
        %v2376 = vpop.permute.xlu0 %2375
        %2377 = vrot.lane.b32.xlu0 %v1896, 126
        %v2378 = vpop.permute.xlu0 %2377
        %2379 = vrot.lane.b32.xlu0 %v1899, 126
        %v2380 = vpop.permute.xlu0 %2379
        %2381 = vrot.lane.b32.xlu0 %v1901, 126
        %v2382 = vpop.permute.xlu0 %2381
        %2383 = vrot.lane.b32.xlu0 %v1904, 126
        %v2384 = vpop.permute.xlu0 %2383
        %2385 = vrot.lane.b32.xlu0 %v1906, 126
        %v2386 = vpop.permute.xlu0 %2385
        %2387 = vrot.lane.b32.xlu0 %v1909, 126
        %v2388 = vpop.permute.xlu0 %2387
        %2389 = vrot.lane.b32.xlu0 %v1911, 126
        %v2390 = vpop.permute.xlu0 %2389
        %v2399 = vcombine.low %v2376, %v2384
        %v2400 = vcombine.high %v2376, %v2384
        %v2402 = vunpack.c.l.s4 1983009808
        %v2403 = vunpack.c.0.s8 %v2402
        %v2404 = vlaneseq
        %v2405 = vshrl.u32 %v2404, 7
        %v2406 = vsub.s32 %v2403, %v2405
        %v2407 = vrot.slane %v2399, %v2406
        %v2409 = vunpack.c.l.s4 1983009808
        %v2410 = vunpack.c.0.s8 %v2409
        %v2411 = vlaneseq
        %v2412 = vshrl.u32 %v2411, 7
        %v2413 = vsub.s32 %v2410, %v2412
        %v2414 = vrot.slane %v2400, %v2413
        %v2415 = vcombine.low %v2380, %v2388
        %v2416 = vcombine.high %v2380, %v2388
        %v2418 = vunpack.c.l.s4 1983009808
        %v2419 = vunpack.c.0.s8 %v2418
        %v2420 = vlaneseq
        %v2421 = vshrl.u32 %v2420, 7
        %v2422 = vsub.s32 %v2419, %v2421
        %v2423 = vrot.slane %v2415, %v2422
        %v2425 = vunpack.c.l.s4 1983009808
        %v2426 = vunpack.c.0.s8 %v2425
        %v2427 = vlaneseq
        %v2428 = vshrl.u32 %v2427, 7
        %v2429 = vsub.s32 %v2426, %v2428
        %v2430 = vrot.slane %v2416, %v2429
        %v2431 = vcombine.low %v2407, %v2423
        %v2432 = vcombine.high %v2407, %v2423
        %v2434 = vunpack.c.l.s4 1934713408
        %v2435 = vunpack.c.0.s8 %v2434
        %v2436 = vlaneseq
        %v2437 = vshrl.u32 %v2436, 7
        %v2438 = vsub.s32 %v2435, %v2437
        %v2439 = vrot.slane %v2431, %v2438
        %v2441 = vunpack.c.l.s4 1934713408
        %v2442 = vunpack.c.0.s8 %v2441
        %v2443 = vlaneseq
        %v2444 = vshrl.u32 %v2443, 7
        %v2445 = vsub.s32 %v2442, %v2444
        %v2446 = vrot.slane %v2432, %v2445
        %v2447 = vcombine.low %v2414, %v2430
        %v2448 = vcombine.high %v2414, %v2430
        %v2450 = vunpack.c.l.s4 1934713408
        %v2451 = vunpack.c.0.s8 %v2450
        %v2452 = vlaneseq
        %v2453 = vshrl.u32 %v2452, 7
        %v2454 = vsub.s32 %v2451, %v2453
        %v2455 = vrot.slane %v2447, %v2454
        %v2457 = vunpack.c.l.s4 1934713408
        %v2458 = vunpack.c.0.s8 %v2457
        %v2459 = vlaneseq
        %v2460 = vshrl.u32 %v2459, 7
        %v2461 = vsub.s32 %v2458, %v2460
        %v2462 = vrot.slane %v2448, %v2461
        %v2463 = vcombine.high %v2439, 0.0
        %v2464 = vcombine.high %v2446, 0.0
        %v2465 = vcombine.high %v2455, 0.0
        %v2466 = vcombine.high %v2462, 0.0
        %v2467 = vcombine.low %v2378, %v2386
        %v2468 = vcombine.high %v2378, %v2386
        %v2470 = vunpack.c.l.s4 1983009808
        %v2471 = vunpack.c.0.s8 %v2470
        %v2472 = vlaneseq
        %v2473 = vshrl.u32 %v2472, 7
        %v2474 = vsub.s32 %v2471, %v2473
        %v2475 = vrot.slane %v2467, %v2474
        %v2477 = vunpack.c.l.s4 1983009808
        %v2478 = vunpack.c.0.s8 %v2477
        %v2479 = vlaneseq
        %v2480 = vshrl.u32 %v2479, 7
        %v2481 = vsub.s32 %v2478, %v2480
        %v2482 = vrot.slane %v2468, %v2481
        %v2483 = vcombine.low %v2382, %v2390
        %v2484 = vcombine.high %v2382, %v2390
        %v2486 = vunpack.c.l.s4 1983009808
        %v2487 = vunpack.c.0.s8 %v2486
        %v2488 = vlaneseq
        %v2489 = vshrl.u32 %v2488, 7
        %v2490 = vsub.s32 %v2487, %v2489
        %v2491 = vrot.slane %v2483, %v2490
        %v2493 = vunpack.c.l.s4 1983009808
        %v2494 = vunpack.c.0.s8 %v2493
        %v2495 = vlaneseq
        %v2496 = vshrl.u32 %v2495, 7
        %v2497 = vsub.s32 %v2494, %v2496
        %v2498 = vrot.slane %v2484, %v2497
        %v2499 = vcombine.low %v2475, %v2491
        %v2500 = vcombine.high %v2475, %v2491
        %v2502 = vunpack.c.l.s4 1934713408
        %v2503 = vunpack.c.0.s8 %v2502
        %v2504 = vlaneseq
        %v2505 = vshrl.u32 %v2504, 7
        %v2506 = vsub.s32 %v2503, %v2505
        %v2507 = vrot.slane %v2499, %v2506
        %v2509 = vunpack.c.l.s4 1934713408
        %v2510 = vunpack.c.0.s8 %v2509
        %v2511 = vlaneseq
        %v2512 = vshrl.u32 %v2511, 7
        %v2513 = vsub.s32 %v2510, %v2512
        %v2514 = vrot.slane %v2500, %v2513
        %v2515 = vcombine.low %v2482, %v2498
        %v2516 = vcombine.high %v2482, %v2498
        %v2518 = vunpack.c.l.s4 1934713408
        %v2519 = vunpack.c.0.s8 %v2518
        %v2520 = vlaneseq
        %v2521 = vshrl.u32 %v2520, 7
        %v2522 = vsub.s32 %v2519, %v2521
        %v2523 = vrot.slane %v2515, %v2522
        %v2525 = vunpack.c.l.s4 1934713408
        %v2526 = vunpack.c.0.s8 %v2525
        %v2527 = vlaneseq
        %v2528 = vshrl.u32 %v2527, 7
        %v2529 = vsub.s32 %v2526, %v2528
        %v2530 = vrot.slane %v2516, %v2529
        %v2531 = vcombine.high %v2507, 0.0
        %v2532 = vcombine.high %v2514, 0.0
        %v2533 = vcombine.high %v2523, 0.0
        %v2534 = vcombine.high %v2530, 0.0
        %2536 = vrot.lane.b32.xlu0 %v2463, 16
        %v2537 = vpop.permute.xlu0 %2536
        %2540 = vrot.lane.b32.xlu0 %v2446, 32
        %v2541 = vpop.permute.xlu0 %2540
        %2544 = vrot.lane.b32.xlu0 %v2464, 48
        %v2545 = vpop.permute.xlu0 %2544
        %2548 = vrot.lane.b32.xlu0 %v2455, 64
        %v2549 = vpop.permute.xlu0 %2548
        %2552 = vrot.lane.b32.xlu0 %v2465, 80
        %v2553 = vpop.permute.xlu0 %2552
        %2556 = vrot.lane.b32.xlu0 %v2462, 96
        %v2557 = vpop.permute.xlu0 %2556
        %2560 = vrot.lane.b32.xlu0 %v2466, 112
        %v2561 = vpop.permute.xlu0 %2560
        %2564 = vrot.lane.b32.xlu0 %v2531, 16
        %v2565 = vpop.permute.xlu0 %2564
        %2568 = vrot.lane.b32.xlu0 %v2514, 32
        %v2569 = vpop.permute.xlu0 %2568
        %2572 = vrot.lane.b32.xlu0 %v2532, 48
        %v2573 = vpop.permute.xlu0 %2572
        %2576 = vrot.lane.b32.xlu0 %v2523, 64
        %v2577 = vpop.permute.xlu0 %2576
        %2580 = vrot.lane.b32.xlu0 %v2533, 80
        %v2581 = vpop.permute.xlu0 %2580
        %2584 = vrot.lane.b32.xlu0 %v2530, 96
        %v2585 = vpop.permute.xlu0 %2584
        %2588 = vrot.lane.b32.xlu0 %v2534, 112
        %v2589 = vpop.permute.xlu0 %2588
        %v2591 = vsel %vm646, %v2439, %v2537
        %v2592 = vsel %vm648, %v2591, %v2541
        %v2593 = vsel %vm650, %v2592, %v2545
        %v2594 = vsel %vm652, %v2593, %v2549
        %v2595 = vsel %vm654, %v2594, %v2553
        %v2596 = vsel %vm656, %v2595, %v2557
        %v2597 = vsel %vm658, %v2596, %v2561
        %v2598 = vsel %vm646, %v2507, %v2565
        %v2599 = vsel %vm648, %v2598, %v2569
        %v2600 = vsel %vm650, %v2599, %v2573
        %v2601 = vsel %vm652, %v2600, %v2577
        %v2602 = vsel %vm654, %v2601, %v2581
        %v2603 = vsel %vm656, %v2602, %v2585
        %v2604 = vsel %vm658, %v2603, %v2589
        %v2605 = vpack.c.bf16 %v2597, %v2597
        %v2606 = vpack.c.bf16 %v2604, %v2604
        %v2609 = vunpack.c.l.b16 %v2605
        %v2610 = vunpack.c.l.b16 %v2606
        %v2611 = vpack.c.b16 %v2610, %v2609
        %2613 = vst [vmem:[#allocation3 + $0x20] sm:$0x33] %v2611
        %v2614 = vld [vmem:[%s1] sm:$0xf]
        %v2615 = vld [vmem:[#allocation3] sm:$0xff]
        %v2616 = vld [vmem:[#allocation3 + $0x8] sm:$0xff]
        %v2617 = vld [vmem:[#allocation3 + $0x10] sm:$0xff]
        %v2618 = vld [vmem:[#allocation3 + $0x18] sm:$0xff]
        %v2619 = vld [vmem:[#allocation3 + $0x20] sm:$0x33]
        %v2625 = vunpack.c.l.b16 %v2615
        %v2626 = vunpack.c.h.b16 %v2615
        %v2627 = vunpack.c.l.b16 %v2616
        %v2628 = vunpack.c.h.b16 %v2616
        %v2629 = vunpack.c.l.b16 %v2617
        %v2630 = vunpack.c.h.b16 %v2617
        %v2631 = vunpack.c.l.b16 %v2618
        %v2632 = vunpack.c.h.b16 %v2618
        %v2633 = vunpack.c.l.b16 %v2619
        %v2634 = vunpack.c.h.b16 %v2619
        %v2635 = vpack.c.b16 %v2627, %v2625
        %v2636 = vpack.c.b16 %v2628, %v2626
        %v2637 = vpack.c.b16 %v2631, %v2629
        %v2638 = vpack.c.b16 %v2632, %v2630
        %v2639 = vpack.c.b16 %v2633, %v2633
        %v2640 = vpack.c.b16 %v2634, %v2634
        %vm2645 = vcmask 293888
        %v2647 = vsel %vm2645, %v2614, 0
        %vm2649 = vcmask 1041408
        %v2651 = vsel %vm2649, %v2639, 0
        %v2654 = vsel %vm2649, %v2640, 0
        %2656 = vmatprep.subr.bf16.mxu0 0
        %2657 = vmatpush1.bf16.msra.mxu0 0
        %2658 = vmatprep.subr.bf16.mxu0 0
        %2659 = vmatpush1.bf16.msra.mxu0 0
        %2660 = vmatprep.subr.bf16.mxu0 0
        %2661 = vmatpush1.bf16.msra.mxu0 0
        %2662 = vmatprep.subr.bf16.mxu0 0
        %2663 = vmatpush1.bf16.msra.mxu0 0
        %2664 = vmatprep.subr.bf16.mxu0 0
        %2665 = vmatpush1.bf16.msra.mxu0 0
        %2666 = vmatprep.subr.bf16.mxu0 %v2654
        %2667 = vmatpush1.bf16.msra.mxu0 %v2651
        %2668 = vmatprep.subr.bf16.mxu0 %v2638
        %2669 = vmatpush1.bf16.msra.mxu0 %v2637
        %2670 = vmatprep.subr.bf16.mxu0 %v2636
        %2671 = vmatpush1.bf16.msra.mxu0 %v2635
        %2672 = vmatprep.subr.bf16.mxu0 0
        %2673 = vmatpush2.bf16.msra.mxu0 0
        %2674 = vmatprep.subr.bf16.mxu0 0
        %2675 = vmatpush2.bf16.msra.mxu0 0
        %2676 = vmatprep.subr.bf16.mxu0 0
        %2677 = vmatpush2.bf16.msra.mxu0 0
        %2678 = vmatprep.subr.bf16.mxu0 0
        %2679 = vmatpush2.bf16.msra.mxu0 0
        %2680 = vmatprep.subr.bf16.mxu0 0
        %2681 = vmatpush2.bf16.msra.mxu0 0
        %2682 = vmatprep.subr.bf16.mxu0 0
        %2683 = vmatpush2.bf16.msra.mxu0 0
        %2684 = vmatprep.subr.bf16.mxu0 0
        %2685 = vmatpush2.bf16.msra.mxu0 0
        %2686 = vmatprep.subr.bf16.mxu0 0
        %2687 = vmatpush2.bf16.msra.mxu0 0
        %2688 = vmatprep.mubr.bf16.mxu0 0
        %2689 = vmatmul.mubr.bf16.gmra.mxu0 %v2647
        %v2690 = vpop.f32.mrf.mxu0
        %v2691 = vadd.f32 0.0, %v2690
        %v2692 = vpop.f32.mrf.mxu0
        %v2693 = vadd.f32 0.0, %v2692
        %v2694 = vpop.f32.mrf.mxu0
        %v2695 = vpop.f32.mrf.mxu0
        %2696 = vdwg.mxu0
        %v2697 = vld [vmem:[%s4] sm:$0xff]
        %2699 = vset.pattern.permute.xlu0 0
        %2700 = vperm.xlu0 %2699, %v2697
        %v2701 = vpop.permute.xlu0 %2700
        %v2703 = vmul.f32 %v2691, %v2701
        %v2704 = vmul.f32 %v2693, %v2701
        %v2705 = vld [vmem:[%s5] sm:$0xff]
        %2707 = vset.pattern.permute.xlu0 0
        %2708 = vperm.xlu0 %2707, %v2705
        %v2709 = vpop.permute.xlu0 %2708
        %v2711 = vadd.f32 %v2703, %v2709
        %v2712 = vadd.f32 %v2704, %v2709
        %v2713 = vmax.f32 %v2711, 0.0
        %v2714 = vmax.f32 %v2712, 0.0
        %2715 = vst.msk [vmem:[#allocation4] sm:$0xff] %vm379, 0.0
        %2716 = vst.msk [vmem:[#allocation4 + $0x8] sm:$0xff] %vm379, 0.0
        %2717 = vst.msk [vmem:[#allocation4 + $0x10] sm:$0x3] %vm382, 0.0
        %2718 = vst.msk [vmem:[#allocation4 + $0x18] sm:$0xff] %vm379, 0.0
        %2719 = vst.msk [vmem:[#allocation4 + $0x20] sm:$0xff] %vm379, 0.0
        %2720 = vst.msk [vmem:[#allocation4 + $0x28] sm:$0x3] %vm382, 0.0
        %2721 = vst.msk [vmem:[#allocation4 + $0x30] sm:$0xff] %vm379, 0.0
        %2722 = vst.msk [vmem:[#allocation4 + $0x38] sm:$0xff] %vm379, 0.0
        %2723 = vst.msk [vmem:[#allocation4 + $0x40] sm:$0x3] %vm382, 0.0
        %2724 = vst.msk [vmem:[#allocation4 + $0x48] sm:$0xff] %vm379, 0.0
        %2725 = vst.msk [vmem:[#allocation4 + $0x50] sm:$0xff] %vm379, 0.0
        %2726 = vst.msk [vmem:[#allocation4 + $0x58] sm:$0x3] %vm382, 0.0
        %2727 = vst.msk [vmem:[#allocation4 + $0x60] sm:$0xff] %vm379, 0.0
        %2728 = vst.msk [vmem:[#allocation4 + $0x68] sm:$0xff] %vm379, 0.0
        %2729 = vst.msk [vmem:[#allocation4 + $0x70] sm:$0x3] %vm382, 0.0
        %2730 = vst.msk [vmem:[#allocation4 + $0x78] sm:$0xff] %vm379, 0.0
        %2731 = vst.msk [vmem:[#allocation4 + $0x80] sm:$0xff] %vm379, 0.0
        %2732 = vst.msk [vmem:[#allocation4 + $0x88] sm:$0x3] %vm382, 0.0
        %2733 = vst.msk [vmem:[#allocation4 + $0x90] sm:$0xff] %vm379, 0.0
        %2734 = vst.msk [vmem:[#allocation4 + $0x98] sm:$0xff] %vm379, 0.0
        %2735 = vst.msk [vmem:[#allocation4 + $0xa0] sm:$0x3] %vm382, 0.0
        %2736 = vst.msk [vmem:[#allocation4 + $0xa8] sm:$0xff] %vm379, 0.0
        %2737 = vst.msk [vmem:[#allocation4 + $0xb0] sm:$0xff] %vm379, 0.0
        %2738 = vst.msk [vmem:[#allocation4 + $0xb8] sm:$0x3] %vm382, 0.0
        %2740 = vrot.lane.b32.xlu0 %v2713, 112
        %v2741 = vpop.permute.xlu0 %2740
        %2743 = vrot.lane.b32.xlu0 %v2713, 96
        %v2744 = vpop.permute.xlu0 %2743
        %2746 = vrot.lane.b32.xlu0 %v2713, 80
        %v2747 = vpop.permute.xlu0 %2746
        %2749 = vrot.lane.b32.xlu0 %v2713, 64
        %v2750 = vpop.permute.xlu0 %2749
        %2752 = vrot.lane.b32.xlu0 %v2713, 48
        %v2753 = vpop.permute.xlu0 %2752
        %2755 = vrot.lane.b32.xlu0 %v2713, 32
        %v2756 = vpop.permute.xlu0 %2755
        %2758 = vrot.lane.b32.xlu0 %v2713, 16
        %v2759 = vpop.permute.xlu0 %2758
        %2762 = vrot.lane.b32.xlu0 %v2714, 112
        %v2763 = vpop.permute.xlu0 %2762
        %2765 = vrot.lane.b32.xlu0 %v2714, 96
        %v2766 = vpop.permute.xlu0 %2765
        %2768 = vrot.lane.b32.xlu0 %v2714, 80
        %v2769 = vpop.permute.xlu0 %2768
        %2771 = vrot.lane.b32.xlu0 %v2714, 64
        %v2772 = vpop.permute.xlu0 %2771
        %2774 = vrot.lane.b32.xlu0 %v2714, 48
        %v2775 = vpop.permute.xlu0 %2774
        %2777 = vrot.lane.b32.xlu0 %v2714, 32
        %v2778 = vpop.permute.xlu0 %2777
        %2780 = vrot.lane.b32.xlu0 %v2714, 16
        %v2781 = vpop.permute.xlu0 %2780
        %v2783 = vcombine.low %v2713, %v2744
        %v2784 = vcombine.high %v2713, %v2744
        %v2786 = vunpack.c.l.s4 1983009808
        %v2787 = vunpack.c.0.s8 %v2786
        %v2788 = vlaneseq
        %v2789 = vshrl.u32 %v2788, 7
        %v2790 = vsub.s32 %v2787, %v2789
        %v2791 = vrot.slane %v2783, %v2790
        %v2793 = vunpack.c.l.s4 1983009808
        %v2794 = vunpack.c.0.s8 %v2793
        %v2795 = vlaneseq
        %v2796 = vshrl.u32 %v2795, 7
        %v2797 = vsub.s32 %v2794, %v2796
        %v2798 = vrot.slane %v2784, %v2797
        %v2799 = vcombine.low %v2741, %v2747
        %v2800 = vcombine.high %v2741, %v2747
        %v2802 = vunpack.c.l.s4 1983009808
        %v2803 = vunpack.c.0.s8 %v2802
        %v2804 = vlaneseq
        %v2805 = vshrl.u32 %v2804, 7
        %v2806 = vsub.s32 %v2803, %v2805
        %v2807 = vrot.slane %v2799, %v2806
        %v2809 = vunpack.c.l.s4 1983009808
        %v2810 = vunpack.c.0.s8 %v2809
        %v2811 = vlaneseq
        %v2812 = vshrl.u32 %v2811, 7
        %v2813 = vsub.s32 %v2810, %v2812
        %v2814 = vrot.slane %v2800, %v2813
        %v2815 = vcombine.low %v2750, %v2756
        %v2816 = vcombine.high %v2750, %v2756
        %v2818 = vunpack.c.l.s4 1983009808
        %v2819 = vunpack.c.0.s8 %v2818
        %v2820 = vlaneseq
        %v2821 = vshrl.u32 %v2820, 7
        %v2822 = vsub.s32 %v2819, %v2821
        %v2823 = vrot.slane %v2815, %v2822
        %v2825 = vunpack.c.l.s4 1983009808
        %v2826 = vunpack.c.0.s8 %v2825
        %v2827 = vlaneseq
        %v2828 = vshrl.u32 %v2827, 7
        %v2829 = vsub.s32 %v2826, %v2828
        %v2830 = vrot.slane %v2816, %v2829
        %v2831 = vcombine.low %v2753, %v2759
        %v2832 = vcombine.high %v2753, %v2759
        %v2834 = vunpack.c.l.s4 1983009808
        %v2835 = vunpack.c.0.s8 %v2834
        %v2836 = vlaneseq
        %v2837 = vshrl.u32 %v2836, 7
        %v2838 = vsub.s32 %v2835, %v2837
        %v2839 = vrot.slane %v2831, %v2838
        %v2841 = vunpack.c.l.s4 1983009808
        %v2842 = vunpack.c.0.s8 %v2841
        %v2843 = vlaneseq
        %v2844 = vshrl.u32 %v2843, 7
        %v2845 = vsub.s32 %v2842, %v2844
        %v2846 = vrot.slane %v2832, %v2845
        %v2847 = vcombine.low %v2791, %v2807
        %v2848 = vcombine.high %v2791, %v2807
        %v2850 = vunpack.c.l.s4 1934713408
        %v2851 = vunpack.c.0.s8 %v2850
        %v2852 = vlaneseq
        %v2853 = vshrl.u32 %v2852, 7
        %v2854 = vsub.s32 %v2851, %v2853
        %v2855 = vrot.slane %v2847, %v2854
        %v2857 = vunpack.c.l.s4 1934713408
        %v2858 = vunpack.c.0.s8 %v2857
        %v2859 = vlaneseq
        %v2860 = vshrl.u32 %v2859, 7
        %v2861 = vsub.s32 %v2858, %v2860
        %v2862 = vrot.slane %v2848, %v2861
        %v2863 = vcombine.low %v2798, %v2814
        %v2864 = vcombine.high %v2798, %v2814
        %v2866 = vunpack.c.l.s4 1934713408
        %v2867 = vunpack.c.0.s8 %v2866
        %v2868 = vlaneseq
        %v2869 = vshrl.u32 %v2868, 7
        %v2870 = vsub.s32 %v2867, %v2869
        %v2871 = vrot.slane %v2863, %v2870
        %v2873 = vunpack.c.l.s4 1934713408
        %v2874 = vunpack.c.0.s8 %v2873
        %v2875 = vlaneseq
        %v2876 = vshrl.u32 %v2875, 7
        %v2877 = vsub.s32 %v2874, %v2876
        %v2878 = vrot.slane %v2864, %v2877
        %v2879 = vcombine.low %v2823, %v2839
        %v2880 = vcombine.high %v2823, %v2839
        %v2882 = vunpack.c.l.s4 1934713408
        %v2883 = vunpack.c.0.s8 %v2882
        %v2884 = vlaneseq
        %v2885 = vshrl.u32 %v2884, 7
        %v2886 = vsub.s32 %v2883, %v2885
        %v2887 = vrot.slane %v2879, %v2886
        %v2889 = vunpack.c.l.s4 1934713408
        %v2890 = vunpack.c.0.s8 %v2889
        %v2891 = vlaneseq
        %v2892 = vshrl.u32 %v2891, 7
        %v2893 = vsub.s32 %v2890, %v2892
        %v2894 = vrot.slane %v2880, %v2893
        %v2895 = vcombine.low %v2830, %v2846
        %v2896 = vcombine.high %v2830, %v2846
        %v2898 = vunpack.c.l.s4 1934713408
        %v2899 = vunpack.c.0.s8 %v2898
        %v2900 = vlaneseq
        %v2901 = vshrl.u32 %v2900, 7
        %v2902 = vsub.s32 %v2899, %v2901
        %v2903 = vrot.slane %v2895, %v2902
        %v2905 = vunpack.c.l.s4 1934713408
        %v2906 = vunpack.c.0.s8 %v2905
        %v2907 = vlaneseq
        %v2908 = vshrl.u32 %v2907, 7
        %v2909 = vsub.s32 %v2906, %v2908
        %v2910 = vrot.slane %v2896, %v2909
        %v2911 = vcombine.low %v2855, %v2887
        %v2912 = vcombine.high %v2855, %v2887
        %v2913 = vcombine.low %v2862, %v2894
        %v2914 = vcombine.high %v2862, %v2894
        %v2915 = vcombine.low %v2871, %v2903
        %v2916 = vcombine.high %v2871, %v2903
        %v2917 = vcombine.low %v2878, %v2910
        %v2918 = vcombine.high %v2878, %v2910
        %v2919 = vcombine.low %v2714, %v2766
        %v2920 = vcombine.high %v2714, %v2766
        %v2922 = vunpack.c.l.s4 1983009808
        %v2923 = vunpack.c.0.s8 %v2922
        %v2924 = vlaneseq
        %v2925 = vshrl.u32 %v2924, 7
        %v2926 = vsub.s32 %v2923, %v2925
        %v2927 = vrot.slane %v2919, %v2926
        %v2929 = vunpack.c.l.s4 1983009808
        %v2930 = vunpack.c.0.s8 %v2929
        %v2931 = vlaneseq
        %v2932 = vshrl.u32 %v2931, 7
        %v2933 = vsub.s32 %v2930, %v2932
        %v2934 = vrot.slane %v2920, %v2933
        %v2935 = vcombine.low %v2763, %v2769
        %v2936 = vcombine.high %v2763, %v2769
        %v2938 = vunpack.c.l.s4 1983009808
        %v2939 = vunpack.c.0.s8 %v2938
        %v2940 = vlaneseq
        %v2941 = vshrl.u32 %v2940, 7
        %v2942 = vsub.s32 %v2939, %v2941
        %v2943 = vrot.slane %v2935, %v2942
        %v2945 = vunpack.c.l.s4 1983009808
        %v2946 = vunpack.c.0.s8 %v2945
        %v2947 = vlaneseq
        %v2948 = vshrl.u32 %v2947, 7
        %v2949 = vsub.s32 %v2946, %v2948
        %v2950 = vrot.slane %v2936, %v2949
        %v2951 = vcombine.low %v2772, %v2778
        %v2952 = vcombine.high %v2772, %v2778
        %v2954 = vunpack.c.l.s4 1983009808
        %v2955 = vunpack.c.0.s8 %v2954
        %v2956 = vlaneseq
        %v2957 = vshrl.u32 %v2956, 7
        %v2958 = vsub.s32 %v2955, %v2957
        %v2959 = vrot.slane %v2951, %v2958
        %v2961 = vunpack.c.l.s4 1983009808
        %v2962 = vunpack.c.0.s8 %v2961
        %v2963 = vlaneseq
        %v2964 = vshrl.u32 %v2963, 7
        %v2965 = vsub.s32 %v2962, %v2964
        %v2966 = vrot.slane %v2952, %v2965
        %v2967 = vcombine.low %v2775, %v2781
        %v2968 = vcombine.high %v2775, %v2781
        %v2970 = vunpack.c.l.s4 1983009808
        %v2971 = vunpack.c.0.s8 %v2970
        %v2972 = vlaneseq
        %v2973 = vshrl.u32 %v2972, 7
        %v2974 = vsub.s32 %v2971, %v2973
        %v2975 = vrot.slane %v2967, %v2974
        %v2977 = vunpack.c.l.s4 1983009808
        %v2978 = vunpack.c.0.s8 %v2977
        %v2979 = vlaneseq
        %v2980 = vshrl.u32 %v2979, 7
        %v2981 = vsub.s32 %v2978, %v2980
        %v2982 = vrot.slane %v2968, %v2981
        %v2983 = vcombine.low %v2927, %v2943
        %v2984 = vcombine.high %v2927, %v2943
        %v2986 = vunpack.c.l.s4 1934713408
        %v2987 = vunpack.c.0.s8 %v2986
        %v2988 = vlaneseq
        %v2989 = vshrl.u32 %v2988, 7
        %v2990 = vsub.s32 %v2987, %v2989
        %v2991 = vrot.slane %v2983, %v2990
        %v2993 = vunpack.c.l.s4 1934713408
        %v2994 = vunpack.c.0.s8 %v2993
        %v2995 = vlaneseq
        %v2996 = vshrl.u32 %v2995, 7
        %v2997 = vsub.s32 %v2994, %v2996
        %v2998 = vrot.slane %v2984, %v2997
        %v2999 = vcombine.low %v2934, %v2950
        %v3000 = vcombine.high %v2934, %v2950
        %v3002 = vunpack.c.l.s4 1934713408
        %v3003 = vunpack.c.0.s8 %v3002
        %v3004 = vlaneseq
        %v3005 = vshrl.u32 %v3004, 7
        %v3006 = vsub.s32 %v3003, %v3005
        %v3007 = vrot.slane %v2999, %v3006
        %v3009 = vunpack.c.l.s4 1934713408
        %v3010 = vunpack.c.0.s8 %v3009
        %v3011 = vlaneseq
        %v3012 = vshrl.u32 %v3011, 7
        %v3013 = vsub.s32 %v3010, %v3012
        %v3014 = vrot.slane %v3000, %v3013
        %v3015 = vcombine.low %v2959, %v2975
        %v3016 = vcombine.high %v2959, %v2975
        %v3018 = vunpack.c.l.s4 1934713408
        %v3019 = vunpack.c.0.s8 %v3018
        %v3020 = vlaneseq
        %v3021 = vshrl.u32 %v3020, 7
        %v3022 = vsub.s32 %v3019, %v3021
        %v3023 = vrot.slane %v3015, %v3022
        %v3025 = vunpack.c.l.s4 1934713408
        %v3026 = vunpack.c.0.s8 %v3025
        %v3027 = vlaneseq
        %v3028 = vshrl.u32 %v3027, 7
        %v3029 = vsub.s32 %v3026, %v3028
        %v3030 = vrot.slane %v3016, %v3029
        %v3031 = vcombine.low %v2966, %v2982
        %v3032 = vcombine.high %v2966, %v2982
        %v3034 = vunpack.c.l.s4 1934713408
        %v3035 = vunpack.c.0.s8 %v3034
        %v3036 = vlaneseq
        %v3037 = vshrl.u32 %v3036, 7
        %v3038 = vsub.s32 %v3035, %v3037
        %v3039 = vrot.slane %v3031, %v3038
        %v3041 = vunpack.c.l.s4 1934713408
        %v3042 = vunpack.c.0.s8 %v3041
        %v3043 = vlaneseq
        %v3044 = vshrl.u32 %v3043, 7
        %v3045 = vsub.s32 %v3042, %v3044
        %v3046 = vrot.slane %v3032, %v3045
        %v3047 = vcombine.low %v2991, %v3023
        %v3048 = vcombine.high %v2991, %v3023
        %v3049 = vcombine.low %v2998, %v3030
        %v3050 = vcombine.high %v2998, %v3030
        %v3051 = vcombine.low %v3007, %v3039
        %v3052 = vcombine.high %v3007, %v3039
        %v3053 = vcombine.low %v3014, %v3046
        %v3054 = vcombine.high %v3014, %v3046
        %3071 = vrot.lane.b32.xlu0 %v2911, 1
        %v3072 = vpop.permute.xlu0 %3071
        %3073 = vrot.lane.b32.xlu0 %v3047, 1
        %v3074 = vpop.permute.xlu0 %3073
        %3075 = vrot.lane.b32.xlu0 %v2912, 1
        %v3076 = vpop.permute.xlu0 %3075
        %3077 = vrot.lane.b32.xlu0 %v3048, 1
        %v3078 = vpop.permute.xlu0 %3077
        %3079 = vrot.lane.b32.xlu0 %v2913, 1
        %v3080 = vpop.permute.xlu0 %3079
        %3081 = vrot.lane.b32.xlu0 %v3049, 1
        %v3082 = vpop.permute.xlu0 %3081
        %3083 = vrot.lane.b32.xlu0 %v2914, 1
        %v3084 = vpop.permute.xlu0 %3083
        %3085 = vrot.lane.b32.xlu0 %v3050, 1
        %v3086 = vpop.permute.xlu0 %3085
        %3087 = vrot.lane.b32.xlu0 %v2915, 1
        %v3088 = vpop.permute.xlu0 %3087
        %3089 = vrot.lane.b32.xlu0 %v3051, 1
        %v3090 = vpop.permute.xlu0 %3089
        %3091 = vrot.lane.b32.xlu0 %v2916, 1
        %v3092 = vpop.permute.xlu0 %3091
        %3093 = vrot.lane.b32.xlu0 %v3052, 1
        %v3094 = vpop.permute.xlu0 %3093
        %3095 = vrot.lane.b32.xlu0 %v2917, 1
        %v3096 = vpop.permute.xlu0 %3095
        %3097 = vrot.lane.b32.xlu0 %v3053, 1
        %v3098 = vpop.permute.xlu0 %3097
        %3099 = vrot.lane.b32.xlu0 %v2918, 1
        %v3100 = vpop.permute.xlu0 %3099
        %3101 = vrot.lane.b32.xlu0 %v3054, 1
        %v3102 = vpop.permute.xlu0 %3101
        %3119 = vst.msk [vmem:[#allocation4 + $0x1] sm:$0xff] %vm433, %v3072
        %3120 = vst.msk [vmem:[#allocation4 + $0x9] sm:$0xff] %vm433, %v3074
        %3121 = vst.msk [vmem:[#allocation4 + $0x19] sm:$0xff] %vm433, %v3076
        %3122 = vst.msk [vmem:[#allocation4 + $0x21] sm:$0xff] %vm433, %v3078
        %3123 = vst.msk [vmem:[#allocation4 + $0x31] sm:$0xff] %vm433, %v3080
        %3124 = vst.msk [vmem:[#allocation4 + $0x39] sm:$0xff] %vm433, %v3082
        %3125 = vst.msk [vmem:[#allocation4 + $0x49] sm:$0xff] %vm433, %v3084
        %3126 = vst.msk [vmem:[#allocation4 + $0x51] sm:$0xff] %vm433, %v3086
        %3127 = vst.msk [vmem:[#allocation4 + $0x61] sm:$0xff] %vm433, %v3088
        %3128 = vst.msk [vmem:[#allocation4 + $0x69] sm:$0xff] %vm433, %v3090
        %3129 = vst.msk [vmem:[#allocation4 + $0x79] sm:$0xff] %vm433, %v3092
        %3130 = vst.msk [vmem:[#allocation4 + $0x81] sm:$0xff] %vm433, %v3094
        %3131 = vst.msk [vmem:[#allocation4 + $0x91] sm:$0xff] %vm433, %v3096
        %3132 = vst.msk [vmem:[#allocation4 + $0x99] sm:$0xff] %vm433, %v3098
        %3133 = vst.msk [vmem:[#allocation4 + $0xa9] sm:$0xff] %vm433, %v3100
        %3134 = vst.msk [vmem:[#allocation4 + $0xb1] sm:$0xff] %vm433, %v3102
        %v3135 = vld [vmem:[#allocation4] sm:$0xff]
        %v3136 = vld [vmem:[#allocation4 + $0x8] sm:$0xff]
        %v3137 = vld [vmem:[#allocation4 + $0x10] sm:$0x3]
        %v3138 = vld [vmem:[#allocation4 + $0x18] sm:$0xff]
        %v3139 = vld [vmem:[#allocation4 + $0x20] sm:$0xff]
        %v3140 = vld [vmem:[#allocation4 + $0x28] sm:$0x3]
        %v3141 = vld [vmem:[#allocation4 + $0x30] sm:$0xff]
        %v3142 = vld [vmem:[#allocation4 + $0x38] sm:$0xff]
        %v3143 = vld [vmem:[#allocation4 + $0x40] sm:$0x3]
        %v3144 = vld [vmem:[#allocation4 + $0x48] sm:$0xff]
        %v3145 = vld [vmem:[#allocation4 + $0x50] sm:$0xff]
        %v3146 = vld [vmem:[#allocation4 + $0x58] sm:$0x3]
        %v3147 = vld [vmem:[#allocation4 + $0x60] sm:$0xff]
        %v3148 = vld [vmem:[#allocation4 + $0x68] sm:$0xff]
        %v3149 = vld [vmem:[#allocation4 + $0x70] sm:$0x3]
        %v3150 = vld [vmem:[#allocation4 + $0x78] sm:$0xff]
        %v3151 = vld [vmem:[#allocation4 + $0x80] sm:$0xff]
        %v3152 = vld [vmem:[#allocation4 + $0x88] sm:$0x3]
        %v3153 = vld [vmem:[#allocation4 + $0x90] sm:$0xff]
        %v3154 = vld [vmem:[#allocation4 + $0x98] sm:$0xff]
        %v3155 = vld [vmem:[#allocation4 + $0xa0] sm:$0x3]
        %v3156 = vld [vmem:[#allocation4 + $0xa8] sm:$0xff]
        %v3157 = vld [vmem:[#allocation4 + $0xb0] sm:$0xff]
        %v3158 = vld [vmem:[#allocation4 + $0xb8] sm:$0x3]
        %v3159 = vcombine.low %v3135, %v3141
        %v3160 = vcombine.high %v3135, %v3141
        %v3162 = vunpack.c.l.s4 1983009808
        %v3163 = vunpack.c.0.s8 %v3162
        %v3164 = vlaneseq
        %v3165 = vshrl.u32 %v3164, 7
        %v3166 = vsub.s32 %v3163, %v3165
        %v3167 = vrot.slane %v3159, %v3166
        %v3169 = vunpack.c.l.s4 1983009808
        %v3170 = vunpack.c.0.s8 %v3169
        %v3171 = vlaneseq
        %v3172 = vshrl.u32 %v3171, 7
        %v3173 = vsub.s32 %v3170, %v3172
        %v3174 = vrot.slane %v3160, %v3173
        %v3175 = vcombine.low %v3138, %v3144
        %v3176 = vcombine.high %v3138, %v3144
        %v3178 = vunpack.c.l.s4 1983009808
        %v3179 = vunpack.c.0.s8 %v3178
        %v3180 = vlaneseq
        %v3181 = vshrl.u32 %v3180, 7
        %v3182 = vsub.s32 %v3179, %v3181
        %v3183 = vrot.slane %v3175, %v3182
        %v3185 = vunpack.c.l.s4 1983009808
        %v3186 = vunpack.c.0.s8 %v3185
        %v3187 = vlaneseq
        %v3188 = vshrl.u32 %v3187, 7
        %v3189 = vsub.s32 %v3186, %v3188
        %v3190 = vrot.slane %v3176, %v3189
        %v3191 = vcombine.low %v3147, %v3153
        %v3192 = vcombine.high %v3147, %v3153
        %v3194 = vunpack.c.l.s4 1983009808
        %v3195 = vunpack.c.0.s8 %v3194
        %v3196 = vlaneseq
        %v3197 = vshrl.u32 %v3196, 7
        %v3198 = vsub.s32 %v3195, %v3197
        %v3199 = vrot.slane %v3191, %v3198
        %v3201 = vunpack.c.l.s4 1983009808
        %v3202 = vunpack.c.0.s8 %v3201
        %v3203 = vlaneseq
        %v3204 = vshrl.u32 %v3203, 7
        %v3205 = vsub.s32 %v3202, %v3204
        %v3206 = vrot.slane %v3192, %v3205
        %v3207 = vcombine.low %v3150, %v3156
        %v3208 = vcombine.high %v3150, %v3156
        %v3210 = vunpack.c.l.s4 1983009808
        %v3211 = vunpack.c.0.s8 %v3210
        %v3212 = vlaneseq
        %v3213 = vshrl.u32 %v3212, 7
        %v3214 = vsub.s32 %v3211, %v3213
        %v3215 = vrot.slane %v3207, %v3214
        %v3217 = vunpack.c.l.s4 1983009808
        %v3218 = vunpack.c.0.s8 %v3217
        %v3219 = vlaneseq
        %v3220 = vshrl.u32 %v3219, 7
        %v3221 = vsub.s32 %v3218, %v3220
        %v3222 = vrot.slane %v3208, %v3221
        %v3223 = vcombine.low %v3167, %v3183
        %v3224 = vcombine.high %v3167, %v3183
        %v3226 = vunpack.c.l.s4 1934713408
        %v3227 = vunpack.c.0.s8 %v3226
        %v3228 = vlaneseq
        %v3229 = vshrl.u32 %v3228, 7
        %v3230 = vsub.s32 %v3227, %v3229
        %v3231 = vrot.slane %v3223, %v3230
        %v3233 = vunpack.c.l.s4 1934713408
        %v3234 = vunpack.c.0.s8 %v3233
        %v3235 = vlaneseq
        %v3236 = vshrl.u32 %v3235, 7
        %v3237 = vsub.s32 %v3234, %v3236
        %v3238 = vrot.slane %v3224, %v3237
        %v3239 = vcombine.low %v3174, %v3190
        %v3240 = vcombine.high %v3174, %v3190
        %v3242 = vunpack.c.l.s4 1934713408
        %v3243 = vunpack.c.0.s8 %v3242
        %v3244 = vlaneseq
        %v3245 = vshrl.u32 %v3244, 7
        %v3246 = vsub.s32 %v3243, %v3245
        %v3247 = vrot.slane %v3239, %v3246
        %v3249 = vunpack.c.l.s4 1934713408
        %v3250 = vunpack.c.0.s8 %v3249
        %v3251 = vlaneseq
        %v3252 = vshrl.u32 %v3251, 7
        %v3253 = vsub.s32 %v3250, %v3252
        %v3254 = vrot.slane %v3240, %v3253
        %v3255 = vcombine.low %v3199, %v3215
        %v3256 = vcombine.high %v3199, %v3215
        %v3258 = vunpack.c.l.s4 1934713408
        %v3259 = vunpack.c.0.s8 %v3258
        %v3260 = vlaneseq
        %v3261 = vshrl.u32 %v3260, 7
        %v3262 = vsub.s32 %v3259, %v3261
        %v3263 = vrot.slane %v3255, %v3262
        %v3265 = vunpack.c.l.s4 1934713408
        %v3266 = vunpack.c.0.s8 %v3265
        %v3267 = vlaneseq
        %v3268 = vshrl.u32 %v3267, 7
        %v3269 = vsub.s32 %v3266, %v3268
        %v3270 = vrot.slane %v3256, %v3269
        %v3271 = vcombine.low %v3206, %v3222
        %v3272 = vcombine.high %v3206, %v3222
        %v3274 = vunpack.c.l.s4 1934713408
        %v3275 = vunpack.c.0.s8 %v3274
        %v3276 = vlaneseq
        %v3277 = vshrl.u32 %v3276, 7
        %v3278 = vsub.s32 %v3275, %v3277
        %v3279 = vrot.slane %v3271, %v3278
        %v3281 = vunpack.c.l.s4 1934713408
        %v3282 = vunpack.c.0.s8 %v3281
        %v3283 = vlaneseq
        %v3284 = vshrl.u32 %v3283, 7
        %v3285 = vsub.s32 %v3282, %v3284
        %v3286 = vrot.slane %v3272, %v3285
        %v3287 = vcombine.low %v3231, %v3263
        %v3288 = vcombine.high %v3231, %v3263
        %v3289 = vcombine.low %v3238, %v3270
        %v3290 = vcombine.high %v3238, %v3270
        %v3291 = vcombine.low %v3247, %v3279
        %v3292 = vcombine.high %v3247, %v3279
        %v3293 = vcombine.low %v3254, %v3286
        %v3294 = vcombine.high %v3254, %v3286
        %v3295 = vcombine.low %v3136, %v3142
        %v3296 = vcombine.high %v3136, %v3142
        %v3298 = vunpack.c.l.s4 1983009808
        %v3299 = vunpack.c.0.s8 %v3298
        %v3300 = vlaneseq
        %v3301 = vshrl.u32 %v3300, 7
        %v3302 = vsub.s32 %v3299, %v3301
        %v3303 = vrot.slane %v3295, %v3302
        %v3305 = vunpack.c.l.s4 1983009808
        %v3306 = vunpack.c.0.s8 %v3305
        %v3307 = vlaneseq
        %v3308 = vshrl.u32 %v3307, 7
        %v3309 = vsub.s32 %v3306, %v3308
        %v3310 = vrot.slane %v3296, %v3309
        %v3311 = vcombine.low %v3139, %v3145
        %v3312 = vcombine.high %v3139, %v3145
        %v3314 = vunpack.c.l.s4 1983009808
        %v3315 = vunpack.c.0.s8 %v3314
        %v3316 = vlaneseq
        %v3317 = vshrl.u32 %v3316, 7
        %v3318 = vsub.s32 %v3315, %v3317
        %v3319 = vrot.slane %v3311, %v3318
        %v3321 = vunpack.c.l.s4 1983009808
        %v3322 = vunpack.c.0.s8 %v3321
        %v3323 = vlaneseq
        %v3324 = vshrl.u32 %v3323, 7
        %v3325 = vsub.s32 %v3322, %v3324
        %v3326 = vrot.slane %v3312, %v3325
        %v3327 = vcombine.low %v3148, %v3154
        %v3328 = vcombine.high %v3148, %v3154
        %v3330 = vunpack.c.l.s4 1983009808
        %v3331 = vunpack.c.0.s8 %v3330
        %v3332 = vlaneseq
        %v3333 = vshrl.u32 %v3332, 7
        %v3334 = vsub.s32 %v3331, %v3333
        %v3335 = vrot.slane %v3327, %v3334
        %v3337 = vunpack.c.l.s4 1983009808
        %v3338 = vunpack.c.0.s8 %v3337
        %v3339 = vlaneseq
        %v3340 = vshrl.u32 %v3339, 7
        %v3341 = vsub.s32 %v3338, %v3340
        %v3342 = vrot.slane %v3328, %v3341
        %v3343 = vcombine.low %v3151, %v3157
        %v3344 = vcombine.high %v3151, %v3157
        %v3346 = vunpack.c.l.s4 1983009808
        %v3347 = vunpack.c.0.s8 %v3346
        %v3348 = vlaneseq
        %v3349 = vshrl.u32 %v3348, 7
        %v3350 = vsub.s32 %v3347, %v3349
        %v3351 = vrot.slane %v3343, %v3350
        %v3353 = vunpack.c.l.s4 1983009808
        %v3354 = vunpack.c.0.s8 %v3353
        %v3355 = vlaneseq
        %v3356 = vshrl.u32 %v3355, 7
        %v3357 = vsub.s32 %v3354, %v3356
        %v3358 = vrot.slane %v3344, %v3357
        %v3359 = vcombine.low %v3303, %v3319
        %v3360 = vcombine.high %v3303, %v3319
        %v3362 = vunpack.c.l.s4 1934713408
        %v3363 = vunpack.c.0.s8 %v3362
        %v3364 = vlaneseq
        %v3365 = vshrl.u32 %v3364, 7
        %v3366 = vsub.s32 %v3363, %v3365
        %v3367 = vrot.slane %v3359, %v3366
        %v3369 = vunpack.c.l.s4 1934713408
        %v3370 = vunpack.c.0.s8 %v3369
        %v3371 = vlaneseq
        %v3372 = vshrl.u32 %v3371, 7
        %v3373 = vsub.s32 %v3370, %v3372
        %v3374 = vrot.slane %v3360, %v3373
        %v3375 = vcombine.low %v3310, %v3326
        %v3376 = vcombine.high %v3310, %v3326
        %v3378 = vunpack.c.l.s4 1934713408
        %v3379 = vunpack.c.0.s8 %v3378
        %v3380 = vlaneseq
        %v3381 = vshrl.u32 %v3380, 7
        %v3382 = vsub.s32 %v3379, %v3381
        %v3383 = vrot.slane %v3375, %v3382
        %v3385 = vunpack.c.l.s4 1934713408
        %v3386 = vunpack.c.0.s8 %v3385
        %v3387 = vlaneseq
        %v3388 = vshrl.u32 %v3387, 7
        %v3389 = vsub.s32 %v3386, %v3388
        %v3390 = vrot.slane %v3376, %v3389
        %v3391 = vcombine.low %v3335, %v3351
        %v3392 = vcombine.high %v3335, %v3351
        %v3394 = vunpack.c.l.s4 1934713408
        %v3395 = vunpack.c.0.s8 %v3394
        %v3396 = vlaneseq
        %v3397 = vshrl.u32 %v3396, 7
        %v3398 = vsub.s32 %v3395, %v3397
        %v3399 = vrot.slane %v3391, %v3398
        %v3401 = vunpack.c.l.s4 1934713408
        %v3402 = vunpack.c.0.s8 %v3401
        %v3403 = vlaneseq
        %v3404 = vshrl.u32 %v3403, 7
        %v3405 = vsub.s32 %v3402, %v3404
        %v3406 = vrot.slane %v3392, %v3405
        %v3407 = vcombine.low %v3342, %v3358
        %v3408 = vcombine.high %v3342, %v3358
        %v3410 = vunpack.c.l.s4 1934713408
        %v3411 = vunpack.c.0.s8 %v3410
        %v3412 = vlaneseq
        %v3413 = vshrl.u32 %v3412, 7
        %v3414 = vsub.s32 %v3411, %v3413
        %v3415 = vrot.slane %v3407, %v3414
        %v3417 = vunpack.c.l.s4 1934713408
        %v3418 = vunpack.c.0.s8 %v3417
        %v3419 = vlaneseq
        %v3420 = vshrl.u32 %v3419, 7
        %v3421 = vsub.s32 %v3418, %v3420
        %v3422 = vrot.slane %v3408, %v3421
        %v3423 = vcombine.low %v3367, %v3399
        %v3424 = vcombine.high %v3367, %v3399
        %v3425 = vcombine.low %v3374, %v3406
        %v3426 = vcombine.high %v3374, %v3406
        %v3427 = vcombine.low %v3383, %v3415
        %v3428 = vcombine.high %v3383, %v3415
        %v3429 = vcombine.low %v3390, %v3422
        %v3430 = vcombine.high %v3390, %v3422
        %3432 = vrot.lane.b32.xlu0 %v3288, 16
        %v3433 = vpop.permute.xlu0 %3432
        %3436 = vrot.lane.b32.xlu0 %v3289, 32
        %v3437 = vpop.permute.xlu0 %3436
        %3440 = vrot.lane.b32.xlu0 %v3290, 48
        %v3441 = vpop.permute.xlu0 %3440
        %3444 = vrot.lane.b32.xlu0 %v3291, 64
        %v3445 = vpop.permute.xlu0 %3444
        %3448 = vrot.lane.b32.xlu0 %v3292, 80
        %v3449 = vpop.permute.xlu0 %3448
        %3452 = vrot.lane.b32.xlu0 %v3293, 96
        %v3453 = vpop.permute.xlu0 %3452
        %3456 = vrot.lane.b32.xlu0 %v3294, 112
        %v3457 = vpop.permute.xlu0 %3456
        %3460 = vrot.lane.b32.xlu0 %v3424, 16
        %v3461 = vpop.permute.xlu0 %3460
        %3464 = vrot.lane.b32.xlu0 %v3425, 32
        %v3465 = vpop.permute.xlu0 %3464
        %3468 = vrot.lane.b32.xlu0 %v3426, 48
        %v3469 = vpop.permute.xlu0 %3468
        %3472 = vrot.lane.b32.xlu0 %v3427, 64
        %v3473 = vpop.permute.xlu0 %3472
        %3476 = vrot.lane.b32.xlu0 %v3428, 80
        %v3477 = vpop.permute.xlu0 %3476
        %3480 = vrot.lane.b32.xlu0 %v3429, 96
        %v3481 = vpop.permute.xlu0 %3480
        %3484 = vrot.lane.b32.xlu0 %v3430, 112
        %v3485 = vpop.permute.xlu0 %3484
        %v3487 = vsel %vm646, %v3287, %v3433
        %v3488 = vsel %vm648, %v3487, %v3437
        %v3489 = vsel %vm650, %v3488, %v3441
        %v3490 = vsel %vm652, %v3489, %v3445
        %v3491 = vsel %vm654, %v3490, %v3449
        %v3492 = vsel %vm656, %v3491, %v3453
        %v3493 = vsel %vm658, %v3492, %v3457
        %v3494 = vsel %vm646, %v3423, %v3461
        %v3495 = vsel %vm648, %v3494, %v3465
        %v3496 = vsel %vm650, %v3495, %v3469
        %v3497 = vsel %vm652, %v3496, %v3473
        %v3498 = vsel %vm654, %v3497, %v3477
        %v3499 = vsel %vm656, %v3498, %v3481
        %v3500 = vsel %vm658, %v3499, %v3485
        %v3501 = vpack.c.bf16 %v3493, %v3493
        %v3502 = vpack.c.bf16 %v3500, %v3500
        %v3505 = vunpack.c.l.b16 %v3501
        %v3506 = vunpack.c.l.b16 %v3502
        %v3507 = vpack.c.b16 %v3506, %v3505
        %3509 = vst [vmem:[#allocation5] sm:$0xff] %v3507
        %3526 = vrot.lane.b32.xlu0 %v3135, 127
        %v3527 = vpop.permute.xlu0 %3526
        %3528 = vrot.lane.b32.xlu0 %v3136, 127
        %v3529 = vpop.permute.xlu0 %3528
        %3530 = vrot.lane.b32.xlu0 %v3138, 127
        %v3531 = vpop.permute.xlu0 %3530
        %3532 = vrot.lane.b32.xlu0 %v3139, 127
        %v3533 = vpop.permute.xlu0 %3532
        %3534 = vrot.lane.b32.xlu0 %v3141, 127
        %v3535 = vpop.permute.xlu0 %3534
        %3536 = vrot.lane.b32.xlu0 %v3142, 127
        %v3537 = vpop.permute.xlu0 %3536
        %3538 = vrot.lane.b32.xlu0 %v3144, 127
        %v3539 = vpop.permute.xlu0 %3538
        %3540 = vrot.lane.b32.xlu0 %v3145, 127
        %v3541 = vpop.permute.xlu0 %3540
        %3542 = vrot.lane.b32.xlu0 %v3147, 127
        %v3543 = vpop.permute.xlu0 %3542
        %3544 = vrot.lane.b32.xlu0 %v3148, 127
        %v3545 = vpop.permute.xlu0 %3544
        %3546 = vrot.lane.b32.xlu0 %v3150, 127
        %v3547 = vpop.permute.xlu0 %3546
        %3548 = vrot.lane.b32.xlu0 %v3151, 127
        %v3549 = vpop.permute.xlu0 %3548
        %3550 = vrot.lane.b32.xlu0 %v3153, 127
        %v3551 = vpop.permute.xlu0 %3550
        %3552 = vrot.lane.b32.xlu0 %v3154, 127
        %v3553 = vpop.permute.xlu0 %3552
        %3554 = vrot.lane.b32.xlu0 %v3156, 127
        %v3555 = vpop.permute.xlu0 %3554
        %3556 = vrot.lane.b32.xlu0 %v3157, 127
        %v3557 = vpop.permute.xlu0 %3556
        %v3574 = vcombine.low %v3527, %v3535
        %v3575 = vcombine.high %v3527, %v3535
        %v3577 = vunpack.c.l.s4 1983009808
        %v3578 = vunpack.c.0.s8 %v3577
        %v3579 = vlaneseq
        %v3580 = vshrl.u32 %v3579, 7
        %v3581 = vsub.s32 %v3578, %v3580
        %v3582 = vrot.slane %v3574, %v3581
        %v3584 = vunpack.c.l.s4 1983009808
        %v3585 = vunpack.c.0.s8 %v3584
        %v3586 = vlaneseq
        %v3587 = vshrl.u32 %v3586, 7
        %v3588 = vsub.s32 %v3585, %v3587
        %v3589 = vrot.slane %v3575, %v3588
        %v3590 = vcombine.low %v3531, %v3539
        %v3591 = vcombine.high %v3531, %v3539
        %v3593 = vunpack.c.l.s4 1983009808
        %v3594 = vunpack.c.0.s8 %v3593
        %v3595 = vlaneseq
        %v3596 = vshrl.u32 %v3595, 7
        %v3597 = vsub.s32 %v3594, %v3596
        %v3598 = vrot.slane %v3590, %v3597
        %v3600 = vunpack.c.l.s4 1983009808
        %v3601 = vunpack.c.0.s8 %v3600
        %v3602 = vlaneseq
        %v3603 = vshrl.u32 %v3602, 7
        %v3604 = vsub.s32 %v3601, %v3603
        %v3605 = vrot.slane %v3591, %v3604
        %v3606 = vcombine.low %v3543, %v3551
        %v3607 = vcombine.high %v3543, %v3551
        %v3609 = vunpack.c.l.s4 1983009808
        %v3610 = vunpack.c.0.s8 %v3609
        %v3611 = vlaneseq
        %v3612 = vshrl.u32 %v3611, 7
        %v3613 = vsub.s32 %v3610, %v3612
        %v3614 = vrot.slane %v3606, %v3613
        %v3616 = vunpack.c.l.s4 1983009808
        %v3617 = vunpack.c.0.s8 %v3616
        %v3618 = vlaneseq
        %v3619 = vshrl.u32 %v3618, 7
        %v3620 = vsub.s32 %v3617, %v3619
        %v3621 = vrot.slane %v3607, %v3620
        %v3622 = vcombine.low %v3547, %v3555
        %v3623 = vcombine.high %v3547, %v3555
        %v3625 = vunpack.c.l.s4 1983009808
        %v3626 = vunpack.c.0.s8 %v3625
        %v3627 = vlaneseq
        %v3628 = vshrl.u32 %v3627, 7
        %v3629 = vsub.s32 %v3626, %v3628
        %v3630 = vrot.slane %v3622, %v3629
        %v3632 = vunpack.c.l.s4 1983009808
        %v3633 = vunpack.c.0.s8 %v3632
        %v3634 = vlaneseq
        %v3635 = vshrl.u32 %v3634, 7
        %v3636 = vsub.s32 %v3633, %v3635
        %v3637 = vrot.slane %v3623, %v3636
        %v3638 = vcombine.low %v3582, %v3598
        %v3639 = vcombine.high %v3582, %v3598
        %v3641 = vunpack.c.l.s4 1934713408
        %v3642 = vunpack.c.0.s8 %v3641
        %v3643 = vlaneseq
        %v3644 = vshrl.u32 %v3643, 7
        %v3645 = vsub.s32 %v3642, %v3644
        %v3646 = vrot.slane %v3638, %v3645
        %v3648 = vunpack.c.l.s4 1934713408
        %v3649 = vunpack.c.0.s8 %v3648
        %v3650 = vlaneseq
        %v3651 = vshrl.u32 %v3650, 7
        %v3652 = vsub.s32 %v3649, %v3651
        %v3653 = vrot.slane %v3639, %v3652
        %v3654 = vcombine.low %v3589, %v3605
        %v3655 = vcombine.high %v3589, %v3605
        %v3657 = vunpack.c.l.s4 1934713408
        %v3658 = vunpack.c.0.s8 %v3657
        %v3659 = vlaneseq
        %v3660 = vshrl.u32 %v3659, 7
        %v3661 = vsub.s32 %v3658, %v3660
        %v3662 = vrot.slane %v3654, %v3661
        %v3664 = vunpack.c.l.s4 1934713408
        %v3665 = vunpack.c.0.s8 %v3664
        %v3666 = vlaneseq
        %v3667 = vshrl.u32 %v3666, 7
        %v3668 = vsub.s32 %v3665, %v3667
        %v3669 = vrot.slane %v3655, %v3668
        %v3670 = vcombine.low %v3614, %v3630
        %v3671 = vcombine.high %v3614, %v3630
        %v3673 = vunpack.c.l.s4 1934713408
        %v3674 = vunpack.c.0.s8 %v3673
        %v3675 = vlaneseq
        %v3676 = vshrl.u32 %v3675, 7
        %v3677 = vsub.s32 %v3674, %v3676
        %v3678 = vrot.slane %v3670, %v3677
        %v3680 = vunpack.c.l.s4 1934713408
        %v3681 = vunpack.c.0.s8 %v3680
        %v3682 = vlaneseq
        %v3683 = vshrl.u32 %v3682, 7
        %v3684 = vsub.s32 %v3681, %v3683
        %v3685 = vrot.slane %v3671, %v3684
        %v3686 = vcombine.low %v3621, %v3637
        %v3687 = vcombine.high %v3621, %v3637
        %v3689 = vunpack.c.l.s4 1934713408
        %v3690 = vunpack.c.0.s8 %v3689
        %v3691 = vlaneseq
        %v3692 = vshrl.u32 %v3691, 7
        %v3693 = vsub.s32 %v3690, %v3692
        %v3694 = vrot.slane %v3686, %v3693
        %v3696 = vunpack.c.l.s4 1934713408
        %v3697 = vunpack.c.0.s8 %v3696
        %v3698 = vlaneseq
        %v3699 = vshrl.u32 %v3698, 7
        %v3700 = vsub.s32 %v3697, %v3699
        %v3701 = vrot.slane %v3687, %v3700
        %v3702 = vcombine.low %v3646, %v3678
        %v3703 = vcombine.high %v3646, %v3678
        %v3704 = vcombine.low %v3653, %v3685
        %v3705 = vcombine.high %v3653, %v3685
        %v3706 = vcombine.low %v3662, %v3694
        %v3707 = vcombine.high %v3662, %v3694
        %v3708 = vcombine.low %v3669, %v3701
        %v3709 = vcombine.high %v3669, %v3701
        %v3710 = vcombine.low %v3529, %v3537
        %v3711 = vcombine.high %v3529, %v3537
        %v3713 = vunpack.c.l.s4 1983009808
        %v3714 = vunpack.c.0.s8 %v3713
        %v3715 = vlaneseq
        %v3716 = vshrl.u32 %v3715, 7
        %v3717 = vsub.s32 %v3714, %v3716
        %v3718 = vrot.slane %v3710, %v3717
        %v3720 = vunpack.c.l.s4 1983009808
        %v3721 = vunpack.c.0.s8 %v3720
        %v3722 = vlaneseq
        %v3723 = vshrl.u32 %v3722, 7
        %v3724 = vsub.s32 %v3721, %v3723
        %v3725 = vrot.slane %v3711, %v3724
        %v3726 = vcombine.low %v3533, %v3541
        %v3727 = vcombine.high %v3533, %v3541
        %v3729 = vunpack.c.l.s4 1983009808
        %v3730 = vunpack.c.0.s8 %v3729
        %v3731 = vlaneseq
        %v3732 = vshrl.u32 %v3731, 7
        %v3733 = vsub.s32 %v3730, %v3732
        %v3734 = vrot.slane %v3726, %v3733
        %v3736 = vunpack.c.l.s4 1983009808
        %v3737 = vunpack.c.0.s8 %v3736
        %v3738 = vlaneseq
        %v3739 = vshrl.u32 %v3738, 7
        %v3740 = vsub.s32 %v3737, %v3739
        %v3741 = vrot.slane %v3727, %v3740
        %v3742 = vcombine.low %v3545, %v3553
        %v3743 = vcombine.high %v3545, %v3553
        %v3745 = vunpack.c.l.s4 1983009808
        %v3746 = vunpack.c.0.s8 %v3745
        %v3747 = vlaneseq
        %v3748 = vshrl.u32 %v3747, 7
        %v3749 = vsub.s32 %v3746, %v3748
        %v3750 = vrot.slane %v3742, %v3749
        %v3752 = vunpack.c.l.s4 1983009808
        %v3753 = vunpack.c.0.s8 %v3752
        %v3754 = vlaneseq
        %v3755 = vshrl.u32 %v3754, 7
        %v3756 = vsub.s32 %v3753, %v3755
        %v3757 = vrot.slane %v3743, %v3756
        %v3758 = vcombine.low %v3549, %v3557
        %v3759 = vcombine.high %v3549, %v3557
        %v3761 = vunpack.c.l.s4 1983009808
        %v3762 = vunpack.c.0.s8 %v3761
        %v3763 = vlaneseq
        %v3764 = vshrl.u32 %v3763, 7
        %v3765 = vsub.s32 %v3762, %v3764
        %v3766 = vrot.slane %v3758, %v3765
        %v3768 = vunpack.c.l.s4 1983009808
        %v3769 = vunpack.c.0.s8 %v3768
        %v3770 = vlaneseq
        %v3771 = vshrl.u32 %v3770, 7
        %v3772 = vsub.s32 %v3769, %v3771
        %v3773 = vrot.slane %v3759, %v3772
        %v3774 = vcombine.low %v3718, %v3734
        %v3775 = vcombine.high %v3718, %v3734
        %v3777 = vunpack.c.l.s4 1934713408
        %v3778 = vunpack.c.0.s8 %v3777
        %v3779 = vlaneseq
        %v3780 = vshrl.u32 %v3779, 7
        %v3781 = vsub.s32 %v3778, %v3780
        %v3782 = vrot.slane %v3774, %v3781
        %v3784 = vunpack.c.l.s4 1934713408
        %v3785 = vunpack.c.0.s8 %v3784
        %v3786 = vlaneseq
        %v3787 = vshrl.u32 %v3786, 7
        %v3788 = vsub.s32 %v3785, %v3787
        %v3789 = vrot.slane %v3775, %v3788
        %v3790 = vcombine.low %v3725, %v3741
        %v3791 = vcombine.high %v3725, %v3741
        %v3793 = vunpack.c.l.s4 1934713408
        %v3794 = vunpack.c.0.s8 %v3793
        %v3795 = vlaneseq
        %v3796 = vshrl.u32 %v3795, 7
        %v3797 = vsub.s32 %v3794, %v3796
        %v3798 = vrot.slane %v3790, %v3797
        %v3800 = vunpack.c.l.s4 1934713408
        %v3801 = vunpack.c.0.s8 %v3800
        %v3802 = vlaneseq
        %v3803 = vshrl.u32 %v3802, 7
        %v3804 = vsub.s32 %v3801, %v3803
        %v3805 = vrot.slane %v3791, %v3804
        %v3806 = vcombine.low %v3750, %v3766
        %v3807 = vcombine.high %v3750, %v3766
        %v3809 = vunpack.c.l.s4 1934713408
        %v3810 = vunpack.c.0.s8 %v3809
        %v3811 = vlaneseq
        %v3812 = vshrl.u32 %v3811, 7
        %v3813 = vsub.s32 %v3810, %v3812
        %v3814 = vrot.slane %v3806, %v3813
        %v3816 = vunpack.c.l.s4 1934713408
        %v3817 = vunpack.c.0.s8 %v3816
        %v3818 = vlaneseq
        %v3819 = vshrl.u32 %v3818, 7
        %v3820 = vsub.s32 %v3817, %v3819
        %v3821 = vrot.slane %v3807, %v3820
        %v3822 = vcombine.low %v3757, %v3773
        %v3823 = vcombine.high %v3757, %v3773
        %v3825 = vunpack.c.l.s4 1934713408
        %v3826 = vunpack.c.0.s8 %v3825
        %v3827 = vlaneseq
        %v3828 = vshrl.u32 %v3827, 7
        %v3829 = vsub.s32 %v3826, %v3828
        %v3830 = vrot.slane %v3822, %v3829
        %v3832 = vunpack.c.l.s4 1934713408
        %v3833 = vunpack.c.0.s8 %v3832
        %v3834 = vlaneseq
        %v3835 = vshrl.u32 %v3834, 7
        %v3836 = vsub.s32 %v3833, %v3835
        %v3837 = vrot.slane %v3823, %v3836
        %v3838 = vcombine.low %v3782, %v3814
        %v3839 = vcombine.high %v3782, %v3814
        %v3840 = vcombine.low %v3789, %v3821
        %v3841 = vcombine.high %v3789, %v3821
        %v3842 = vcombine.low %v3798, %v3830
        %v3843 = vcombine.high %v3798, %v3830
        %v3844 = vcombine.low %v3805, %v3837
        %v3845 = vcombine.high %v3805, %v3837
        %3847 = vrot.lane.b32.xlu0 %v3703, 16
        %v3848 = vpop.permute.xlu0 %3847
        %3851 = vrot.lane.b32.xlu0 %v3704, 32
        %v3852 = vpop.permute.xlu0 %3851
        %3855 = vrot.lane.b32.xlu0 %v3705, 48
        %v3856 = vpop.permute.xlu0 %3855
        %3859 = vrot.lane.b32.xlu0 %v3706, 64
        %v3860 = vpop.permute.xlu0 %3859
        %3863 = vrot.lane.b32.xlu0 %v3707, 80
        %v3864 = vpop.permute.xlu0 %3863
        %3867 = vrot.lane.b32.xlu0 %v3708, 96
        %v3868 = vpop.permute.xlu0 %3867
        %3871 = vrot.lane.b32.xlu0 %v3709, 112
        %v3872 = vpop.permute.xlu0 %3871
        %3875 = vrot.lane.b32.xlu0 %v3839, 16
        %v3876 = vpop.permute.xlu0 %3875
        %3879 = vrot.lane.b32.xlu0 %v3840, 32
        %v3880 = vpop.permute.xlu0 %3879
        %3883 = vrot.lane.b32.xlu0 %v3841, 48
        %v3884 = vpop.permute.xlu0 %3883
        %3887 = vrot.lane.b32.xlu0 %v3842, 64
        %v3888 = vpop.permute.xlu0 %3887
        %3891 = vrot.lane.b32.xlu0 %v3843, 80
        %v3892 = vpop.permute.xlu0 %3891
        %3895 = vrot.lane.b32.xlu0 %v3844, 96
        %v3896 = vpop.permute.xlu0 %3895
        %3899 = vrot.lane.b32.xlu0 %v3845, 112
        %v3900 = vpop.permute.xlu0 %3899
        %v3902 = vsel %vm646, %v3702, %v3848
        %v3903 = vsel %vm648, %v3902, %v3852
        %v3904 = vsel %vm650, %v3903, %v3856
        %v3905 = vsel %vm652, %v3904, %v3860
        %v3906 = vsel %vm654, %v3905, %v3864
        %v3907 = vsel %vm656, %v3906, %v3868
        %v3908 = vsel %vm658, %v3907, %v3872
        %v3909 = vsel %vm646, %v3838, %v3876
        %v3910 = vsel %vm648, %v3909, %v3880
        %v3911 = vsel %vm650, %v3910, %v3884
        %v3912 = vsel %vm652, %v3911, %v3888
        %v3913 = vsel %vm654, %v3912, %v3892
        %v3914 = vsel %vm656, %v3913, %v3896
        %v3915 = vsel %vm658, %v3914, %v3900
        %v3916 = vpack.c.bf16 %v3908, %v3908
        %v3917 = vpack.c.bf16 %v3915, %v3915
        %v3920 = vunpack.c.l.b16 %v3916
        %v3921 = vunpack.c.l.b16 %v3917
        %v3922 = vpack.c.b16 %v3921, %v3920
        %3924 = vst [vmem:[#allocation5 + $0x8] sm:$0xff] %v3922
        %3925 = vrot.lane.b32.xlu0 %v3135, 126
        %v3926 = vpop.permute.xlu0 %3925
        %3927 = vrot.lane.b32.xlu0 %v3136, 126
        %v3928 = vpop.permute.xlu0 %3927
        %3929 = vrot.lane.b32.xlu0 %v3138, 126
        %v3930 = vpop.permute.xlu0 %3929
        %3931 = vrot.lane.b32.xlu0 %v3139, 126
        %v3932 = vpop.permute.xlu0 %3931
        %3933 = vrot.lane.b32.xlu0 %v3141, 126
        %v3934 = vpop.permute.xlu0 %3933
        %3935 = vrot.lane.b32.xlu0 %v3142, 126
        %v3936 = vpop.permute.xlu0 %3935
        %3937 = vrot.lane.b32.xlu0 %v3144, 126
        %v3938 = vpop.permute.xlu0 %3937
        %3939 = vrot.lane.b32.xlu0 %v3145, 126
        %v3940 = vpop.permute.xlu0 %3939
        %3941 = vrot.lane.b32.xlu0 %v3147, 126
        %v3942 = vpop.permute.xlu0 %3941
        %3943 = vrot.lane.b32.xlu0 %v3148, 126
        %v3944 = vpop.permute.xlu0 %3943
        %3945 = vrot.lane.b32.xlu0 %v3150, 126
        %v3946 = vpop.permute.xlu0 %3945
        %3947 = vrot.lane.b32.xlu0 %v3151, 126
        %v3948 = vpop.permute.xlu0 %3947
        %3949 = vrot.lane.b32.xlu0 %v3153, 126
        %v3950 = vpop.permute.xlu0 %3949
        %3951 = vrot.lane.b32.xlu0 %v3154, 126
        %v3952 = vpop.permute.xlu0 %3951
        %3953 = vrot.lane.b32.xlu0 %v3156, 126
        %v3954 = vpop.permute.xlu0 %3953
        %3955 = vrot.lane.b32.xlu0 %v3157, 126
        %v3956 = vpop.permute.xlu0 %3955
        %v3973 = vcombine.low %v3926, %v3934
        %v3974 = vcombine.high %v3926, %v3934
        %v3976 = vunpack.c.l.s4 1983009808
        %v3977 = vunpack.c.0.s8 %v3976
        %v3978 = vlaneseq
        %v3979 = vshrl.u32 %v3978, 7
        %v3980 = vsub.s32 %v3977, %v3979
        %v3981 = vrot.slane %v3973, %v3980
        %v3983 = vunpack.c.l.s4 1983009808
        %v3984 = vunpack.c.0.s8 %v3983
        %v3985 = vlaneseq
        %v3986 = vshrl.u32 %v3985, 7
        %v3987 = vsub.s32 %v3984, %v3986
        %v3988 = vrot.slane %v3974, %v3987
        %v3989 = vcombine.low %v3930, %v3938
        %v3990 = vcombine.high %v3930, %v3938
        %v3992 = vunpack.c.l.s4 1983009808
        %v3993 = vunpack.c.0.s8 %v3992
        %v3994 = vlaneseq
        %v3995 = vshrl.u32 %v3994, 7
        %v3996 = vsub.s32 %v3993, %v3995
        %v3997 = vrot.slane %v3989, %v3996
        %v3999 = vunpack.c.l.s4 1983009808
        %v4000 = vunpack.c.0.s8 %v3999
        %v4001 = vlaneseq
        %v4002 = vshrl.u32 %v4001, 7
        %v4003 = vsub.s32 %v4000, %v4002
        %v4004 = vrot.slane %v3990, %v4003
        %v4005 = vcombine.low %v3942, %v3950
        %v4006 = vcombine.high %v3942, %v3950
        %v4008 = vunpack.c.l.s4 1983009808
        %v4009 = vunpack.c.0.s8 %v4008
        %v4010 = vlaneseq
        %v4011 = vshrl.u32 %v4010, 7
        %v4012 = vsub.s32 %v4009, %v4011
        %v4013 = vrot.slane %v4005, %v4012
        %v4015 = vunpack.c.l.s4 1983009808
        %v4016 = vunpack.c.0.s8 %v4015
        %v4017 = vlaneseq
        %v4018 = vshrl.u32 %v4017, 7
        %v4019 = vsub.s32 %v4016, %v4018
        %v4020 = vrot.slane %v4006, %v4019
        %v4021 = vcombine.low %v3946, %v3954
        %v4022 = vcombine.high %v3946, %v3954
        %v4024 = vunpack.c.l.s4 1983009808
        %v4025 = vunpack.c.0.s8 %v4024
        %v4026 = vlaneseq
        %v4027 = vshrl.u32 %v4026, 7
        %v4028 = vsub.s32 %v4025, %v4027
        %v4029 = vrot.slane %v4021, %v4028
        %v4031 = vunpack.c.l.s4 1983009808
        %v4032 = vunpack.c.0.s8 %v4031
        %v4033 = vlaneseq
        %v4034 = vshrl.u32 %v4033, 7
        %v4035 = vsub.s32 %v4032, %v4034
        %v4036 = vrot.slane %v4022, %v4035
        %v4037 = vcombine.low %v3981, %v3997
        %v4038 = vcombine.high %v3981, %v3997
        %v4040 = vunpack.c.l.s4 1934713408
        %v4041 = vunpack.c.0.s8 %v4040
        %v4042 = vlaneseq
        %v4043 = vshrl.u32 %v4042, 7
        %v4044 = vsub.s32 %v4041, %v4043
        %v4045 = vrot.slane %v4037, %v4044
        %v4047 = vunpack.c.l.s4 1934713408
        %v4048 = vunpack.c.0.s8 %v4047
        %v4049 = vlaneseq
        %v4050 = vshrl.u32 %v4049, 7
        %v4051 = vsub.s32 %v4048, %v4050
        %v4052 = vrot.slane %v4038, %v4051
        %v4053 = vcombine.low %v3988, %v4004
        %v4054 = vcombine.high %v3988, %v4004
        %v4056 = vunpack.c.l.s4 1934713408
        %v4057 = vunpack.c.0.s8 %v4056
        %v4058 = vlaneseq
        %v4059 = vshrl.u32 %v4058, 7
        %v4060 = vsub.s32 %v4057, %v4059
        %v4061 = vrot.slane %v4053, %v4060
        %v4063 = vunpack.c.l.s4 1934713408
        %v4064 = vunpack.c.0.s8 %v4063
        %v4065 = vlaneseq
        %v4066 = vshrl.u32 %v4065, 7
        %v4067 = vsub.s32 %v4064, %v4066
        %v4068 = vrot.slane %v4054, %v4067
        %v4069 = vcombine.low %v4013, %v4029
        %v4070 = vcombine.high %v4013, %v4029
        %v4072 = vunpack.c.l.s4 1934713408
        %v4073 = vunpack.c.0.s8 %v4072
        %v4074 = vlaneseq
        %v4075 = vshrl.u32 %v4074, 7
        %v4076 = vsub.s32 %v4073, %v4075
        %v4077 = vrot.slane %v4069, %v4076
        %v4079 = vunpack.c.l.s4 1934713408
        %v4080 = vunpack.c.0.s8 %v4079
        %v4081 = vlaneseq
        %v4082 = vshrl.u32 %v4081, 7
        %v4083 = vsub.s32 %v4080, %v4082
        %v4084 = vrot.slane %v4070, %v4083
        %v4085 = vcombine.low %v4020, %v4036
        %v4086 = vcombine.high %v4020, %v4036
        %v4088 = vunpack.c.l.s4 1934713408
        %v4089 = vunpack.c.0.s8 %v4088
        %v4090 = vlaneseq
        %v4091 = vshrl.u32 %v4090, 7
        %v4092 = vsub.s32 %v4089, %v4091
        %v4093 = vrot.slane %v4085, %v4092
        %v4095 = vunpack.c.l.s4 1934713408
        %v4096 = vunpack.c.0.s8 %v4095
        %v4097 = vlaneseq
        %v4098 = vshrl.u32 %v4097, 7
        %v4099 = vsub.s32 %v4096, %v4098
        %v4100 = vrot.slane %v4086, %v4099
        %v4101 = vcombine.low %v4045, %v4077
        %v4102 = vcombine.high %v4045, %v4077
        %v4103 = vcombine.low %v4052, %v4084
        %v4104 = vcombine.high %v4052, %v4084
        %v4105 = vcombine.low %v4061, %v4093
        %v4106 = vcombine.high %v4061, %v4093
        %v4107 = vcombine.low %v4068, %v4100
        %v4108 = vcombine.high %v4068, %v4100
        %v4109 = vcombine.low %v3928, %v3936
        %v4110 = vcombine.high %v3928, %v3936
        %v4112 = vunpack.c.l.s4 1983009808
        %v4113 = vunpack.c.0.s8 %v4112
        %v4114 = vlaneseq
        %v4115 = vshrl.u32 %v4114, 7
        %v4116 = vsub.s32 %v4113, %v4115
        %v4117 = vrot.slane %v4109, %v4116
        %v4119 = vunpack.c.l.s4 1983009808
        %v4120 = vunpack.c.0.s8 %v4119
        %v4121 = vlaneseq
        %v4122 = vshrl.u32 %v4121, 7
        %v4123 = vsub.s32 %v4120, %v4122
        %v4124 = vrot.slane %v4110, %v4123
        %v4125 = vcombine.low %v3932, %v3940
        %v4126 = vcombine.high %v3932, %v3940
        %v4128 = vunpack.c.l.s4 1983009808
        %v4129 = vunpack.c.0.s8 %v4128
        %v4130 = vlaneseq
        %v4131 = vshrl.u32 %v4130, 7
        %v4132 = vsub.s32 %v4129, %v4131
        %v4133 = vrot.slane %v4125, %v4132
        %v4135 = vunpack.c.l.s4 1983009808
        %v4136 = vunpack.c.0.s8 %v4135
        %v4137 = vlaneseq
        %v4138 = vshrl.u32 %v4137, 7
        %v4139 = vsub.s32 %v4136, %v4138
        %v4140 = vrot.slane %v4126, %v4139
        %v4141 = vcombine.low %v3944, %v3952
        %v4142 = vcombine.high %v3944, %v3952
        %v4144 = vunpack.c.l.s4 1983009808
        %v4145 = vunpack.c.0.s8 %v4144
        %v4146 = vlaneseq
        %v4147 = vshrl.u32 %v4146, 7
        %v4148 = vsub.s32 %v4145, %v4147
        %v4149 = vrot.slane %v4141, %v4148
        %v4151 = vunpack.c.l.s4 1983009808
        %v4152 = vunpack.c.0.s8 %v4151
        %v4153 = vlaneseq
        %v4154 = vshrl.u32 %v4153, 7
        %v4155 = vsub.s32 %v4152, %v4154
        %v4156 = vrot.slane %v4142, %v4155
        %v4157 = vcombine.low %v3948, %v3956
        %v4158 = vcombine.high %v3948, %v3956
        %v4160 = vunpack.c.l.s4 1983009808
        %v4161 = vunpack.c.0.s8 %v4160
        %v4162 = vlaneseq
        %v4163 = vshrl.u32 %v4162, 7
        %v4164 = vsub.s32 %v4161, %v4163
        %v4165 = vrot.slane %v4157, %v4164
        %v4167 = vunpack.c.l.s4 1983009808
        %v4168 = vunpack.c.0.s8 %v4167
        %v4169 = vlaneseq
        %v4170 = vshrl.u32 %v4169, 7
        %v4171 = vsub.s32 %v4168, %v4170
        %v4172 = vrot.slane %v4158, %v4171
        %v4173 = vcombine.low %v4117, %v4133
        %v4174 = vcombine.high %v4117, %v4133
        %v4176 = vunpack.c.l.s4 1934713408
        %v4177 = vunpack.c.0.s8 %v4176
        %v4178 = vlaneseq
        %v4179 = vshrl.u32 %v4178, 7
        %v4180 = vsub.s32 %v4177, %v4179
        %v4181 = vrot.slane %v4173, %v4180
        %v4183 = vunpack.c.l.s4 1934713408
        %v4184 = vunpack.c.0.s8 %v4183
        %v4185 = vlaneseq
        %v4186 = vshrl.u32 %v4185, 7
        %v4187 = vsub.s32 %v4184, %v4186
        %v4188 = vrot.slane %v4174, %v4187
        %v4189 = vcombine.low %v4124, %v4140
        %v4190 = vcombine.high %v4124, %v4140
        %v4192 = vunpack.c.l.s4 1934713408
        %v4193 = vunpack.c.0.s8 %v4192
        %v4194 = vlaneseq
        %v4195 = vshrl.u32 %v4194, 7
        %v4196 = vsub.s32 %v4193, %v4195
        %v4197 = vrot.slane %v4189, %v4196
        %v4199 = vunpack.c.l.s4 1934713408
        %v4200 = vunpack.c.0.s8 %v4199
        %v4201 = vlaneseq
        %v4202 = vshrl.u32 %v4201, 7
        %v4203 = vsub.s32 %v4200, %v4202
        %v4204 = vrot.slane %v4190, %v4203
        %v4205 = vcombine.low %v4149, %v4165
        %v4206 = vcombine.high %v4149, %v4165
        %v4208 = vunpack.c.l.s4 1934713408
        %v4209 = vunpack.c.0.s8 %v4208
        %v4210 = vlaneseq
        %v4211 = vshrl.u32 %v4210, 7
        %v4212 = vsub.s32 %v4209, %v4211
        %v4213 = vrot.slane %v4205, %v4212
        %v4215 = vunpack.c.l.s4 1934713408
        %v4216 = vunpack.c.0.s8 %v4215
        %v4217 = vlaneseq
        %v4218 = vshrl.u32 %v4217, 7
        %v4219 = vsub.s32 %v4216, %v4218
        %v4220 = vrot.slane %v4206, %v4219
        %v4221 = vcombine.low %v4156, %v4172
        %v4222 = vcombine.high %v4156, %v4172
        %v4224 = vunpack.c.l.s4 1934713408
        %v4225 = vunpack.c.0.s8 %v4224
        %v4226 = vlaneseq
        %v4227 = vshrl.u32 %v4226, 7
        %v4228 = vsub.s32 %v4225, %v4227
        %v4229 = vrot.slane %v4221, %v4228
        %v4231 = vunpack.c.l.s4 1934713408
        %v4232 = vunpack.c.0.s8 %v4231
        %v4233 = vlaneseq
        %v4234 = vshrl.u32 %v4233, 7
        %v4235 = vsub.s32 %v4232, %v4234
        %v4236 = vrot.slane %v4222, %v4235
        %v4237 = vcombine.low %v4181, %v4213
        %v4238 = vcombine.high %v4181, %v4213
        %v4239 = vcombine.low %v4188, %v4220
        %v4240 = vcombine.high %v4188, %v4220
        %v4241 = vcombine.low %v4197, %v4229
        %v4242 = vcombine.high %v4197, %v4229
        %v4243 = vcombine.low %v4204, %v4236
        %v4244 = vcombine.high %v4204, %v4236
        %4246 = vrot.lane.b32.xlu0 %v4102, 16
        %v4247 = vpop.permute.xlu0 %4246
        %4250 = vrot.lane.b32.xlu0 %v4103, 32
        %v4251 = vpop.permute.xlu0 %4250
        %4254 = vrot.lane.b32.xlu0 %v4104, 48
        %v4255 = vpop.permute.xlu0 %4254
        %4258 = vrot.lane.b32.xlu0 %v4105, 64
        %v4259 = vpop.permute.xlu0 %4258
        %4262 = vrot.lane.b32.xlu0 %v4106, 80
        %v4263 = vpop.permute.xlu0 %4262
        %4266 = vrot.lane.b32.xlu0 %v4107, 96
        %v4267 = vpop.permute.xlu0 %4266
        %4270 = vrot.lane.b32.xlu0 %v4108, 112
        %v4271 = vpop.permute.xlu0 %4270
        %4274 = vrot.lane.b32.xlu0 %v4238, 16
        %v4275 = vpop.permute.xlu0 %4274
        %4278 = vrot.lane.b32.xlu0 %v4239, 32
        %v4279 = vpop.permute.xlu0 %4278
        %4282 = vrot.lane.b32.xlu0 %v4240, 48
        %v4283 = vpop.permute.xlu0 %4282
        %4286 = vrot.lane.b32.xlu0 %v4241, 64
        %v4287 = vpop.permute.xlu0 %4286
        %4290 = vrot.lane.b32.xlu0 %v4242, 80
        %v4291 = vpop.permute.xlu0 %4290
        %4294 = vrot.lane.b32.xlu0 %v4243, 96
        %v4295 = vpop.permute.xlu0 %4294
        %4298 = vrot.lane.b32.xlu0 %v4244, 112
        %v4299 = vpop.permute.xlu0 %4298
        %v4301 = vsel %vm646, %v4101, %v4247
        %v4302 = vsel %vm648, %v4301, %v4251
        %v4303 = vsel %vm650, %v4302, %v4255
        %v4304 = vsel %vm652, %v4303, %v4259
        %v4305 = vsel %vm654, %v4304, %v4263
        %v4306 = vsel %vm656, %v4305, %v4267
        %v4307 = vsel %vm658, %v4306, %v4271
        %v4308 = vsel %vm646, %v4237, %v4275
        %v4309 = vsel %vm648, %v4308, %v4279
        %v4310 = vsel %vm650, %v4309, %v4283
        %v4311 = vsel %vm652, %v4310, %v4287
        %v4312 = vsel %vm654, %v4311, %v4291
        %v4313 = vsel %vm656, %v4312, %v4295
        %v4314 = vsel %vm658, %v4313, %v4299
        %v4315 = vpack.c.bf16 %v4307, %v4307
        %v4316 = vpack.c.bf16 %v4314, %v4314
        %v4319 = vunpack.c.l.b16 %v4315
        %v4320 = vunpack.c.l.b16 %v4316
        %v4321 = vpack.c.b16 %v4320, %v4319
        %4323 = vst [vmem:[#allocation5 + $0x10] sm:$0xff] %v4321
        %v4332 = vrot.slane %v3135, 1
        %v4333 = vrot.slane %v3136, 1
        %v4334 = vsel %vm1167, %v4332, %v4333
        %v4335 = vrot.slane %v3137, 1
        %v4336 = vsel %vm1167, %v4333, %v4335
        %v4337 = vrot.slane %v3138, 1
        %v4338 = vrot.slane %v3139, 1
        %v4339 = vsel %vm1167, %v4337, %v4338
        %v4340 = vrot.slane %v3140, 1
        %v4341 = vsel %vm1167, %v4338, %v4340
        %v4342 = vrot.slane %v3141, 1
        %v4343 = vrot.slane %v3142, 1
        %v4344 = vsel %vm1167, %v4342, %v4343
        %v4345 = vrot.slane %v3143, 1
        %v4346 = vsel %vm1167, %v4343, %v4345
        %v4347 = vrot.slane %v3144, 1
        %v4348 = vrot.slane %v3145, 1
        %v4349 = vsel %vm1167, %v4347, %v4348
        %v4350 = vrot.slane %v3146, 1
        %v4351 = vsel %vm1167, %v4348, %v4350
        %v4352 = vrot.slane %v3147, 1
        %v4353 = vrot.slane %v3148, 1
        %v4354 = vsel %vm1167, %v4352, %v4353
        %v4355 = vrot.slane %v3149, 1
        %v4356 = vsel %vm1167, %v4353, %v4355
        %v4357 = vrot.slane %v3150, 1
        %v4358 = vrot.slane %v3151, 1
        %v4359 = vsel %vm1167, %v4357, %v4358
        %v4360 = vrot.slane %v3152, 1
        %v4361 = vsel %vm1167, %v4358, %v4360
        %v4362 = vrot.slane %v3153, 1
        %v4363 = vrot.slane %v3154, 1
        %v4364 = vsel %vm1167, %v4362, %v4363
        %v4365 = vrot.slane %v3155, 1
        %v4366 = vsel %vm1167, %v4363, %v4365
        %v4367 = vrot.slane %v3156, 1
        %v4368 = vrot.slane %v3157, 1
        %v4369 = vsel %vm1167, %v4367, %v4368
        %v4370 = vrot.slane %v3158, 1
        %v4371 = vsel %vm1167, %v4368, %v4370
        %v4388 = vcombine.low %v4334, %v4344
        %v4389 = vcombine.high %v4334, %v4344
        %v4391 = vunpack.c.l.s4 1983009808
        %v4392 = vunpack.c.0.s8 %v4391
        %v4393 = vlaneseq
        %v4394 = vshrl.u32 %v4393, 7
        %v4395 = vsub.s32 %v4392, %v4394
        %v4396 = vrot.slane %v4388, %v4395
        %v4398 = vunpack.c.l.s4 1983009808
        %v4399 = vunpack.c.0.s8 %v4398
        %v4400 = vlaneseq
        %v4401 = vshrl.u32 %v4400, 7
        %v4402 = vsub.s32 %v4399, %v4401
        %v4403 = vrot.slane %v4389, %v4402
        %v4404 = vcombine.low %v4339, %v4349
        %v4405 = vcombine.high %v4339, %v4349
        %v4407 = vunpack.c.l.s4 1983009808
        %v4408 = vunpack.c.0.s8 %v4407
        %v4409 = vlaneseq
        %v4410 = vshrl.u32 %v4409, 7
        %v4411 = vsub.s32 %v4408, %v4410
        %v4412 = vrot.slane %v4404, %v4411
        %v4414 = vunpack.c.l.s4 1983009808
        %v4415 = vunpack.c.0.s8 %v4414
        %v4416 = vlaneseq
        %v4417 = vshrl.u32 %v4416, 7
        %v4418 = vsub.s32 %v4415, %v4417
        %v4419 = vrot.slane %v4405, %v4418
        %v4420 = vcombine.low %v4354, %v4364
        %v4421 = vcombine.high %v4354, %v4364
        %v4423 = vunpack.c.l.s4 1983009808
        %v4424 = vunpack.c.0.s8 %v4423
        %v4425 = vlaneseq
        %v4426 = vshrl.u32 %v4425, 7
        %v4427 = vsub.s32 %v4424, %v4426
        %v4428 = vrot.slane %v4420, %v4427
        %v4430 = vunpack.c.l.s4 1983009808
        %v4431 = vunpack.c.0.s8 %v4430
        %v4432 = vlaneseq
        %v4433 = vshrl.u32 %v4432, 7
        %v4434 = vsub.s32 %v4431, %v4433
        %v4435 = vrot.slane %v4421, %v4434
        %v4436 = vcombine.low %v4359, %v4369
        %v4437 = vcombine.high %v4359, %v4369
        %v4439 = vunpack.c.l.s4 1983009808
        %v4440 = vunpack.c.0.s8 %v4439
        %v4441 = vlaneseq
        %v4442 = vshrl.u32 %v4441, 7
        %v4443 = vsub.s32 %v4440, %v4442
        %v4444 = vrot.slane %v4436, %v4443
        %v4446 = vunpack.c.l.s4 1983009808
        %v4447 = vunpack.c.0.s8 %v4446
        %v4448 = vlaneseq
        %v4449 = vshrl.u32 %v4448, 7
        %v4450 = vsub.s32 %v4447, %v4449
        %v4451 = vrot.slane %v4437, %v4450
        %v4452 = vcombine.low %v4396, %v4412
        %v4453 = vcombine.high %v4396, %v4412
        %v4455 = vunpack.c.l.s4 1934713408
        %v4456 = vunpack.c.0.s8 %v4455
        %v4457 = vlaneseq
        %v4458 = vshrl.u32 %v4457, 7
        %v4459 = vsub.s32 %v4456, %v4458
        %v4460 = vrot.slane %v4452, %v4459
        %v4462 = vunpack.c.l.s4 1934713408
        %v4463 = vunpack.c.0.s8 %v4462
        %v4464 = vlaneseq
        %v4465 = vshrl.u32 %v4464, 7
        %v4466 = vsub.s32 %v4463, %v4465
        %v4467 = vrot.slane %v4453, %v4466
        %v4468 = vcombine.low %v4403, %v4419
        %v4469 = vcombine.high %v4403, %v4419
        %v4471 = vunpack.c.l.s4 1934713408
        %v4472 = vunpack.c.0.s8 %v4471
        %v4473 = vlaneseq
        %v4474 = vshrl.u32 %v4473, 7
        %v4475 = vsub.s32 %v4472, %v4474
        %v4476 = vrot.slane %v4468, %v4475
        %v4478 = vunpack.c.l.s4 1934713408
        %v4479 = vunpack.c.0.s8 %v4478
        %v4480 = vlaneseq
        %v4481 = vshrl.u32 %v4480, 7
        %v4482 = vsub.s32 %v4479, %v4481
        %v4483 = vrot.slane %v4469, %v4482
        %v4484 = vcombine.low %v4428, %v4444
        %v4485 = vcombine.high %v4428, %v4444
        %v4487 = vunpack.c.l.s4 1934713408
        %v4488 = vunpack.c.0.s8 %v4487
        %v4489 = vlaneseq
        %v4490 = vshrl.u32 %v4489, 7
        %v4491 = vsub.s32 %v4488, %v4490
        %v4492 = vrot.slane %v4484, %v4491
        %v4494 = vunpack.c.l.s4 1934713408
        %v4495 = vunpack.c.0.s8 %v4494
        %v4496 = vlaneseq
        %v4497 = vshrl.u32 %v4496, 7
        %v4498 = vsub.s32 %v4495, %v4497
        %v4499 = vrot.slane %v4485, %v4498
        %v4500 = vcombine.low %v4435, %v4451
        %v4501 = vcombine.high %v4435, %v4451
        %v4503 = vunpack.c.l.s4 1934713408
        %v4504 = vunpack.c.0.s8 %v4503
        %v4505 = vlaneseq
        %v4506 = vshrl.u32 %v4505, 7
        %v4507 = vsub.s32 %v4504, %v4506
        %v4508 = vrot.slane %v4500, %v4507
        %v4510 = vunpack.c.l.s4 1934713408
        %v4511 = vunpack.c.0.s8 %v4510
        %v4512 = vlaneseq
        %v4513 = vshrl.u32 %v4512, 7
        %v4514 = vsub.s32 %v4511, %v4513
        %v4515 = vrot.slane %v4501, %v4514
        %v4516 = vcombine.low %v4460, %v4492
        %v4517 = vcombine.high %v4460, %v4492
        %v4518 = vcombine.low %v4467, %v4499
        %v4519 = vcombine.high %v4467, %v4499
        %v4520 = vcombine.low %v4476, %v4508
        %v4521 = vcombine.high %v4476, %v4508
        %v4522 = vcombine.low %v4483, %v4515
        %v4523 = vcombine.high %v4483, %v4515
        %v4524 = vcombine.low %v4336, %v4346
        %v4525 = vcombine.high %v4336, %v4346
        %v4527 = vunpack.c.l.s4 1983009808
        %v4528 = vunpack.c.0.s8 %v4527
        %v4529 = vlaneseq
        %v4530 = vshrl.u32 %v4529, 7
        %v4531 = vsub.s32 %v4528, %v4530
        %v4532 = vrot.slane %v4524, %v4531
        %v4534 = vunpack.c.l.s4 1983009808
        %v4535 = vunpack.c.0.s8 %v4534
        %v4536 = vlaneseq
        %v4537 = vshrl.u32 %v4536, 7
        %v4538 = vsub.s32 %v4535, %v4537
        %v4539 = vrot.slane %v4525, %v4538
        %v4540 = vcombine.low %v4341, %v4351
        %v4541 = vcombine.high %v4341, %v4351
        %v4543 = vunpack.c.l.s4 1983009808
        %v4544 = vunpack.c.0.s8 %v4543
        %v4545 = vlaneseq
        %v4546 = vshrl.u32 %v4545, 7
        %v4547 = vsub.s32 %v4544, %v4546
        %v4548 = vrot.slane %v4540, %v4547
        %v4550 = vunpack.c.l.s4 1983009808
        %v4551 = vunpack.c.0.s8 %v4550
        %v4552 = vlaneseq
        %v4553 = vshrl.u32 %v4552, 7
        %v4554 = vsub.s32 %v4551, %v4553
        %v4555 = vrot.slane %v4541, %v4554
        %v4556 = vcombine.low %v4356, %v4366
        %v4557 = vcombine.high %v4356, %v4366
        %v4559 = vunpack.c.l.s4 1983009808
        %v4560 = vunpack.c.0.s8 %v4559
        %v4561 = vlaneseq
        %v4562 = vshrl.u32 %v4561, 7
        %v4563 = vsub.s32 %v4560, %v4562
        %v4564 = vrot.slane %v4556, %v4563
        %v4566 = vunpack.c.l.s4 1983009808
        %v4567 = vunpack.c.0.s8 %v4566
        %v4568 = vlaneseq
        %v4569 = vshrl.u32 %v4568, 7
        %v4570 = vsub.s32 %v4567, %v4569
        %v4571 = vrot.slane %v4557, %v4570
        %v4572 = vcombine.low %v4361, %v4371
        %v4573 = vcombine.high %v4361, %v4371
        %v4575 = vunpack.c.l.s4 1983009808
        %v4576 = vunpack.c.0.s8 %v4575
        %v4577 = vlaneseq
        %v4578 = vshrl.u32 %v4577, 7
        %v4579 = vsub.s32 %v4576, %v4578
        %v4580 = vrot.slane %v4572, %v4579
        %v4582 = vunpack.c.l.s4 1983009808
        %v4583 = vunpack.c.0.s8 %v4582
        %v4584 = vlaneseq
        %v4585 = vshrl.u32 %v4584, 7
        %v4586 = vsub.s32 %v4583, %v4585
        %v4587 = vrot.slane %v4573, %v4586
        %v4588 = vcombine.low %v4532, %v4548
        %v4589 = vcombine.high %v4532, %v4548
        %v4591 = vunpack.c.l.s4 1934713408
        %v4592 = vunpack.c.0.s8 %v4591
        %v4593 = vlaneseq
        %v4594 = vshrl.u32 %v4593, 7
        %v4595 = vsub.s32 %v4592, %v4594
        %v4596 = vrot.slane %v4588, %v4595
        %v4598 = vunpack.c.l.s4 1934713408
        %v4599 = vunpack.c.0.s8 %v4598
        %v4600 = vlaneseq
        %v4601 = vshrl.u32 %v4600, 7
        %v4602 = vsub.s32 %v4599, %v4601
        %v4603 = vrot.slane %v4589, %v4602
        %v4604 = vcombine.low %v4539, %v4555
        %v4605 = vcombine.high %v4539, %v4555
        %v4607 = vunpack.c.l.s4 1934713408
        %v4608 = vunpack.c.0.s8 %v4607
        %v4609 = vlaneseq
        %v4610 = vshrl.u32 %v4609, 7
        %v4611 = vsub.s32 %v4608, %v4610
        %v4612 = vrot.slane %v4604, %v4611
        %v4614 = vunpack.c.l.s4 1934713408
        %v4615 = vunpack.c.0.s8 %v4614
        %v4616 = vlaneseq
        %v4617 = vshrl.u32 %v4616, 7
        %v4618 = vsub.s32 %v4615, %v4617
        %v4619 = vrot.slane %v4605, %v4618
        %v4620 = vcombine.low %v4564, %v4580
        %v4621 = vcombine.high %v4564, %v4580
        %v4623 = vunpack.c.l.s4 1934713408
        %v4624 = vunpack.c.0.s8 %v4623
        %v4625 = vlaneseq
        %v4626 = vshrl.u32 %v4625, 7
        %v4627 = vsub.s32 %v4624, %v4626
        %v4628 = vrot.slane %v4620, %v4627
        %v4630 = vunpack.c.l.s4 1934713408
        %v4631 = vunpack.c.0.s8 %v4630
        %v4632 = vlaneseq
        %v4633 = vshrl.u32 %v4632, 7
        %v4634 = vsub.s32 %v4631, %v4633
        %v4635 = vrot.slane %v4621, %v4634
        %v4636 = vcombine.low %v4571, %v4587
        %v4637 = vcombine.high %v4571, %v4587
        %v4639 = vunpack.c.l.s4 1934713408
        %v4640 = vunpack.c.0.s8 %v4639
        %v4641 = vlaneseq
        %v4642 = vshrl.u32 %v4641, 7
        %v4643 = vsub.s32 %v4640, %v4642
        %v4644 = vrot.slane %v4636, %v4643
        %v4646 = vunpack.c.l.s4 1934713408
        %v4647 = vunpack.c.0.s8 %v4646
        %v4648 = vlaneseq
        %v4649 = vshrl.u32 %v4648, 7
        %v4650 = vsub.s32 %v4647, %v4649
        %v4651 = vrot.slane %v4637, %v4650
        %v4652 = vcombine.low %v4596, %v4628
        %v4653 = vcombine.high %v4596, %v4628
        %v4654 = vcombine.low %v4603, %v4635
        %v4655 = vcombine.high %v4603, %v4635
        %v4656 = vcombine.low %v4612, %v4644
        %v4657 = vcombine.high %v4612, %v4644
        %v4658 = vcombine.low %v4619, %v4651
        %v4659 = vcombine.high %v4619, %v4651
        %4661 = vrot.lane.b32.xlu0 %v4517, 16
        %v4662 = vpop.permute.xlu0 %4661
        %4665 = vrot.lane.b32.xlu0 %v4518, 32
        %v4666 = vpop.permute.xlu0 %4665
        %4669 = vrot.lane.b32.xlu0 %v4519, 48
        %v4670 = vpop.permute.xlu0 %4669
        %4673 = vrot.lane.b32.xlu0 %v4520, 64
        %v4674 = vpop.permute.xlu0 %4673
        %4677 = vrot.lane.b32.xlu0 %v4521, 80
        %v4678 = vpop.permute.xlu0 %4677
        %4681 = vrot.lane.b32.xlu0 %v4522, 96
        %v4682 = vpop.permute.xlu0 %4681
        %4685 = vrot.lane.b32.xlu0 %v4523, 112
        %v4686 = vpop.permute.xlu0 %4685
        %4689 = vrot.lane.b32.xlu0 %v4653, 16
        %v4690 = vpop.permute.xlu0 %4689
        %4693 = vrot.lane.b32.xlu0 %v4654, 32
        %v4694 = vpop.permute.xlu0 %4693
        %4697 = vrot.lane.b32.xlu0 %v4655, 48
        %v4698 = vpop.permute.xlu0 %4697
        %4701 = vrot.lane.b32.xlu0 %v4656, 64
        %v4702 = vpop.permute.xlu0 %4701
        %4705 = vrot.lane.b32.xlu0 %v4657, 80
        %v4706 = vpop.permute.xlu0 %4705
        %4709 = vrot.lane.b32.xlu0 %v4658, 96
        %v4710 = vpop.permute.xlu0 %4709
        %4713 = vrot.lane.b32.xlu0 %v4659, 112
        %v4714 = vpop.permute.xlu0 %4713
        %v4716 = vsel %vm646, %v4516, %v4662
        %v4717 = vsel %vm648, %v4716, %v4666
        %v4718 = vsel %vm650, %v4717, %v4670
        %v4719 = vsel %vm652, %v4718, %v4674
        %v4720 = vsel %vm654, %v4719, %v4678
        %v4721 = vsel %vm656, %v4720, %v4682
        %v4722 = vsel %vm658, %v4721, %v4686
        %v4723 = vsel %vm646, %v4652, %v4690
        %v4724 = vsel %vm648, %v4723, %v4694
        %v4725 = vsel %vm650, %v4724, %v4698
        %v4726 = vsel %vm652, %v4725, %v4702
        %v4727 = vsel %vm654, %v4726, %v4706
        %v4728 = vsel %vm656, %v4727, %v4710
        %v4729 = vsel %vm658, %v4728, %v4714
        %v4730 = vpack.c.bf16 %v4722, %v4722
        %v4731 = vpack.c.bf16 %v4729, %v4729
        %v4734 = vunpack.c.l.b16 %v4730
        %v4735 = vunpack.c.l.b16 %v4731
        %v4736 = vpack.c.b16 %v4735, %v4734
        %4738 = vst [vmem:[#allocation5 + $0x18] sm:$0xff] %v4736
        %4739 = vrot.lane.b32.xlu0 %v4334, 127
        %v4740 = vpop.permute.xlu0 %4739
        %4741 = vrot.lane.b32.xlu0 %v4336, 127
        %v4742 = vpop.permute.xlu0 %4741
        %4743 = vrot.lane.b32.xlu0 %v4339, 127
        %v4744 = vpop.permute.xlu0 %4743
        %4745 = vrot.lane.b32.xlu0 %v4341, 127
        %v4746 = vpop.permute.xlu0 %4745
        %4747 = vrot.lane.b32.xlu0 %v4344, 127
        %v4748 = vpop.permute.xlu0 %4747
        %4749 = vrot.lane.b32.xlu0 %v4346, 127
        %v4750 = vpop.permute.xlu0 %4749
        %4751 = vrot.lane.b32.xlu0 %v4349, 127
        %v4752 = vpop.permute.xlu0 %4751
        %4753 = vrot.lane.b32.xlu0 %v4351, 127
        %v4754 = vpop.permute.xlu0 %4753
        %4755 = vrot.lane.b32.xlu0 %v4354, 127
        %v4756 = vpop.permute.xlu0 %4755
        %4757 = vrot.lane.b32.xlu0 %v4356, 127
        %v4758 = vpop.permute.xlu0 %4757
        %4759 = vrot.lane.b32.xlu0 %v4359, 127
        %v4760 = vpop.permute.xlu0 %4759
        %4761 = vrot.lane.b32.xlu0 %v4361, 127
        %v4762 = vpop.permute.xlu0 %4761
        %4763 = vrot.lane.b32.xlu0 %v4364, 127
        %v4764 = vpop.permute.xlu0 %4763
        %4765 = vrot.lane.b32.xlu0 %v4366, 127
        %v4766 = vpop.permute.xlu0 %4765
        %4767 = vrot.lane.b32.xlu0 %v4369, 127
        %v4768 = vpop.permute.xlu0 %4767
        %4769 = vrot.lane.b32.xlu0 %v4371, 127
        %v4770 = vpop.permute.xlu0 %4769
        %v4787 = vcombine.low %v4740, %v4748
        %v4788 = vcombine.high %v4740, %v4748
        %v4790 = vunpack.c.l.s4 1983009808
        %v4791 = vunpack.c.0.s8 %v4790
        %v4792 = vlaneseq
        %v4793 = vshrl.u32 %v4792, 7
        %v4794 = vsub.s32 %v4791, %v4793
        %v4795 = vrot.slane %v4787, %v4794
        %v4797 = vunpack.c.l.s4 1983009808
        %v4798 = vunpack.c.0.s8 %v4797
        %v4799 = vlaneseq
        %v4800 = vshrl.u32 %v4799, 7
        %v4801 = vsub.s32 %v4798, %v4800
        %v4802 = vrot.slane %v4788, %v4801
        %v4803 = vcombine.low %v4744, %v4752
        %v4804 = vcombine.high %v4744, %v4752
        %v4806 = vunpack.c.l.s4 1983009808
        %v4807 = vunpack.c.0.s8 %v4806
        %v4808 = vlaneseq
        %v4809 = vshrl.u32 %v4808, 7
        %v4810 = vsub.s32 %v4807, %v4809
        %v4811 = vrot.slane %v4803, %v4810
        %v4813 = vunpack.c.l.s4 1983009808
        %v4814 = vunpack.c.0.s8 %v4813
        %v4815 = vlaneseq
        %v4816 = vshrl.u32 %v4815, 7
        %v4817 = vsub.s32 %v4814, %v4816
        %v4818 = vrot.slane %v4804, %v4817
        %v4819 = vcombine.low %v4756, %v4764
        %v4820 = vcombine.high %v4756, %v4764
        %v4822 = vunpack.c.l.s4 1983009808
        %v4823 = vunpack.c.0.s8 %v4822
        %v4824 = vlaneseq
        %v4825 = vshrl.u32 %v4824, 7
        %v4826 = vsub.s32 %v4823, %v4825
        %v4827 = vrot.slane %v4819, %v4826
        %v4829 = vunpack.c.l.s4 1983009808
        %v4830 = vunpack.c.0.s8 %v4829
        %v4831 = vlaneseq
        %v4832 = vshrl.u32 %v4831, 7
        %v4833 = vsub.s32 %v4830, %v4832
        %v4834 = vrot.slane %v4820, %v4833
        %v4835 = vcombine.low %v4760, %v4768
        %v4836 = vcombine.high %v4760, %v4768
        %v4838 = vunpack.c.l.s4 1983009808
        %v4839 = vunpack.c.0.s8 %v4838
        %v4840 = vlaneseq
        %v4841 = vshrl.u32 %v4840, 7
        %v4842 = vsub.s32 %v4839, %v4841
        %v4843 = vrot.slane %v4835, %v4842
        %v4845 = vunpack.c.l.s4 1983009808
        %v4846 = vunpack.c.0.s8 %v4845
        %v4847 = vlaneseq
        %v4848 = vshrl.u32 %v4847, 7
        %v4849 = vsub.s32 %v4846, %v4848
        %v4850 = vrot.slane %v4836, %v4849
        %v4851 = vcombine.low %v4795, %v4811
        %v4852 = vcombine.high %v4795, %v4811
        %v4854 = vunpack.c.l.s4 1934713408
        %v4855 = vunpack.c.0.s8 %v4854
        %v4856 = vlaneseq
        %v4857 = vshrl.u32 %v4856, 7
        %v4858 = vsub.s32 %v4855, %v4857
        %v4859 = vrot.slane %v4851, %v4858
        %v4861 = vunpack.c.l.s4 1934713408
        %v4862 = vunpack.c.0.s8 %v4861
        %v4863 = vlaneseq
        %v4864 = vshrl.u32 %v4863, 7
        %v4865 = vsub.s32 %v4862, %v4864
        %v4866 = vrot.slane %v4852, %v4865
        %v4867 = vcombine.low %v4802, %v4818
        %v4868 = vcombine.high %v4802, %v4818
        %v4870 = vunpack.c.l.s4 1934713408
        %v4871 = vunpack.c.0.s8 %v4870
        %v4872 = vlaneseq
        %v4873 = vshrl.u32 %v4872, 7
        %v4874 = vsub.s32 %v4871, %v4873
        %v4875 = vrot.slane %v4867, %v4874
        %v4877 = vunpack.c.l.s4 1934713408
        %v4878 = vunpack.c.0.s8 %v4877
        %v4879 = vlaneseq
        %v4880 = vshrl.u32 %v4879, 7
        %v4881 = vsub.s32 %v4878, %v4880
        %v4882 = vrot.slane %v4868, %v4881
        %v4883 = vcombine.low %v4827, %v4843
        %v4884 = vcombine.high %v4827, %v4843
        %v4886 = vunpack.c.l.s4 1934713408
        %v4887 = vunpack.c.0.s8 %v4886
        %v4888 = vlaneseq
        %v4889 = vshrl.u32 %v4888, 7
        %v4890 = vsub.s32 %v4887, %v4889
        %v4891 = vrot.slane %v4883, %v4890
        %v4893 = vunpack.c.l.s4 1934713408
        %v4894 = vunpack.c.0.s8 %v4893
        %v4895 = vlaneseq
        %v4896 = vshrl.u32 %v4895, 7
        %v4897 = vsub.s32 %v4894, %v4896
        %v4898 = vrot.slane %v4884, %v4897
        %v4899 = vcombine.low %v4834, %v4850
        %v4900 = vcombine.high %v4834, %v4850
        %v4902 = vunpack.c.l.s4 1934713408
        %v4903 = vunpack.c.0.s8 %v4902
        %v4904 = vlaneseq
        %v4905 = vshrl.u32 %v4904, 7
        %v4906 = vsub.s32 %v4903, %v4905
        %v4907 = vrot.slane %v4899, %v4906
        %v4909 = vunpack.c.l.s4 1934713408
        %v4910 = vunpack.c.0.s8 %v4909
        %v4911 = vlaneseq
        %v4912 = vshrl.u32 %v4911, 7
        %v4913 = vsub.s32 %v4910, %v4912
        %v4914 = vrot.slane %v4900, %v4913
        %v4915 = vcombine.low %v4859, %v4891
        %v4916 = vcombine.high %v4859, %v4891
        %v4917 = vcombine.low %v4866, %v4898
        %v4918 = vcombine.high %v4866, %v4898
        %v4919 = vcombine.low %v4875, %v4907
        %v4920 = vcombine.high %v4875, %v4907
        %v4921 = vcombine.low %v4882, %v4914
        %v4922 = vcombine.high %v4882, %v4914
        %v4923 = vcombine.low %v4742, %v4750
        %v4924 = vcombine.high %v4742, %v4750
        %v4926 = vunpack.c.l.s4 1983009808
        %v4927 = vunpack.c.0.s8 %v4926
        %v4928 = vlaneseq
        %v4929 = vshrl.u32 %v4928, 7
        %v4930 = vsub.s32 %v4927, %v4929
        %v4931 = vrot.slane %v4923, %v4930
        %v4933 = vunpack.c.l.s4 1983009808
        %v4934 = vunpack.c.0.s8 %v4933
        %v4935 = vlaneseq
        %v4936 = vshrl.u32 %v4935, 7
        %v4937 = vsub.s32 %v4934, %v4936
        %v4938 = vrot.slane %v4924, %v4937
        %v4939 = vcombine.low %v4746, %v4754
        %v4940 = vcombine.high %v4746, %v4754
        %v4942 = vunpack.c.l.s4 1983009808
        %v4943 = vunpack.c.0.s8 %v4942
        %v4944 = vlaneseq
        %v4945 = vshrl.u32 %v4944, 7
        %v4946 = vsub.s32 %v4943, %v4945
        %v4947 = vrot.slane %v4939, %v4946
        %v4949 = vunpack.c.l.s4 1983009808
        %v4950 = vunpack.c.0.s8 %v4949
        %v4951 = vlaneseq
        %v4952 = vshrl.u32 %v4951, 7
        %v4953 = vsub.s32 %v4950, %v4952
        %v4954 = vrot.slane %v4940, %v4953
        %v4955 = vcombine.low %v4758, %v4766
        %v4956 = vcombine.high %v4758, %v4766
        %v4958 = vunpack.c.l.s4 1983009808
        %v4959 = vunpack.c.0.s8 %v4958
        %v4960 = vlaneseq
        %v4961 = vshrl.u32 %v4960, 7
        %v4962 = vsub.s32 %v4959, %v4961
        %v4963 = vrot.slane %v4955, %v4962
        %v4965 = vunpack.c.l.s4 1983009808
        %v4966 = vunpack.c.0.s8 %v4965
        %v4967 = vlaneseq
        %v4968 = vshrl.u32 %v4967, 7
        %v4969 = vsub.s32 %v4966, %v4968
        %v4970 = vrot.slane %v4956, %v4969
        %v4971 = vcombine.low %v4762, %v4770
        %v4972 = vcombine.high %v4762, %v4770
        %v4974 = vunpack.c.l.s4 1983009808
        %v4975 = vunpack.c.0.s8 %v4974
        %v4976 = vlaneseq
        %v4977 = vshrl.u32 %v4976, 7
        %v4978 = vsub.s32 %v4975, %v4977
        %v4979 = vrot.slane %v4971, %v4978
        %v4981 = vunpack.c.l.s4 1983009808
        %v4982 = vunpack.c.0.s8 %v4981
        %v4983 = vlaneseq
        %v4984 = vshrl.u32 %v4983, 7
        %v4985 = vsub.s32 %v4982, %v4984
        %v4986 = vrot.slane %v4972, %v4985
        %v4987 = vcombine.low %v4931, %v4947
        %v4988 = vcombine.high %v4931, %v4947
        %v4990 = vunpack.c.l.s4 1934713408
        %v4991 = vunpack.c.0.s8 %v4990
        %v4992 = vlaneseq
        %v4993 = vshrl.u32 %v4992, 7
        %v4994 = vsub.s32 %v4991, %v4993
        %v4995 = vrot.slane %v4987, %v4994
        %v4997 = vunpack.c.l.s4 1934713408
        %v4998 = vunpack.c.0.s8 %v4997
        %v4999 = vlaneseq
        %v5000 = vshrl.u32 %v4999, 7
        %v5001 = vsub.s32 %v4998, %v5000
        %v5002 = vrot.slane %v4988, %v5001
        %v5003 = vcombine.low %v4938, %v4954
        %v5004 = vcombine.high %v4938, %v4954
        %v5006 = vunpack.c.l.s4 1934713408
        %v5007 = vunpack.c.0.s8 %v5006
        %v5008 = vlaneseq
        %v5009 = vshrl.u32 %v5008, 7
        %v5010 = vsub.s32 %v5007, %v5009
        %v5011 = vrot.slane %v5003, %v5010
        %v5013 = vunpack.c.l.s4 1934713408
        %v5014 = vunpack.c.0.s8 %v5013
        %v5015 = vlaneseq
        %v5016 = vshrl.u32 %v5015, 7
        %v5017 = vsub.s32 %v5014, %v5016
        %v5018 = vrot.slane %v5004, %v5017
        %v5019 = vcombine.low %v4963, %v4979
        %v5020 = vcombine.high %v4963, %v4979
        %v5022 = vunpack.c.l.s4 1934713408
        %v5023 = vunpack.c.0.s8 %v5022
        %v5024 = vlaneseq
        %v5025 = vshrl.u32 %v5024, 7
        %v5026 = vsub.s32 %v5023, %v5025
        %v5027 = vrot.slane %v5019, %v5026
        %v5029 = vunpack.c.l.s4 1934713408
        %v5030 = vunpack.c.0.s8 %v5029
        %v5031 = vlaneseq
        %v5032 = vshrl.u32 %v5031, 7
        %v5033 = vsub.s32 %v5030, %v5032
        %v5034 = vrot.slane %v5020, %v5033
        %v5035 = vcombine.low %v4970, %v4986
        %v5036 = vcombine.high %v4970, %v4986
        %v5038 = vunpack.c.l.s4 1934713408
        %v5039 = vunpack.c.0.s8 %v5038
        %v5040 = vlaneseq
        %v5041 = vshrl.u32 %v5040, 7
        %v5042 = vsub.s32 %v5039, %v5041
        %v5043 = vrot.slane %v5035, %v5042
        %v5045 = vunpack.c.l.s4 1934713408
        %v5046 = vunpack.c.0.s8 %v5045
        %v5047 = vlaneseq
        %v5048 = vshrl.u32 %v5047, 7
        %v5049 = vsub.s32 %v5046, %v5048
        %v5050 = vrot.slane %v5036, %v5049
        %v5051 = vcombine.low %v4995, %v5027
        %v5052 = vcombine.high %v4995, %v5027
        %v5053 = vcombine.low %v5002, %v5034
        %v5054 = vcombine.high %v5002, %v5034
        %v5055 = vcombine.low %v5011, %v5043
        %v5056 = vcombine.high %v5011, %v5043
        %v5057 = vcombine.low %v5018, %v5050
        %v5058 = vcombine.high %v5018, %v5050
        %5060 = vrot.lane.b32.xlu0 %v4916, 16
        %v5061 = vpop.permute.xlu0 %5060
        %5064 = vrot.lane.b32.xlu0 %v4917, 32
        %v5065 = vpop.permute.xlu0 %5064
        %5068 = vrot.lane.b32.xlu0 %v4918, 48
        %v5069 = vpop.permute.xlu0 %5068
        %5072 = vrot.lane.b32.xlu0 %v4919, 64
        %v5073 = vpop.permute.xlu0 %5072
        %5076 = vrot.lane.b32.xlu0 %v4920, 80
        %v5077 = vpop.permute.xlu0 %5076
        %5080 = vrot.lane.b32.xlu0 %v4921, 96
        %v5081 = vpop.permute.xlu0 %5080
        %5084 = vrot.lane.b32.xlu0 %v4922, 112
        %v5085 = vpop.permute.xlu0 %5084
        %5088 = vrot.lane.b32.xlu0 %v5052, 16
        %v5089 = vpop.permute.xlu0 %5088
        %5092 = vrot.lane.b32.xlu0 %v5053, 32
        %v5093 = vpop.permute.xlu0 %5092
        %5096 = vrot.lane.b32.xlu0 %v5054, 48
        %v5097 = vpop.permute.xlu0 %5096
        %5100 = vrot.lane.b32.xlu0 %v5055, 64
        %v5101 = vpop.permute.xlu0 %5100
        %5104 = vrot.lane.b32.xlu0 %v5056, 80
        %v5105 = vpop.permute.xlu0 %5104
        %5108 = vrot.lane.b32.xlu0 %v5057, 96
        %v5109 = vpop.permute.xlu0 %5108
        %5112 = vrot.lane.b32.xlu0 %v5058, 112
        %v5113 = vpop.permute.xlu0 %5112
        %v5115 = vsel %vm646, %v4915, %v5061
        %v5116 = vsel %vm648, %v5115, %v5065
        %v5117 = vsel %vm650, %v5116, %v5069
        %v5118 = vsel %vm652, %v5117, %v5073
        %v5119 = vsel %vm654, %v5118, %v5077
        %v5120 = vsel %vm656, %v5119, %v5081
        %v5121 = vsel %vm658, %v5120, %v5085
        %v5122 = vsel %vm646, %v5051, %v5089
        %v5123 = vsel %vm648, %v5122, %v5093
        %v5124 = vsel %vm650, %v5123, %v5097
        %v5125 = vsel %vm652, %v5124, %v5101
        %v5126 = vsel %vm654, %v5125, %v5105
        %v5127 = vsel %vm656, %v5126, %v5109
        %v5128 = vsel %vm658, %v5127, %v5113
        %v5129 = vpack.c.bf16 %v5121, %v5121
        %v5130 = vpack.c.bf16 %v5128, %v5128
        %v5133 = vunpack.c.l.b16 %v5129
        %v5134 = vunpack.c.l.b16 %v5130
        %v5135 = vpack.c.b16 %v5134, %v5133
        %5137 = vst [vmem:[#allocation5 + $0x20] sm:$0xff] %v5135
        %5138 = vrot.lane.b32.xlu0 %v4334, 126
        %v5139 = vpop.permute.xlu0 %5138
        %5140 = vrot.lane.b32.xlu0 %v4336, 126
        %v5141 = vpop.permute.xlu0 %5140
        %5142 = vrot.lane.b32.xlu0 %v4339, 126
        %v5143 = vpop.permute.xlu0 %5142
        %5144 = vrot.lane.b32.xlu0 %v4341, 126
        %v5145 = vpop.permute.xlu0 %5144
        %5146 = vrot.lane.b32.xlu0 %v4344, 126
        %v5147 = vpop.permute.xlu0 %5146
        %5148 = vrot.lane.b32.xlu0 %v4346, 126
        %v5149 = vpop.permute.xlu0 %5148
        %5150 = vrot.lane.b32.xlu0 %v4349, 126
        %v5151 = vpop.permute.xlu0 %5150
        %5152 = vrot.lane.b32.xlu0 %v4351, 126
        %v5153 = vpop.permute.xlu0 %5152
        %5154 = vrot.lane.b32.xlu0 %v4354, 126
        %v5155 = vpop.permute.xlu0 %5154
        %5156 = vrot.lane.b32.xlu0 %v4356, 126
        %v5157 = vpop.permute.xlu0 %5156
        %5158 = vrot.lane.b32.xlu0 %v4359, 126
        %v5159 = vpop.permute.xlu0 %5158
        %5160 = vrot.lane.b32.xlu0 %v4361, 126
        %v5161 = vpop.permute.xlu0 %5160
        %5162 = vrot.lane.b32.xlu0 %v4364, 126
        %v5163 = vpop.permute.xlu0 %5162
        %5164 = vrot.lane.b32.xlu0 %v4366, 126
        %v5165 = vpop.permute.xlu0 %5164
        %5166 = vrot.lane.b32.xlu0 %v4369, 126
        %v5167 = vpop.permute.xlu0 %5166
        %5168 = vrot.lane.b32.xlu0 %v4371, 126
        %v5169 = vpop.permute.xlu0 %5168
        %v5186 = vcombine.low %v5139, %v5147
        %v5187 = vcombine.high %v5139, %v5147
        %v5189 = vunpack.c.l.s4 1983009808
        %v5190 = vunpack.c.0.s8 %v5189
        %v5191 = vlaneseq
        %v5192 = vshrl.u32 %v5191, 7
        %v5193 = vsub.s32 %v5190, %v5192
        %v5194 = vrot.slane %v5186, %v5193
        %v5196 = vunpack.c.l.s4 1983009808
        %v5197 = vunpack.c.0.s8 %v5196
        %v5198 = vlaneseq
        %v5199 = vshrl.u32 %v5198, 7
        %v5200 = vsub.s32 %v5197, %v5199
        %v5201 = vrot.slane %v5187, %v5200
        %v5202 = vcombine.low %v5143, %v5151
        %v5203 = vcombine.high %v5143, %v5151
        %v5205 = vunpack.c.l.s4 1983009808
        %v5206 = vunpack.c.0.s8 %v5205
        %v5207 = vlaneseq
        %v5208 = vshrl.u32 %v5207, 7
        %v5209 = vsub.s32 %v5206, %v5208
        %v5210 = vrot.slane %v5202, %v5209
        %v5212 = vunpack.c.l.s4 1983009808
        %v5213 = vunpack.c.0.s8 %v5212
        %v5214 = vlaneseq
        %v5215 = vshrl.u32 %v5214, 7
        %v5216 = vsub.s32 %v5213, %v5215
        %v5217 = vrot.slane %v5203, %v5216
        %v5218 = vcombine.low %v5155, %v5163
        %v5219 = vcombine.high %v5155, %v5163
        %v5221 = vunpack.c.l.s4 1983009808
        %v5222 = vunpack.c.0.s8 %v5221
        %v5223 = vlaneseq
        %v5224 = vshrl.u32 %v5223, 7
        %v5225 = vsub.s32 %v5222, %v5224
        %v5226 = vrot.slane %v5218, %v5225
        %v5228 = vunpack.c.l.s4 1983009808
        %v5229 = vunpack.c.0.s8 %v5228
        %v5230 = vlaneseq
        %v5231 = vshrl.u32 %v5230, 7
        %v5232 = vsub.s32 %v5229, %v5231
        %v5233 = vrot.slane %v5219, %v5232
        %v5234 = vcombine.low %v5159, %v5167
        %v5235 = vcombine.high %v5159, %v5167
        %v5237 = vunpack.c.l.s4 1983009808
        %v5238 = vunpack.c.0.s8 %v5237
        %v5239 = vlaneseq
        %v5240 = vshrl.u32 %v5239, 7
        %v5241 = vsub.s32 %v5238, %v5240
        %v5242 = vrot.slane %v5234, %v5241
        %v5244 = vunpack.c.l.s4 1983009808
        %v5245 = vunpack.c.0.s8 %v5244
        %v5246 = vlaneseq
        %v5247 = vshrl.u32 %v5246, 7
        %v5248 = vsub.s32 %v5245, %v5247
        %v5249 = vrot.slane %v5235, %v5248
        %v5250 = vcombine.low %v5194, %v5210
        %v5251 = vcombine.high %v5194, %v5210
        %v5253 = vunpack.c.l.s4 1934713408
        %v5254 = vunpack.c.0.s8 %v5253
        %v5255 = vlaneseq
        %v5256 = vshrl.u32 %v5255, 7
        %v5257 = vsub.s32 %v5254, %v5256
        %v5258 = vrot.slane %v5250, %v5257
        %v5260 = vunpack.c.l.s4 1934713408
        %v5261 = vunpack.c.0.s8 %v5260
        %v5262 = vlaneseq
        %v5263 = vshrl.u32 %v5262, 7
        %v5264 = vsub.s32 %v5261, %v5263
        %v5265 = vrot.slane %v5251, %v5264
        %v5266 = vcombine.low %v5201, %v5217
        %v5267 = vcombine.high %v5201, %v5217
        %v5269 = vunpack.c.l.s4 1934713408
        %v5270 = vunpack.c.0.s8 %v5269
        %v5271 = vlaneseq
        %v5272 = vshrl.u32 %v5271, 7
        %v5273 = vsub.s32 %v5270, %v5272
        %v5274 = vrot.slane %v5266, %v5273
        %v5276 = vunpack.c.l.s4 1934713408
        %v5277 = vunpack.c.0.s8 %v5276
        %v5278 = vlaneseq
        %v5279 = vshrl.u32 %v5278, 7
        %v5280 = vsub.s32 %v5277, %v5279
        %v5281 = vrot.slane %v5267, %v5280
        %v5282 = vcombine.low %v5226, %v5242
        %v5283 = vcombine.high %v5226, %v5242
        %v5285 = vunpack.c.l.s4 1934713408
        %v5286 = vunpack.c.0.s8 %v5285
        %v5287 = vlaneseq
        %v5288 = vshrl.u32 %v5287, 7
        %v5289 = vsub.s32 %v5286, %v5288
        %v5290 = vrot.slane %v5282, %v5289
        %v5292 = vunpack.c.l.s4 1934713408
        %v5293 = vunpack.c.0.s8 %v5292
        %v5294 = vlaneseq
        %v5295 = vshrl.u32 %v5294, 7
        %v5296 = vsub.s32 %v5293, %v5295
        %v5297 = vrot.slane %v5283, %v5296
        %v5298 = vcombine.low %v5233, %v5249
        %v5299 = vcombine.high %v5233, %v5249
        %v5301 = vunpack.c.l.s4 1934713408
        %v5302 = vunpack.c.0.s8 %v5301
        %v5303 = vlaneseq
        %v5304 = vshrl.u32 %v5303, 7
        %v5305 = vsub.s32 %v5302, %v5304
        %v5306 = vrot.slane %v5298, %v5305
        %v5308 = vunpack.c.l.s4 1934713408
        %v5309 = vunpack.c.0.s8 %v5308
        %v5310 = vlaneseq
        %v5311 = vshrl.u32 %v5310, 7
        %v5312 = vsub.s32 %v5309, %v5311
        %v5313 = vrot.slane %v5299, %v5312
        %v5314 = vcombine.low %v5258, %v5290
        %v5315 = vcombine.high %v5258, %v5290
        %v5316 = vcombine.low %v5265, %v5297
        %v5317 = vcombine.high %v5265, %v5297
        %v5318 = vcombine.low %v5274, %v5306
        %v5319 = vcombine.high %v5274, %v5306
        %v5320 = vcombine.low %v5281, %v5313
        %v5321 = vcombine.high %v5281, %v5313
        %v5322 = vcombine.low %v5141, %v5149
        %v5323 = vcombine.high %v5141, %v5149
        %v5325 = vunpack.c.l.s4 1983009808
        %v5326 = vunpack.c.0.s8 %v5325
        %v5327 = vlaneseq
        %v5328 = vshrl.u32 %v5327, 7
        %v5329 = vsub.s32 %v5326, %v5328
        %v5330 = vrot.slane %v5322, %v5329
        %v5332 = vunpack.c.l.s4 1983009808
        %v5333 = vunpack.c.0.s8 %v5332
        %v5334 = vlaneseq
        %v5335 = vshrl.u32 %v5334, 7
        %v5336 = vsub.s32 %v5333, %v5335
        %v5337 = vrot.slane %v5323, %v5336
        %v5338 = vcombine.low %v5145, %v5153
        %v5339 = vcombine.high %v5145, %v5153
        %v5341 = vunpack.c.l.s4 1983009808
        %v5342 = vunpack.c.0.s8 %v5341
        %v5343 = vlaneseq
        %v5344 = vshrl.u32 %v5343, 7
        %v5345 = vsub.s32 %v5342, %v5344
        %v5346 = vrot.slane %v5338, %v5345
        %v5348 = vunpack.c.l.s4 1983009808
        %v5349 = vunpack.c.0.s8 %v5348
        %v5350 = vlaneseq
        %v5351 = vshrl.u32 %v5350, 7
        %v5352 = vsub.s32 %v5349, %v5351
        %v5353 = vrot.slane %v5339, %v5352
        %v5354 = vcombine.low %v5157, %v5165
        %v5355 = vcombine.high %v5157, %v5165
        %v5357 = vunpack.c.l.s4 1983009808
        %v5358 = vunpack.c.0.s8 %v5357
        %v5359 = vlaneseq
        %v5360 = vshrl.u32 %v5359, 7
        %v5361 = vsub.s32 %v5358, %v5360
        %v5362 = vrot.slane %v5354, %v5361
        %v5364 = vunpack.c.l.s4 1983009808
        %v5365 = vunpack.c.0.s8 %v5364
        %v5366 = vlaneseq
        %v5367 = vshrl.u32 %v5366, 7
        %v5368 = vsub.s32 %v5365, %v5367
        %v5369 = vrot.slane %v5355, %v5368
        %v5370 = vcombine.low %v5161, %v5169
        %v5371 = vcombine.high %v5161, %v5169
        %v5373 = vunpack.c.l.s4 1983009808
        %v5374 = vunpack.c.0.s8 %v5373
        %v5375 = vlaneseq
        %v5376 = vshrl.u32 %v5375, 7
        %v5377 = vsub.s32 %v5374, %v5376
        %v5378 = vrot.slane %v5370, %v5377
        %v5380 = vunpack.c.l.s4 1983009808
        %v5381 = vunpack.c.0.s8 %v5380
        %v5382 = vlaneseq
        %v5383 = vshrl.u32 %v5382, 7
        %v5384 = vsub.s32 %v5381, %v5383
        %v5385 = vrot.slane %v5371, %v5384
        %v5386 = vcombine.low %v5330, %v5346
        %v5387 = vcombine.high %v5330, %v5346
        %v5389 = vunpack.c.l.s4 1934713408
        %v5390 = vunpack.c.0.s8 %v5389
        %v5391 = vlaneseq
        %v5392 = vshrl.u32 %v5391, 7
        %v5393 = vsub.s32 %v5390, %v5392
        %v5394 = vrot.slane %v5386, %v5393
        %v5396 = vunpack.c.l.s4 1934713408
        %v5397 = vunpack.c.0.s8 %v5396
        %v5398 = vlaneseq
        %v5399 = vshrl.u32 %v5398, 7
        %v5400 = vsub.s32 %v5397, %v5399
        %v5401 = vrot.slane %v5387, %v5400
        %v5402 = vcombine.low %v5337, %v5353
        %v5403 = vcombine.high %v5337, %v5353
        %v5405 = vunpack.c.l.s4 1934713408
        %v5406 = vunpack.c.0.s8 %v5405
        %v5407 = vlaneseq
        %v5408 = vshrl.u32 %v5407, 7
        %v5409 = vsub.s32 %v5406, %v5408
        %v5410 = vrot.slane %v5402, %v5409
        %v5412 = vunpack.c.l.s4 1934713408
        %v5413 = vunpack.c.0.s8 %v5412
        %v5414 = vlaneseq
        %v5415 = vshrl.u32 %v5414, 7
        %v5416 = vsub.s32 %v5413, %v5415
        %v5417 = vrot.slane %v5403, %v5416
        %v5418 = vcombine.low %v5362, %v5378
        %v5419 = vcombine.high %v5362, %v5378
        %v5421 = vunpack.c.l.s4 1934713408
        %v5422 = vunpack.c.0.s8 %v5421
        %v5423 = vlaneseq
        %v5424 = vshrl.u32 %v5423, 7
        %v5425 = vsub.s32 %v5422, %v5424
        %v5426 = vrot.slane %v5418, %v5425
        %v5428 = vunpack.c.l.s4 1934713408
        %v5429 = vunpack.c.0.s8 %v5428
        %v5430 = vlaneseq
        %v5431 = vshrl.u32 %v5430, 7
        %v5432 = vsub.s32 %v5429, %v5431
        %v5433 = vrot.slane %v5419, %v5432
        %v5434 = vcombine.low %v5369, %v5385
        %v5435 = vcombine.high %v5369, %v5385
        %v5437 = vunpack.c.l.s4 1934713408
        %v5438 = vunpack.c.0.s8 %v5437
        %v5439 = vlaneseq
        %v5440 = vshrl.u32 %v5439, 7
        %v5441 = vsub.s32 %v5438, %v5440
        %v5442 = vrot.slane %v5434, %v5441
        %v5444 = vunpack.c.l.s4 1934713408
        %v5445 = vunpack.c.0.s8 %v5444
        %v5446 = vlaneseq
        %v5447 = vshrl.u32 %v5446, 7
        %v5448 = vsub.s32 %v5445, %v5447
        %v5449 = vrot.slane %v5435, %v5448
        %v5450 = vcombine.low %v5394, %v5426
        %v5451 = vcombine.high %v5394, %v5426
        %v5452 = vcombine.low %v5401, %v5433
        %v5453 = vcombine.high %v5401, %v5433
        %v5454 = vcombine.low %v5410, %v5442
        %v5455 = vcombine.high %v5410, %v5442
        %v5456 = vcombine.low %v5417, %v5449
        %v5457 = vcombine.high %v5417, %v5449
        %5459 = vrot.lane.b32.xlu0 %v5315, 16
        %v5460 = vpop.permute.xlu0 %5459
        %5463 = vrot.lane.b32.xlu0 %v5316, 32
        %v5464 = vpop.permute.xlu0 %5463
        %5467 = vrot.lane.b32.xlu0 %v5317, 48
        %v5468 = vpop.permute.xlu0 %5467
        %5471 = vrot.lane.b32.xlu0 %v5318, 64
        %v5472 = vpop.permute.xlu0 %5471
        %5475 = vrot.lane.b32.xlu0 %v5319, 80
        %v5476 = vpop.permute.xlu0 %5475
        %5479 = vrot.lane.b32.xlu0 %v5320, 96
        %v5480 = vpop.permute.xlu0 %5479
        %5483 = vrot.lane.b32.xlu0 %v5321, 112
        %v5484 = vpop.permute.xlu0 %5483
        %5487 = vrot.lane.b32.xlu0 %v5451, 16
        %v5488 = vpop.permute.xlu0 %5487
        %5491 = vrot.lane.b32.xlu0 %v5452, 32
        %v5492 = vpop.permute.xlu0 %5491
        %5495 = vrot.lane.b32.xlu0 %v5453, 48
        %v5496 = vpop.permute.xlu0 %5495
        %5499 = vrot.lane.b32.xlu0 %v5454, 64
        %v5500 = vpop.permute.xlu0 %5499
        %5503 = vrot.lane.b32.xlu0 %v5455, 80
        %v5504 = vpop.permute.xlu0 %5503
        %5507 = vrot.lane.b32.xlu0 %v5456, 96
        %v5508 = vpop.permute.xlu0 %5507
        %5511 = vrot.lane.b32.xlu0 %v5457, 112
        %v5512 = vpop.permute.xlu0 %5511
        %v5514 = vsel %vm646, %v5314, %v5460
        %v5515 = vsel %vm648, %v5514, %v5464
        %v5516 = vsel %vm650, %v5515, %v5468
        %v5517 = vsel %vm652, %v5516, %v5472
        %v5518 = vsel %vm654, %v5517, %v5476
        %v5519 = vsel %vm656, %v5518, %v5480
        %v5520 = vsel %vm658, %v5519, %v5484
        %v5521 = vsel %vm646, %v5450, %v5488
        %v5522 = vsel %vm648, %v5521, %v5492
        %v5523 = vsel %vm650, %v5522, %v5496
        %v5524 = vsel %vm652, %v5523, %v5500
        %v5525 = vsel %vm654, %v5524, %v5504
        %v5526 = vsel %vm656, %v5525, %v5508
        %v5527 = vsel %vm658, %v5526, %v5512
        %v5528 = vpack.c.bf16 %v5520, %v5520
        %v5529 = vpack.c.bf16 %v5527, %v5527
        %v5532 = vunpack.c.l.b16 %v5528
        %v5533 = vunpack.c.l.b16 %v5529
        %v5534 = vpack.c.b16 %v5533, %v5532
        %5536 = vst [vmem:[#allocation5 + $0x28] sm:$0xff] %v5534
        %v5537 = vrot.slane %v3135, 2
        %v5538 = vrot.slane %v3136, 2
        %v5539 = vsel %vm1891, %v5537, %v5538
        %v5540 = vrot.slane %v3137, 2
        %v5541 = vsel %vm1891, %v5538, %v5540
        %v5542 = vrot.slane %v3138, 2
        %v5543 = vrot.slane %v3139, 2
        %v5544 = vsel %vm1891, %v5542, %v5543
        %v5545 = vrot.slane %v3140, 2
        %v5546 = vsel %vm1891, %v5543, %v5545
        %v5547 = vrot.slane %v3141, 2
        %v5548 = vrot.slane %v3142, 2
        %v5549 = vsel %vm1891, %v5547, %v5548
        %v5550 = vrot.slane %v3143, 2
        %v5551 = vsel %vm1891, %v5548, %v5550
        %v5552 = vrot.slane %v3144, 2
        %v5553 = vrot.slane %v3145, 2
        %v5554 = vsel %vm1891, %v5552, %v5553
        %v5555 = vrot.slane %v3146, 2
        %v5556 = vsel %vm1891, %v5553, %v5555
        %v5557 = vrot.slane %v3147, 2
        %v5558 = vrot.slane %v3148, 2
        %v5559 = vsel %vm1891, %v5557, %v5558
        %v5560 = vrot.slane %v3149, 2
        %v5561 = vsel %vm1891, %v5558, %v5560
        %v5562 = vrot.slane %v3150, 2
        %v5563 = vrot.slane %v3151, 2
        %v5564 = vsel %vm1891, %v5562, %v5563
        %v5565 = vrot.slane %v3152, 2
        %v5566 = vsel %vm1891, %v5563, %v5565
        %v5567 = vrot.slane %v3153, 2
        %v5568 = vrot.slane %v3154, 2
        %v5569 = vsel %vm1891, %v5567, %v5568
        %v5570 = vrot.slane %v3155, 2
        %v5571 = vsel %vm1891, %v5568, %v5570
        %v5572 = vrot.slane %v3156, 2
        %v5573 = vrot.slane %v3157, 2
        %v5574 = vsel %vm1891, %v5572, %v5573
        %v5575 = vrot.slane %v3158, 2
        %v5576 = vsel %vm1891, %v5573, %v5575
        %v5593 = vcombine.low %v5539, %v5549
        %v5594 = vcombine.high %v5539, %v5549
        %v5596 = vunpack.c.l.s4 1983009808
        %v5597 = vunpack.c.0.s8 %v5596
        %v5598 = vlaneseq
        %v5599 = vshrl.u32 %v5598, 7
        %v5600 = vsub.s32 %v5597, %v5599
        %v5601 = vrot.slane %v5593, %v5600
        %v5603 = vunpack.c.l.s4 1983009808
        %v5604 = vunpack.c.0.s8 %v5603
        %v5605 = vlaneseq
        %v5606 = vshrl.u32 %v5605, 7
        %v5607 = vsub.s32 %v5604, %v5606
        %v5608 = vrot.slane %v5594, %v5607
        %v5609 = vcombine.low %v5544, %v5554
        %v5610 = vcombine.high %v5544, %v5554
        %v5612 = vunpack.c.l.s4 1983009808
        %v5613 = vunpack.c.0.s8 %v5612
        %v5614 = vlaneseq
        %v5615 = vshrl.u32 %v5614, 7
        %v5616 = vsub.s32 %v5613, %v5615
        %v5617 = vrot.slane %v5609, %v5616
        %v5619 = vunpack.c.l.s4 1983009808
        %v5620 = vunpack.c.0.s8 %v5619
        %v5621 = vlaneseq
        %v5622 = vshrl.u32 %v5621, 7
        %v5623 = vsub.s32 %v5620, %v5622
        %v5624 = vrot.slane %v5610, %v5623
        %v5625 = vcombine.low %v5559, %v5569
        %v5626 = vcombine.high %v5559, %v5569
        %v5628 = vunpack.c.l.s4 1983009808
        %v5629 = vunpack.c.0.s8 %v5628
        %v5630 = vlaneseq
        %v5631 = vshrl.u32 %v5630, 7
        %v5632 = vsub.s32 %v5629, %v5631
        %v5633 = vrot.slane %v5625, %v5632
        %v5635 = vunpack.c.l.s4 1983009808
        %v5636 = vunpack.c.0.s8 %v5635
        %v5637 = vlaneseq
        %v5638 = vshrl.u32 %v5637, 7
        %v5639 = vsub.s32 %v5636, %v5638
        %v5640 = vrot.slane %v5626, %v5639
        %v5641 = vcombine.low %v5564, %v5574
        %v5642 = vcombine.high %v5564, %v5574
        %v5644 = vunpack.c.l.s4 1983009808
        %v5645 = vunpack.c.0.s8 %v5644
        %v5646 = vlaneseq
        %v5647 = vshrl.u32 %v5646, 7
        %v5648 = vsub.s32 %v5645, %v5647
        %v5649 = vrot.slane %v5641, %v5648
        %v5651 = vunpack.c.l.s4 1983009808
        %v5652 = vunpack.c.0.s8 %v5651
        %v5653 = vlaneseq
        %v5654 = vshrl.u32 %v5653, 7
        %v5655 = vsub.s32 %v5652, %v5654
        %v5656 = vrot.slane %v5642, %v5655
        %v5657 = vcombine.low %v5601, %v5617
        %v5658 = vcombine.high %v5601, %v5617
        %v5660 = vunpack.c.l.s4 1934713408
        %v5661 = vunpack.c.0.s8 %v5660
        %v5662 = vlaneseq
        %v5663 = vshrl.u32 %v5662, 7
        %v5664 = vsub.s32 %v5661, %v5663
        %v5665 = vrot.slane %v5657, %v5664
        %v5667 = vunpack.c.l.s4 1934713408
        %v5668 = vunpack.c.0.s8 %v5667
        %v5669 = vlaneseq
        %v5670 = vshrl.u32 %v5669, 7
        %v5671 = vsub.s32 %v5668, %v5670
        %v5672 = vrot.slane %v5658, %v5671
        %v5673 = vcombine.low %v5608, %v5624
        %v5674 = vcombine.high %v5608, %v5624
        %v5676 = vunpack.c.l.s4 1934713408
        %v5677 = vunpack.c.0.s8 %v5676
        %v5678 = vlaneseq
        %v5679 = vshrl.u32 %v5678, 7
        %v5680 = vsub.s32 %v5677, %v5679
        %v5681 = vrot.slane %v5673, %v5680
        %v5683 = vunpack.c.l.s4 1934713408
        %v5684 = vunpack.c.0.s8 %v5683
        %v5685 = vlaneseq
        %v5686 = vshrl.u32 %v5685, 7
        %v5687 = vsub.s32 %v5684, %v5686
        %v5688 = vrot.slane %v5674, %v5687
        %v5689 = vcombine.low %v5633, %v5649
        %v5690 = vcombine.high %v5633, %v5649
        %v5692 = vunpack.c.l.s4 1934713408
        %v5693 = vunpack.c.0.s8 %v5692
        %v5694 = vlaneseq
        %v5695 = vshrl.u32 %v5694, 7
        %v5696 = vsub.s32 %v5693, %v5695
        %v5697 = vrot.slane %v5689, %v5696
        %v5699 = vunpack.c.l.s4 1934713408
        %v5700 = vunpack.c.0.s8 %v5699
        %v5701 = vlaneseq
        %v5702 = vshrl.u32 %v5701, 7
        %v5703 = vsub.s32 %v5700, %v5702
        %v5704 = vrot.slane %v5690, %v5703
        %v5705 = vcombine.low %v5640, %v5656
        %v5706 = vcombine.high %v5640, %v5656
        %v5708 = vunpack.c.l.s4 1934713408
        %v5709 = vunpack.c.0.s8 %v5708
        %v5710 = vlaneseq
        %v5711 = vshrl.u32 %v5710, 7
        %v5712 = vsub.s32 %v5709, %v5711
        %v5713 = vrot.slane %v5705, %v5712
        %v5715 = vunpack.c.l.s4 1934713408
        %v5716 = vunpack.c.0.s8 %v5715
        %v5717 = vlaneseq
        %v5718 = vshrl.u32 %v5717, 7
        %v5719 = vsub.s32 %v5716, %v5718
        %v5720 = vrot.slane %v5706, %v5719
        %v5721 = vcombine.low %v5665, %v5697
        %v5722 = vcombine.high %v5665, %v5697
        %v5723 = vcombine.low %v5672, %v5704
        %v5724 = vcombine.high %v5672, %v5704
        %v5725 = vcombine.low %v5681, %v5713
        %v5726 = vcombine.high %v5681, %v5713
        %v5727 = vcombine.low %v5688, %v5720
        %v5728 = vcombine.high %v5688, %v5720
        %v5729 = vcombine.low %v5541, %v5551
        %v5730 = vcombine.high %v5541, %v5551
        %v5732 = vunpack.c.l.s4 1983009808
        %v5733 = vunpack.c.0.s8 %v5732
        %v5734 = vlaneseq
        %v5735 = vshrl.u32 %v5734, 7
        %v5736 = vsub.s32 %v5733, %v5735
        %v5737 = vrot.slane %v5729, %v5736
        %v5739 = vunpack.c.l.s4 1983009808
        %v5740 = vunpack.c.0.s8 %v5739
        %v5741 = vlaneseq
        %v5742 = vshrl.u32 %v5741, 7
        %v5743 = vsub.s32 %v5740, %v5742
        %v5744 = vrot.slane %v5730, %v5743
        %v5745 = vcombine.low %v5546, %v5556
        %v5746 = vcombine.high %v5546, %v5556
        %v5748 = vunpack.c.l.s4 1983009808
        %v5749 = vunpack.c.0.s8 %v5748
        %v5750 = vlaneseq
        %v5751 = vshrl.u32 %v5750, 7
        %v5752 = vsub.s32 %v5749, %v5751
        %v5753 = vrot.slane %v5745, %v5752
        %v5755 = vunpack.c.l.s4 1983009808
        %v5756 = vunpack.c.0.s8 %v5755
        %v5757 = vlaneseq
        %v5758 = vshrl.u32 %v5757, 7
        %v5759 = vsub.s32 %v5756, %v5758
        %v5760 = vrot.slane %v5746, %v5759
        %v5761 = vcombine.low %v5561, %v5571
        %v5762 = vcombine.high %v5561, %v5571
        %v5764 = vunpack.c.l.s4 1983009808
        %v5765 = vunpack.c.0.s8 %v5764
        %v5766 = vlaneseq
        %v5767 = vshrl.u32 %v5766, 7
        %v5768 = vsub.s32 %v5765, %v5767
        %v5769 = vrot.slane %v5761, %v5768
        %v5771 = vunpack.c.l.s4 1983009808
        %v5772 = vunpack.c.0.s8 %v5771
        %v5773 = vlaneseq
        %v5774 = vshrl.u32 %v5773, 7
        %v5775 = vsub.s32 %v5772, %v5774
        %v5776 = vrot.slane %v5762, %v5775
        %v5777 = vcombine.low %v5566, %v5576
        %v5778 = vcombine.high %v5566, %v5576
        %v5780 = vunpack.c.l.s4 1983009808
        %v5781 = vunpack.c.0.s8 %v5780
        %v5782 = vlaneseq
        %v5783 = vshrl.u32 %v5782, 7
        %v5784 = vsub.s32 %v5781, %v5783
        %v5785 = vrot.slane %v5777, %v5784
        %v5787 = vunpack.c.l.s4 1983009808
        %v5788 = vunpack.c.0.s8 %v5787
        %v5789 = vlaneseq
        %v5790 = vshrl.u32 %v5789, 7
        %v5791 = vsub.s32 %v5788, %v5790
        %v5792 = vrot.slane %v5778, %v5791
        %v5793 = vcombine.low %v5737, %v5753
        %v5794 = vcombine.high %v5737, %v5753
        %v5796 = vunpack.c.l.s4 1934713408
        %v5797 = vunpack.c.0.s8 %v5796
        %v5798 = vlaneseq
        %v5799 = vshrl.u32 %v5798, 7
        %v5800 = vsub.s32 %v5797, %v5799
        %v5801 = vrot.slane %v5793, %v5800
        %v5803 = vunpack.c.l.s4 1934713408
        %v5804 = vunpack.c.0.s8 %v5803
        %v5805 = vlaneseq
        %v5806 = vshrl.u32 %v5805, 7
        %v5807 = vsub.s32 %v5804, %v5806
        %v5808 = vrot.slane %v5794, %v5807
        %v5809 = vcombine.low %v5744, %v5760
        %v5810 = vcombine.high %v5744, %v5760
        %v5812 = vunpack.c.l.s4 1934713408
        %v5813 = vunpack.c.0.s8 %v5812
        %v5814 = vlaneseq
        %v5815 = vshrl.u32 %v5814, 7
        %v5816 = vsub.s32 %v5813, %v5815
        %v5817 = vrot.slane %v5809, %v5816
        %v5819 = vunpack.c.l.s4 1934713408
        %v5820 = vunpack.c.0.s8 %v5819
        %v5821 = vlaneseq
        %v5822 = vshrl.u32 %v5821, 7
        %v5823 = vsub.s32 %v5820, %v5822
        %v5824 = vrot.slane %v5810, %v5823
        %v5825 = vcombine.low %v5769, %v5785
        %v5826 = vcombine.high %v5769, %v5785
        %v5828 = vunpack.c.l.s4 1934713408
        %v5829 = vunpack.c.0.s8 %v5828
        %v5830 = vlaneseq
        %v5831 = vshrl.u32 %v5830, 7
        %v5832 = vsub.s32 %v5829, %v5831
        %v5833 = vrot.slane %v5825, %v5832
        %v5835 = vunpack.c.l.s4 1934713408
        %v5836 = vunpack.c.0.s8 %v5835
        %v5837 = vlaneseq
        %v5838 = vshrl.u32 %v5837, 7
        %v5839 = vsub.s32 %v5836, %v5838
        %v5840 = vrot.slane %v5826, %v5839
        %v5841 = vcombine.low %v5776, %v5792
        %v5842 = vcombine.high %v5776, %v5792
        %v5844 = vunpack.c.l.s4 1934713408
        %v5845 = vunpack.c.0.s8 %v5844
        %v5846 = vlaneseq
        %v5847 = vshrl.u32 %v5846, 7
        %v5848 = vsub.s32 %v5845, %v5847
        %v5849 = vrot.slane %v5841, %v5848
        %v5851 = vunpack.c.l.s4 1934713408
        %v5852 = vunpack.c.0.s8 %v5851
        %v5853 = vlaneseq
        %v5854 = vshrl.u32 %v5853, 7
        %v5855 = vsub.s32 %v5852, %v5854
        %v5856 = vrot.slane %v5842, %v5855
        %v5857 = vcombine.low %v5801, %v5833
        %v5858 = vcombine.high %v5801, %v5833
        %v5859 = vcombine.low %v5808, %v5840
        %v5860 = vcombine.high %v5808, %v5840
        %v5861 = vcombine.low %v5817, %v5849
        %v5862 = vcombine.high %v5817, %v5849
        %v5863 = vcombine.low %v5824, %v5856
        %v5864 = vcombine.high %v5824, %v5856
        %5866 = vrot.lane.b32.xlu0 %v5722, 16
        %v5867 = vpop.permute.xlu0 %5866
        %5870 = vrot.lane.b32.xlu0 %v5723, 32
        %v5871 = vpop.permute.xlu0 %5870
        %5874 = vrot.lane.b32.xlu0 %v5724, 48
        %v5875 = vpop.permute.xlu0 %5874
        %5878 = vrot.lane.b32.xlu0 %v5725, 64
        %v5879 = vpop.permute.xlu0 %5878
        %5882 = vrot.lane.b32.xlu0 %v5726, 80
        %v5883 = vpop.permute.xlu0 %5882
        %5886 = vrot.lane.b32.xlu0 %v5727, 96
        %v5887 = vpop.permute.xlu0 %5886
        %5890 = vrot.lane.b32.xlu0 %v5728, 112
        %v5891 = vpop.permute.xlu0 %5890
        %5894 = vrot.lane.b32.xlu0 %v5858, 16
        %v5895 = vpop.permute.xlu0 %5894
        %5898 = vrot.lane.b32.xlu0 %v5859, 32
        %v5899 = vpop.permute.xlu0 %5898
        %5902 = vrot.lane.b32.xlu0 %v5860, 48
        %v5903 = vpop.permute.xlu0 %5902
        %5906 = vrot.lane.b32.xlu0 %v5861, 64
        %v5907 = vpop.permute.xlu0 %5906
        %5910 = vrot.lane.b32.xlu0 %v5862, 80
        %v5911 = vpop.permute.xlu0 %5910
        %5914 = vrot.lane.b32.xlu0 %v5863, 96
        %v5915 = vpop.permute.xlu0 %5914
        %5918 = vrot.lane.b32.xlu0 %v5864, 112
        %v5919 = vpop.permute.xlu0 %5918
        %v5921 = vsel %vm646, %v5721, %v5867
        %v5922 = vsel %vm648, %v5921, %v5871
        %v5923 = vsel %vm650, %v5922, %v5875
        %v5924 = vsel %vm652, %v5923, %v5879
        %v5925 = vsel %vm654, %v5924, %v5883
        %v5926 = vsel %vm656, %v5925, %v5887
        %v5927 = vsel %vm658, %v5926, %v5891
        %v5928 = vsel %vm646, %v5857, %v5895
        %v5929 = vsel %vm648, %v5928, %v5899
        %v5930 = vsel %vm650, %v5929, %v5903
        %v5931 = vsel %vm652, %v5930, %v5907
        %v5932 = vsel %vm654, %v5931, %v5911
        %v5933 = vsel %vm656, %v5932, %v5915
        %v5934 = vsel %vm658, %v5933, %v5919
        %v5935 = vpack.c.bf16 %v5927, %v5927
        %v5936 = vpack.c.bf16 %v5934, %v5934
        %v5939 = vunpack.c.l.b16 %v5935
        %v5940 = vunpack.c.l.b16 %v5936
        %v5941 = vpack.c.b16 %v5940, %v5939
        %5943 = vst [vmem:[#allocation5 + $0x30] sm:$0xff] %v5941
        %5944 = vrot.lane.b32.xlu0 %v5539, 127
        %v5945 = vpop.permute.xlu0 %5944
        %5946 = vrot.lane.b32.xlu0 %v5541, 127
        %v5947 = vpop.permute.xlu0 %5946
        %5948 = vrot.lane.b32.xlu0 %v5544, 127
        %v5949 = vpop.permute.xlu0 %5948
        %5950 = vrot.lane.b32.xlu0 %v5546, 127
        %v5951 = vpop.permute.xlu0 %5950
        %5952 = vrot.lane.b32.xlu0 %v5549, 127
        %v5953 = vpop.permute.xlu0 %5952
        %5954 = vrot.lane.b32.xlu0 %v5551, 127
        %v5955 = vpop.permute.xlu0 %5954
        %5956 = vrot.lane.b32.xlu0 %v5554, 127
        %v5957 = vpop.permute.xlu0 %5956
        %5958 = vrot.lane.b32.xlu0 %v5556, 127
        %v5959 = vpop.permute.xlu0 %5958
        %5960 = vrot.lane.b32.xlu0 %v5559, 127
        %v5961 = vpop.permute.xlu0 %5960
        %5962 = vrot.lane.b32.xlu0 %v5561, 127
        %v5963 = vpop.permute.xlu0 %5962
        %5964 = vrot.lane.b32.xlu0 %v5564, 127
        %v5965 = vpop.permute.xlu0 %5964
        %5966 = vrot.lane.b32.xlu0 %v5566, 127
        %v5967 = vpop.permute.xlu0 %5966
        %5968 = vrot.lane.b32.xlu0 %v5569, 127
        %v5969 = vpop.permute.xlu0 %5968
        %5970 = vrot.lane.b32.xlu0 %v5571, 127
        %v5971 = vpop.permute.xlu0 %5970
        %5972 = vrot.lane.b32.xlu0 %v5574, 127
        %v5973 = vpop.permute.xlu0 %5972
        %5974 = vrot.lane.b32.xlu0 %v5576, 127
        %v5975 = vpop.permute.xlu0 %5974
        %v5992 = vcombine.low %v5945, %v5953
        %v5993 = vcombine.high %v5945, %v5953
        %v5995 = vunpack.c.l.s4 1983009808
        %v5996 = vunpack.c.0.s8 %v5995
        %v5997 = vlaneseq
        %v5998 = vshrl.u32 %v5997, 7
        %v5999 = vsub.s32 %v5996, %v5998
        %v6000 = vrot.slane %v5992, %v5999
        %v6002 = vunpack.c.l.s4 1983009808
        %v6003 = vunpack.c.0.s8 %v6002
        %v6004 = vlaneseq
        %v6005 = vshrl.u32 %v6004, 7
        %v6006 = vsub.s32 %v6003, %v6005
        %v6007 = vrot.slane %v5993, %v6006
        %v6008 = vcombine.low %v5949, %v5957
        %v6009 = vcombine.high %v5949, %v5957
        %v6011 = vunpack.c.l.s4 1983009808
        %v6012 = vunpack.c.0.s8 %v6011
        %v6013 = vlaneseq
        %v6014 = vshrl.u32 %v6013, 7
        %v6015 = vsub.s32 %v6012, %v6014
        %v6016 = vrot.slane %v6008, %v6015
        %v6018 = vunpack.c.l.s4 1983009808
        %v6019 = vunpack.c.0.s8 %v6018
        %v6020 = vlaneseq
        %v6021 = vshrl.u32 %v6020, 7
        %v6022 = vsub.s32 %v6019, %v6021
        %v6023 = vrot.slane %v6009, %v6022
        %v6024 = vcombine.low %v5961, %v5969
        %v6025 = vcombine.high %v5961, %v5969
        %v6027 = vunpack.c.l.s4 1983009808
        %v6028 = vunpack.c.0.s8 %v6027
        %v6029 = vlaneseq
        %v6030 = vshrl.u32 %v6029, 7
        %v6031 = vsub.s32 %v6028, %v6030
        %v6032 = vrot.slane %v6024, %v6031
        %v6034 = vunpack.c.l.s4 1983009808
        %v6035 = vunpack.c.0.s8 %v6034
        %v6036 = vlaneseq
        %v6037 = vshrl.u32 %v6036, 7
        %v6038 = vsub.s32 %v6035, %v6037
        %v6039 = vrot.slane %v6025, %v6038
        %v6040 = vcombine.low %v5965, %v5973
        %v6041 = vcombine.high %v5965, %v5973
        %v6043 = vunpack.c.l.s4 1983009808
        %v6044 = vunpack.c.0.s8 %v6043
        %v6045 = vlaneseq
        %v6046 = vshrl.u32 %v6045, 7
        %v6047 = vsub.s32 %v6044, %v6046
        %v6048 = vrot.slane %v6040, %v6047
        %v6050 = vunpack.c.l.s4 1983009808
        %v6051 = vunpack.c.0.s8 %v6050
        %v6052 = vlaneseq
        %v6053 = vshrl.u32 %v6052, 7
        %v6054 = vsub.s32 %v6051, %v6053
        %v6055 = vrot.slane %v6041, %v6054
        %v6056 = vcombine.low %v6000, %v6016
        %v6057 = vcombine.high %v6000, %v6016
        %v6059 = vunpack.c.l.s4 1934713408
        %v6060 = vunpack.c.0.s8 %v6059
        %v6061 = vlaneseq
        %v6062 = vshrl.u32 %v6061, 7
        %v6063 = vsub.s32 %v6060, %v6062
        %v6064 = vrot.slane %v6056, %v6063
        %v6066 = vunpack.c.l.s4 1934713408
        %v6067 = vunpack.c.0.s8 %v6066
        %v6068 = vlaneseq
        %v6069 = vshrl.u32 %v6068, 7
        %v6070 = vsub.s32 %v6067, %v6069
        %v6071 = vrot.slane %v6057, %v6070
        %v6072 = vcombine.low %v6007, %v6023
        %v6073 = vcombine.high %v6007, %v6023
        %v6075 = vunpack.c.l.s4 1934713408
        %v6076 = vunpack.c.0.s8 %v6075
        %v6077 = vlaneseq
        %v6078 = vshrl.u32 %v6077, 7
        %v6079 = vsub.s32 %v6076, %v6078
        %v6080 = vrot.slane %v6072, %v6079
        %v6082 = vunpack.c.l.s4 1934713408
        %v6083 = vunpack.c.0.s8 %v6082
        %v6084 = vlaneseq
        %v6085 = vshrl.u32 %v6084, 7
        %v6086 = vsub.s32 %v6083, %v6085
        %v6087 = vrot.slane %v6073, %v6086
        %v6088 = vcombine.low %v6032, %v6048
        %v6089 = vcombine.high %v6032, %v6048
        %v6091 = vunpack.c.l.s4 1934713408
        %v6092 = vunpack.c.0.s8 %v6091
        %v6093 = vlaneseq
        %v6094 = vshrl.u32 %v6093, 7
        %v6095 = vsub.s32 %v6092, %v6094
        %v6096 = vrot.slane %v6088, %v6095
        %v6098 = vunpack.c.l.s4 1934713408
        %v6099 = vunpack.c.0.s8 %v6098
        %v6100 = vlaneseq
        %v6101 = vshrl.u32 %v6100, 7
        %v6102 = vsub.s32 %v6099, %v6101
        %v6103 = vrot.slane %v6089, %v6102
        %v6104 = vcombine.low %v6039, %v6055
        %v6105 = vcombine.high %v6039, %v6055
        %v6107 = vunpack.c.l.s4 1934713408
        %v6108 = vunpack.c.0.s8 %v6107
        %v6109 = vlaneseq
        %v6110 = vshrl.u32 %v6109, 7
        %v6111 = vsub.s32 %v6108, %v6110
        %v6112 = vrot.slane %v6104, %v6111
        %v6114 = vunpack.c.l.s4 1934713408
        %v6115 = vunpack.c.0.s8 %v6114
        %v6116 = vlaneseq
        %v6117 = vshrl.u32 %v6116, 7
        %v6118 = vsub.s32 %v6115, %v6117
        %v6119 = vrot.slane %v6105, %v6118
        %v6120 = vcombine.low %v6064, %v6096
        %v6121 = vcombine.high %v6064, %v6096
        %v6122 = vcombine.low %v6071, %v6103
        %v6123 = vcombine.high %v6071, %v6103
        %v6124 = vcombine.low %v6080, %v6112
        %v6125 = vcombine.high %v6080, %v6112
        %v6126 = vcombine.low %v6087, %v6119
        %v6127 = vcombine.high %v6087, %v6119
        %v6128 = vcombine.low %v5947, %v5955
        %v6129 = vcombine.high %v5947, %v5955
        %v6131 = vunpack.c.l.s4 1983009808
        %v6132 = vunpack.c.0.s8 %v6131
        %v6133 = vlaneseq
        %v6134 = vshrl.u32 %v6133, 7
        %v6135 = vsub.s32 %v6132, %v6134
        %v6136 = vrot.slane %v6128, %v6135
        %v6138 = vunpack.c.l.s4 1983009808
        %v6139 = vunpack.c.0.s8 %v6138
        %v6140 = vlaneseq
        %v6141 = vshrl.u32 %v6140, 7
        %v6142 = vsub.s32 %v6139, %v6141
        %v6143 = vrot.slane %v6129, %v6142
        %v6144 = vcombine.low %v5951, %v5959
        %v6145 = vcombine.high %v5951, %v5959
        %v6147 = vunpack.c.l.s4 1983009808
        %v6148 = vunpack.c.0.s8 %v6147
        %v6149 = vlaneseq
        %v6150 = vshrl.u32 %v6149, 7
        %v6151 = vsub.s32 %v6148, %v6150
        %v6152 = vrot.slane %v6144, %v6151
        %v6154 = vunpack.c.l.s4 1983009808
        %v6155 = vunpack.c.0.s8 %v6154
        %v6156 = vlaneseq
        %v6157 = vshrl.u32 %v6156, 7
        %v6158 = vsub.s32 %v6155, %v6157
        %v6159 = vrot.slane %v6145, %v6158
        %v6160 = vcombine.low %v5963, %v5971
        %v6161 = vcombine.high %v5963, %v5971
        %v6163 = vunpack.c.l.s4 1983009808
        %v6164 = vunpack.c.0.s8 %v6163
        %v6165 = vlaneseq
        %v6166 = vshrl.u32 %v6165, 7
        %v6167 = vsub.s32 %v6164, %v6166
        %v6168 = vrot.slane %v6160, %v6167
        %v6170 = vunpack.c.l.s4 1983009808
        %v6171 = vunpack.c.0.s8 %v6170
        %v6172 = vlaneseq
        %v6173 = vshrl.u32 %v6172, 7
        %v6174 = vsub.s32 %v6171, %v6173
        %v6175 = vrot.slane %v6161, %v6174
        %v6176 = vcombine.low %v5967, %v5975
        %v6177 = vcombine.high %v5967, %v5975
        %v6179 = vunpack.c.l.s4 1983009808
        %v6180 = vunpack.c.0.s8 %v6179
        %v6181 = vlaneseq
        %v6182 = vshrl.u32 %v6181, 7
        %v6183 = vsub.s32 %v6180, %v6182
        %v6184 = vrot.slane %v6176, %v6183
        %v6186 = vunpack.c.l.s4 1983009808
        %v6187 = vunpack.c.0.s8 %v6186
        %v6188 = vlaneseq
        %v6189 = vshrl.u32 %v6188, 7
        %v6190 = vsub.s32 %v6187, %v6189
        %v6191 = vrot.slane %v6177, %v6190
        %v6192 = vcombine.low %v6136, %v6152
        %v6193 = vcombine.high %v6136, %v6152
        %v6195 = vunpack.c.l.s4 1934713408
        %v6196 = vunpack.c.0.s8 %v6195
        %v6197 = vlaneseq
        %v6198 = vshrl.u32 %v6197, 7
        %v6199 = vsub.s32 %v6196, %v6198
        %v6200 = vrot.slane %v6192, %v6199
        %v6202 = vunpack.c.l.s4 1934713408
        %v6203 = vunpack.c.0.s8 %v6202
        %v6204 = vlaneseq
        %v6205 = vshrl.u32 %v6204, 7
        %v6206 = vsub.s32 %v6203, %v6205
        %v6207 = vrot.slane %v6193, %v6206
        %v6208 = vcombine.low %v6143, %v6159
        %v6209 = vcombine.high %v6143, %v6159
        %v6211 = vunpack.c.l.s4 1934713408
        %v6212 = vunpack.c.0.s8 %v6211
        %v6213 = vlaneseq
        %v6214 = vshrl.u32 %v6213, 7
        %v6215 = vsub.s32 %v6212, %v6214
        %v6216 = vrot.slane %v6208, %v6215
        %v6218 = vunpack.c.l.s4 1934713408
        %v6219 = vunpack.c.0.s8 %v6218
        %v6220 = vlaneseq
        %v6221 = vshrl.u32 %v6220, 7
        %v6222 = vsub.s32 %v6219, %v6221
        %v6223 = vrot.slane %v6209, %v6222
        %v6224 = vcombine.low %v6168, %v6184
        %v6225 = vcombine.high %v6168, %v6184
        %v6227 = vunpack.c.l.s4 1934713408
        %v6228 = vunpack.c.0.s8 %v6227
        %v6229 = vlaneseq
        %v6230 = vshrl.u32 %v6229, 7
        %v6231 = vsub.s32 %v6228, %v6230
        %v6232 = vrot.slane %v6224, %v6231
        %v6234 = vunpack.c.l.s4 1934713408
        %v6235 = vunpack.c.0.s8 %v6234
        %v6236 = vlaneseq
        %v6237 = vshrl.u32 %v6236, 7
        %v6238 = vsub.s32 %v6235, %v6237
        %v6239 = vrot.slane %v6225, %v6238
        %v6240 = vcombine.low %v6175, %v6191
        %v6241 = vcombine.high %v6175, %v6191
        %v6243 = vunpack.c.l.s4 1934713408
        %v6244 = vunpack.c.0.s8 %v6243
        %v6245 = vlaneseq
        %v6246 = vshrl.u32 %v6245, 7
        %v6247 = vsub.s32 %v6244, %v6246
        %v6248 = vrot.slane %v6240, %v6247
        %v6250 = vunpack.c.l.s4 1934713408
        %v6251 = vunpack.c.0.s8 %v6250
        %v6252 = vlaneseq
        %v6253 = vshrl.u32 %v6252, 7
        %v6254 = vsub.s32 %v6251, %v6253
        %v6255 = vrot.slane %v6241, %v6254
        %v6256 = vcombine.low %v6200, %v6232
        %v6257 = vcombine.high %v6200, %v6232
        %v6258 = vcombine.low %v6207, %v6239
        %v6259 = vcombine.high %v6207, %v6239
        %v6260 = vcombine.low %v6216, %v6248
        %v6261 = vcombine.high %v6216, %v6248
        %v6262 = vcombine.low %v6223, %v6255
        %v6263 = vcombine.high %v6223, %v6255
        %6265 = vrot.lane.b32.xlu0 %v6121, 16
        %v6266 = vpop.permute.xlu0 %6265
        %6269 = vrot.lane.b32.xlu0 %v6122, 32
        %v6270 = vpop.permute.xlu0 %6269
        %6273 = vrot.lane.b32.xlu0 %v6123, 48
        %v6274 = vpop.permute.xlu0 %6273
        %6277 = vrot.lane.b32.xlu0 %v6124, 64
        %v6278 = vpop.permute.xlu0 %6277
        %6281 = vrot.lane.b32.xlu0 %v6125, 80
        %v6282 = vpop.permute.xlu0 %6281
        %6285 = vrot.lane.b32.xlu0 %v6126, 96
        %v6286 = vpop.permute.xlu0 %6285
        %6289 = vrot.lane.b32.xlu0 %v6127, 112
        %v6290 = vpop.permute.xlu0 %6289
        %6293 = vrot.lane.b32.xlu0 %v6257, 16
        %v6294 = vpop.permute.xlu0 %6293
        %6297 = vrot.lane.b32.xlu0 %v6258, 32
        %v6298 = vpop.permute.xlu0 %6297
        %6301 = vrot.lane.b32.xlu0 %v6259, 48
        %v6302 = vpop.permute.xlu0 %6301
        %6305 = vrot.lane.b32.xlu0 %v6260, 64
        %v6306 = vpop.permute.xlu0 %6305
        %6309 = vrot.lane.b32.xlu0 %v6261, 80
        %v6310 = vpop.permute.xlu0 %6309
        %6313 = vrot.lane.b32.xlu0 %v6262, 96
        %v6314 = vpop.permute.xlu0 %6313
        %6317 = vrot.lane.b32.xlu0 %v6263, 112
        %v6318 = vpop.permute.xlu0 %6317
        %v6320 = vsel %vm646, %v6120, %v6266
        %v6321 = vsel %vm648, %v6320, %v6270
        %v6322 = vsel %vm650, %v6321, %v6274
        %v6323 = vsel %vm652, %v6322, %v6278
        %v6324 = vsel %vm654, %v6323, %v6282
        %v6325 = vsel %vm656, %v6324, %v6286
        %v6326 = vsel %vm658, %v6325, %v6290
        %v6327 = vsel %vm646, %v6256, %v6294
        %v6328 = vsel %vm648, %v6327, %v6298
        %v6329 = vsel %vm650, %v6328, %v6302
        %v6330 = vsel %vm652, %v6329, %v6306
        %v6331 = vsel %vm654, %v6330, %v6310
        %v6332 = vsel %vm656, %v6331, %v6314
        %v6333 = vsel %vm658, %v6332, %v6318
        %v6334 = vpack.c.bf16 %v6326, %v6326
        %v6335 = vpack.c.bf16 %v6333, %v6333
        %v6338 = vunpack.c.l.b16 %v6334
        %v6339 = vunpack.c.l.b16 %v6335
        %v6340 = vpack.c.b16 %v6339, %v6338
        %6342 = vst [vmem:[#allocation5 + $0x38] sm:$0xff] %v6340
        %6343 = vrot.lane.b32.xlu0 %v5539, 126
        %v6344 = vpop.permute.xlu0 %6343
        %6345 = vrot.lane.b32.xlu0 %v5541, 126
        %v6346 = vpop.permute.xlu0 %6345
        %6347 = vrot.lane.b32.xlu0 %v5544, 126
        %v6348 = vpop.permute.xlu0 %6347
        %6349 = vrot.lane.b32.xlu0 %v5546, 126
        %v6350 = vpop.permute.xlu0 %6349
        %6351 = vrot.lane.b32.xlu0 %v5549, 126
        %v6352 = vpop.permute.xlu0 %6351
        %6353 = vrot.lane.b32.xlu0 %v5551, 126
        %v6354 = vpop.permute.xlu0 %6353
        %6355 = vrot.lane.b32.xlu0 %v5554, 126
        %v6356 = vpop.permute.xlu0 %6355
        %6357 = vrot.lane.b32.xlu0 %v5556, 126
        %v6358 = vpop.permute.xlu0 %6357
        %6359 = vrot.lane.b32.xlu0 %v5559, 126
        %v6360 = vpop.permute.xlu0 %6359
        %6361 = vrot.lane.b32.xlu0 %v5561, 126
        %v6362 = vpop.permute.xlu0 %6361
        %6363 = vrot.lane.b32.xlu0 %v5564, 126
        %v6364 = vpop.permute.xlu0 %6363
        %6365 = vrot.lane.b32.xlu0 %v5566, 126
        %v6366 = vpop.permute.xlu0 %6365
        %6367 = vrot.lane.b32.xlu0 %v5569, 126
        %v6368 = vpop.permute.xlu0 %6367
        %6369 = vrot.lane.b32.xlu0 %v5571, 126
        %v6370 = vpop.permute.xlu0 %6369
        %6371 = vrot.lane.b32.xlu0 %v5574, 126
        %v6372 = vpop.permute.xlu0 %6371
        %6373 = vrot.lane.b32.xlu0 %v5576, 126
        %v6374 = vpop.permute.xlu0 %6373
        %v6391 = vcombine.low %v6344, %v6352
        %v6392 = vcombine.high %v6344, %v6352
        %v6394 = vunpack.c.l.s4 1983009808
        %v6395 = vunpack.c.0.s8 %v6394
        %v6396 = vlaneseq
        %v6397 = vshrl.u32 %v6396, 7
        %v6398 = vsub.s32 %v6395, %v6397
        %v6399 = vrot.slane %v6391, %v6398
        %v6401 = vunpack.c.l.s4 1983009808
        %v6402 = vunpack.c.0.s8 %v6401
        %v6403 = vlaneseq
        %v6404 = vshrl.u32 %v6403, 7
        %v6405 = vsub.s32 %v6402, %v6404
        %v6406 = vrot.slane %v6392, %v6405
        %v6407 = vcombine.low %v6348, %v6356
        %v6408 = vcombine.high %v6348, %v6356
        %v6410 = vunpack.c.l.s4 1983009808
        %v6411 = vunpack.c.0.s8 %v6410
        %v6412 = vlaneseq
        %v6413 = vshrl.u32 %v6412, 7
        %v6414 = vsub.s32 %v6411, %v6413
        %v6415 = vrot.slane %v6407, %v6414
        %v6417 = vunpack.c.l.s4 1983009808
        %v6418 = vunpack.c.0.s8 %v6417
        %v6419 = vlaneseq
        %v6420 = vshrl.u32 %v6419, 7
        %v6421 = vsub.s32 %v6418, %v6420
        %v6422 = vrot.slane %v6408, %v6421
        %v6423 = vcombine.low %v6360, %v6368
        %v6424 = vcombine.high %v6360, %v6368
        %v6426 = vunpack.c.l.s4 1983009808
        %v6427 = vunpack.c.0.s8 %v6426
        %v6428 = vlaneseq
        %v6429 = vshrl.u32 %v6428, 7
        %v6430 = vsub.s32 %v6427, %v6429
        %v6431 = vrot.slane %v6423, %v6430
        %v6433 = vunpack.c.l.s4 1983009808
        %v6434 = vunpack.c.0.s8 %v6433
        %v6435 = vlaneseq
        %v6436 = vshrl.u32 %v6435, 7
        %v6437 = vsub.s32 %v6434, %v6436
        %v6438 = vrot.slane %v6424, %v6437
        %v6439 = vcombine.low %v6364, %v6372
        %v6440 = vcombine.high %v6364, %v6372
        %v6442 = vunpack.c.l.s4 1983009808
        %v6443 = vunpack.c.0.s8 %v6442
        %v6444 = vlaneseq
        %v6445 = vshrl.u32 %v6444, 7
        %v6446 = vsub.s32 %v6443, %v6445
        %v6447 = vrot.slane %v6439, %v6446
        %v6449 = vunpack.c.l.s4 1983009808
        %v6450 = vunpack.c.0.s8 %v6449
        %v6451 = vlaneseq
        %v6452 = vshrl.u32 %v6451, 7
        %v6453 = vsub.s32 %v6450, %v6452
        %v6454 = vrot.slane %v6440, %v6453
        %v6455 = vcombine.low %v6399, %v6415
        %v6456 = vcombine.high %v6399, %v6415
        %v6458 = vunpack.c.l.s4 1934713408
        %v6459 = vunpack.c.0.s8 %v6458
        %v6460 = vlaneseq
        %v6461 = vshrl.u32 %v6460, 7
        %v6462 = vsub.s32 %v6459, %v6461
        %v6463 = vrot.slane %v6455, %v6462
        %v6465 = vunpack.c.l.s4 1934713408
        %v6466 = vunpack.c.0.s8 %v6465
        %v6467 = vlaneseq
        %v6468 = vshrl.u32 %v6467, 7
        %v6469 = vsub.s32 %v6466, %v6468
        %v6470 = vrot.slane %v6456, %v6469
        %v6471 = vcombine.low %v6406, %v6422
        %v6472 = vcombine.high %v6406, %v6422
        %v6474 = vunpack.c.l.s4 1934713408
        %v6475 = vunpack.c.0.s8 %v6474
        %v6476 = vlaneseq
        %v6477 = vshrl.u32 %v6476, 7
        %v6478 = vsub.s32 %v6475, %v6477
        %v6479 = vrot.slane %v6471, %v6478
        %v6481 = vunpack.c.l.s4 1934713408
        %v6482 = vunpack.c.0.s8 %v6481
        %v6483 = vlaneseq
        %v6484 = vshrl.u32 %v6483, 7
        %v6485 = vsub.s32 %v6482, %v6484
        %v6486 = vrot.slane %v6472, %v6485
        %v6487 = vcombine.low %v6431, %v6447
        %v6488 = vcombine.high %v6431, %v6447
        %v6490 = vunpack.c.l.s4 1934713408
        %v6491 = vunpack.c.0.s8 %v6490
        %v6492 = vlaneseq
        %v6493 = vshrl.u32 %v6492, 7
        %v6494 = vsub.s32 %v6491, %v6493
        %v6495 = vrot.slane %v6487, %v6494
        %v6497 = vunpack.c.l.s4 1934713408
        %v6498 = vunpack.c.0.s8 %v6497
        %v6499 = vlaneseq
        %v6500 = vshrl.u32 %v6499, 7
        %v6501 = vsub.s32 %v6498, %v6500
        %v6502 = vrot.slane %v6488, %v6501
        %v6503 = vcombine.low %v6438, %v6454
        %v6504 = vcombine.high %v6438, %v6454
        %v6506 = vunpack.c.l.s4 1934713408
        %v6507 = vunpack.c.0.s8 %v6506
        %v6508 = vlaneseq
        %v6509 = vshrl.u32 %v6508, 7
        %v6510 = vsub.s32 %v6507, %v6509
        %v6511 = vrot.slane %v6503, %v6510
        %v6513 = vunpack.c.l.s4 1934713408
        %v6514 = vunpack.c.0.s8 %v6513
        %v6515 = vlaneseq
        %v6516 = vshrl.u32 %v6515, 7
        %v6517 = vsub.s32 %v6514, %v6516
        %v6518 = vrot.slane %v6504, %v6517
        %v6519 = vcombine.low %v6463, %v6495
        %v6520 = vcombine.high %v6463, %v6495
        %v6521 = vcombine.low %v6470, %v6502
        %v6522 = vcombine.high %v6470, %v6502
        %v6523 = vcombine.low %v6479, %v6511
        %v6524 = vcombine.high %v6479, %v6511
        %v6525 = vcombine.low %v6486, %v6518
        %v6526 = vcombine.high %v6486, %v6518
        %v6527 = vcombine.low %v6346, %v6354
        %v6528 = vcombine.high %v6346, %v6354
        %v6530 = vunpack.c.l.s4 1983009808
        %v6531 = vunpack.c.0.s8 %v6530
        %v6532 = vlaneseq
        %v6533 = vshrl.u32 %v6532, 7
        %v6534 = vsub.s32 %v6531, %v6533
        %v6535 = vrot.slane %v6527, %v6534
        %v6537 = vunpack.c.l.s4 1983009808
        %v6538 = vunpack.c.0.s8 %v6537
        %v6539 = vlaneseq
        %v6540 = vshrl.u32 %v6539, 7
        %v6541 = vsub.s32 %v6538, %v6540
        %v6542 = vrot.slane %v6528, %v6541
        %v6543 = vcombine.low %v6350, %v6358
        %v6544 = vcombine.high %v6350, %v6358
        %v6546 = vunpack.c.l.s4 1983009808
        %v6547 = vunpack.c.0.s8 %v6546
        %v6548 = vlaneseq
        %v6549 = vshrl.u32 %v6548, 7
        %v6550 = vsub.s32 %v6547, %v6549
        %v6551 = vrot.slane %v6543, %v6550
        %v6553 = vunpack.c.l.s4 1983009808
        %v6554 = vunpack.c.0.s8 %v6553
        %v6555 = vlaneseq
        %v6556 = vshrl.u32 %v6555, 7
        %v6557 = vsub.s32 %v6554, %v6556
        %v6558 = vrot.slane %v6544, %v6557
        %v6559 = vcombine.low %v6362, %v6370
        %v6560 = vcombine.high %v6362, %v6370
        %v6562 = vunpack.c.l.s4 1983009808
        %v6563 = vunpack.c.0.s8 %v6562
        %v6564 = vlaneseq
        %v6565 = vshrl.u32 %v6564, 7
        %v6566 = vsub.s32 %v6563, %v6565
        %v6567 = vrot.slane %v6559, %v6566
        %v6569 = vunpack.c.l.s4 1983009808
        %v6570 = vunpack.c.0.s8 %v6569
        %v6571 = vlaneseq
        %v6572 = vshrl.u32 %v6571, 7
        %v6573 = vsub.s32 %v6570, %v6572
        %v6574 = vrot.slane %v6560, %v6573
        %v6575 = vcombine.low %v6366, %v6374
        %v6576 = vcombine.high %v6366, %v6374
        %v6578 = vunpack.c.l.s4 1983009808
        %v6579 = vunpack.c.0.s8 %v6578
        %v6580 = vlaneseq
        %v6581 = vshrl.u32 %v6580, 7
        %v6582 = vsub.s32 %v6579, %v6581
        %v6583 = vrot.slane %v6575, %v6582
        %v6585 = vunpack.c.l.s4 1983009808
        %v6586 = vunpack.c.0.s8 %v6585
        %v6587 = vlaneseq
        %v6588 = vshrl.u32 %v6587, 7
        %v6589 = vsub.s32 %v6586, %v6588
        %v6590 = vrot.slane %v6576, %v6589
        %v6591 = vcombine.low %v6535, %v6551
        %v6592 = vcombine.high %v6535, %v6551
        %v6594 = vunpack.c.l.s4 1934713408
        %v6595 = vunpack.c.0.s8 %v6594
        %v6596 = vlaneseq
        %v6597 = vshrl.u32 %v6596, 7
        %v6598 = vsub.s32 %v6595, %v6597
        %v6599 = vrot.slane %v6591, %v6598
        %v6601 = vunpack.c.l.s4 1934713408
        %v6602 = vunpack.c.0.s8 %v6601
        %v6603 = vlaneseq
        %v6604 = vshrl.u32 %v6603, 7
        %v6605 = vsub.s32 %v6602, %v6604
        %v6606 = vrot.slane %v6592, %v6605
        %v6607 = vcombine.low %v6542, %v6558
        %v6608 = vcombine.high %v6542, %v6558
        %v6610 = vunpack.c.l.s4 1934713408
        %v6611 = vunpack.c.0.s8 %v6610
        %v6612 = vlaneseq
        %v6613 = vshrl.u32 %v6612, 7
        %v6614 = vsub.s32 %v6611, %v6613
        %v6615 = vrot.slane %v6607, %v6614
        %v6617 = vunpack.c.l.s4 1934713408
        %v6618 = vunpack.c.0.s8 %v6617
        %v6619 = vlaneseq
        %v6620 = vshrl.u32 %v6619, 7
        %v6621 = vsub.s32 %v6618, %v6620
        %v6622 = vrot.slane %v6608, %v6621
        %v6623 = vcombine.low %v6567, %v6583
        %v6624 = vcombine.high %v6567, %v6583
        %v6626 = vunpack.c.l.s4 1934713408
        %v6627 = vunpack.c.0.s8 %v6626
        %v6628 = vlaneseq
        %v6629 = vshrl.u32 %v6628, 7
        %v6630 = vsub.s32 %v6627, %v6629
        %v6631 = vrot.slane %v6623, %v6630
        %v6633 = vunpack.c.l.s4 1934713408
        %v6634 = vunpack.c.0.s8 %v6633
        %v6635 = vlaneseq
        %v6636 = vshrl.u32 %v6635, 7
        %v6637 = vsub.s32 %v6634, %v6636
        %v6638 = vrot.slane %v6624, %v6637
        %v6639 = vcombine.low %v6574, %v6590
        %v6640 = vcombine.high %v6574, %v6590
        %v6642 = vunpack.c.l.s4 1934713408
        %v6643 = vunpack.c.0.s8 %v6642
        %v6644 = vlaneseq
        %v6645 = vshrl.u32 %v6644, 7
        %v6646 = vsub.s32 %v6643, %v6645
        %v6647 = vrot.slane %v6639, %v6646
        %v6649 = vunpack.c.l.s4 1934713408
        %v6650 = vunpack.c.0.s8 %v6649
        %v6651 = vlaneseq
        %v6652 = vshrl.u32 %v6651, 7
        %v6653 = vsub.s32 %v6650, %v6652
        %v6654 = vrot.slane %v6640, %v6653
        %v6655 = vcombine.low %v6599, %v6631
        %v6656 = vcombine.high %v6599, %v6631
        %v6657 = vcombine.low %v6606, %v6638
        %v6658 = vcombine.high %v6606, %v6638
        %v6659 = vcombine.low %v6615, %v6647
        %v6660 = vcombine.high %v6615, %v6647
        %v6661 = vcombine.low %v6622, %v6654
        %v6662 = vcombine.high %v6622, %v6654
        %6664 = vrot.lane.b32.xlu0 %v6520, 16
        %v6665 = vpop.permute.xlu0 %6664
        %6668 = vrot.lane.b32.xlu0 %v6521, 32
        %v6669 = vpop.permute.xlu0 %6668
        %6672 = vrot.lane.b32.xlu0 %v6522, 48
        %v6673 = vpop.permute.xlu0 %6672
        %6676 = vrot.lane.b32.xlu0 %v6523, 64
        %v6677 = vpop.permute.xlu0 %6676
        %6680 = vrot.lane.b32.xlu0 %v6524, 80
        %v6681 = vpop.permute.xlu0 %6680
        %6684 = vrot.lane.b32.xlu0 %v6525, 96
        %v6685 = vpop.permute.xlu0 %6684
        %6688 = vrot.lane.b32.xlu0 %v6526, 112
        %v6689 = vpop.permute.xlu0 %6688
        %6692 = vrot.lane.b32.xlu0 %v6656, 16
        %v6693 = vpop.permute.xlu0 %6692
        %6696 = vrot.lane.b32.xlu0 %v6657, 32
        %v6697 = vpop.permute.xlu0 %6696
        %6700 = vrot.lane.b32.xlu0 %v6658, 48
        %v6701 = vpop.permute.xlu0 %6700
        %6704 = vrot.lane.b32.xlu0 %v6659, 64
        %v6705 = vpop.permute.xlu0 %6704
        %6708 = vrot.lane.b32.xlu0 %v6660, 80
        %v6709 = vpop.permute.xlu0 %6708
        %6712 = vrot.lane.b32.xlu0 %v6661, 96
        %v6713 = vpop.permute.xlu0 %6712
        %6716 = vrot.lane.b32.xlu0 %v6662, 112
        %v6717 = vpop.permute.xlu0 %6716
        %v6719 = vsel %vm646, %v6519, %v6665
        %v6720 = vsel %vm648, %v6719, %v6669
        %v6721 = vsel %vm650, %v6720, %v6673
        %v6722 = vsel %vm652, %v6721, %v6677
        %v6723 = vsel %vm654, %v6722, %v6681
        %v6724 = vsel %vm656, %v6723, %v6685
        %v6725 = vsel %vm658, %v6724, %v6689
        %v6726 = vsel %vm646, %v6655, %v6693
        %v6727 = vsel %vm648, %v6726, %v6697
        %v6728 = vsel %vm650, %v6727, %v6701
        %v6729 = vsel %vm652, %v6728, %v6705
        %v6730 = vsel %vm654, %v6729, %v6709
        %v6731 = vsel %vm656, %v6730, %v6713
        %v6732 = vsel %vm658, %v6731, %v6717
        %v6733 = vpack.c.bf16 %v6725, %v6725
        %v6734 = vpack.c.bf16 %v6732, %v6732
        %v6737 = vunpack.c.l.b16 %v6733
        %v6738 = vunpack.c.l.b16 %v6734
        %v6739 = vpack.c.b16 %v6738, %v6737
        %6741 = vst [vmem:[#allocation5 + $0x40] sm:$0xff] %v6739
        %v6742 = vld [vmem:[%s2] sm:$0xf]
        %v6743 = vld [vmem:[#allocation5] sm:$0xff]
        %v6744 = vld [vmem:[#allocation5 + $0x8] sm:$0xff]
        %v6745 = vld [vmem:[#allocation5 + $0x10] sm:$0xff]
        %v6746 = vld [vmem:[#allocation5 + $0x18] sm:$0xff]
        %v6747 = vld [vmem:[#allocation5 + $0x20] sm:$0xff]
        %v6748 = vld [vmem:[#allocation5 + $0x28] sm:$0xff]
        %v6749 = vld [vmem:[#allocation5 + $0x30] sm:$0xff]
        %v6750 = vld [vmem:[#allocation5 + $0x38] sm:$0xff]
        %v6751 = vld [vmem:[#allocation5 + $0x40] sm:$0xff]
        %v6761 = vunpack.c.l.b16 %v6743
        %v6762 = vunpack.c.h.b16 %v6743
        %v6763 = vunpack.c.l.b16 %v6744
        %v6764 = vunpack.c.h.b16 %v6744
        %v6765 = vunpack.c.l.b16 %v6745
        %v6766 = vunpack.c.h.b16 %v6745
        %v6767 = vunpack.c.l.b16 %v6746
        %v6768 = vunpack.c.h.b16 %v6746
        %v6769 = vunpack.c.l.b16 %v6747
        %v6770 = vunpack.c.h.b16 %v6747
        %v6771 = vunpack.c.l.b16 %v6748
        %v6772 = vunpack.c.h.b16 %v6748
        %v6773 = vunpack.c.l.b16 %v6749
        %v6774 = vunpack.c.h.b16 %v6749
        %v6775 = vunpack.c.l.b16 %v6750
        %v6776 = vunpack.c.h.b16 %v6750
        %v6777 = vunpack.c.l.b16 %v6751
        %v6778 = vunpack.c.h.b16 %v6751
        %v6779 = vpack.c.b16 %v6763, %v6761
        %v6780 = vpack.c.b16 %v6764, %v6762
        %v6781 = vpack.c.b16 %v6767, %v6765
        %v6782 = vpack.c.b16 %v6768, %v6766
        %v6783 = vpack.c.b16 %v6771, %v6769
        %v6784 = vpack.c.b16 %v6772, %v6770
        %v6785 = vpack.c.b16 %v6775, %v6773
        %v6786 = vpack.c.b16 %v6776, %v6774
        %v6787 = vpack.c.b16 %v6777, %v6777
        %v6788 = vpack.c.b16 %v6778, %v6778
        %vm6797 = vcmask 588800
        %v6799 = vsel %vm6797, %v6742, 0
        %vm6801 = vcmask 1043456
        %v6803 = vsel %vm6801, %v6787, 0
        %v6806 = vsel %vm6801, %v6788, 0
        %6808 = vmatprep.subr.bf16.mxu0 0
        %6809 = vmatpush1.bf16.msra.mxu0 0
        %6810 = vmatprep.subr.bf16.mxu0 0
        %6811 = vmatpush1.bf16.msra.mxu0 0
        %6812 = vmatprep.subr.bf16.mxu0 0
        %6813 = vmatpush1.bf16.msra.mxu0 0
        %6814 = vmatprep.subr.bf16.mxu0 %v6806
        %6815 = vmatpush1.bf16.msra.mxu0 %v6803
        %6816 = vmatprep.subr.bf16.mxu0 %v6786
        %6817 = vmatpush1.bf16.msra.mxu0 %v6785
        %6818 = vmatprep.subr.bf16.mxu0 %v6784
        %6819 = vmatpush1.bf16.msra.mxu0 %v6783
        %6820 = vmatprep.subr.bf16.mxu0 %v6782
        %6821 = vmatpush1.bf16.msra.mxu0 %v6781
        %6822 = vmatprep.subr.bf16.mxu0 %v6780
        %6823 = vmatpush1.bf16.msra.mxu0 %v6779
        %6824 = vmatprep.subr.bf16.mxu0 0
        %6825 = vmatpush2.bf16.msra.mxu0 0
        %6826 = vmatprep.subr.bf16.mxu0 0
        %6827 = vmatpush2.bf16.msra.mxu0 0
        %6828 = vmatprep.subr.bf16.mxu0 0
        %6829 = vmatpush2.bf16.msra.mxu0 0
        %6830 = vmatprep.subr.bf16.mxu0 0
        %6831 = vmatpush2.bf16.msra.mxu0 0
        %6832 = vmatprep.subr.bf16.mxu0 0
        %6833 = vmatpush2.bf16.msra.mxu0 0
        %6834 = vmatprep.subr.bf16.mxu0 0
        %6835 = vmatpush2.bf16.msra.mxu0 0
        %6836 = vmatprep.subr.bf16.mxu0 0
        %6837 = vmatpush2.bf16.msra.mxu0 0
        %6838 = vmatprep.subr.bf16.mxu0 0
        %6839 = vmatpush2.bf16.msra.mxu0 0
        %6840 = vmatprep.mubr.bf16.mxu0 0
        %6841 = vmatmul.mubr.bf16.gmra.mxu0 %v6799
        %v6842 = vpop.f32.mrf.mxu0
        %v6843 = vadd.f32 0.0, %v6842
        %v6844 = vpop.f32.mrf.mxu0
        %v6845 = vadd.f32 0.0, %v6844
        %v6846 = vpop.f32.mrf.mxu0
        %v6847 = vpop.f32.mrf.mxu0
        %6848 = vdwg.mxu0
        %v6849 = vld [vmem:[%s6] sm:$0xff]
        %6851 = vset.pattern.permute.xlu0 0
        %6852 = vperm.xlu0 %6851, %v6849
        %v6853 = vpop.permute.xlu0 %6852
        %v6855 = vmul.f32 %v6843, %v6853
        %v6856 = vmul.f32 %v6845, %v6853
        %v6857 = vld [vmem:[%s7] sm:$0xff]
        %6859 = vset.pattern.permute.xlu0 0
        %6860 = vperm.xlu0 %6859, %v6857
        %v6861 = vpop.permute.xlu0 %6860
        %v6863 = vadd.f32 %v6855, %v6861
        %v6864 = vadd.f32 %v6856, %v6861
        %v6865 = vld [vmem:[%s341] sm:$0xff]
        %v6866 = vld [vmem:[%s341 + $0x8] sm:$0xff]
        %v6867 = vld [vmem:[%s341 + $0x10] sm:$0xff]
        %v6868 = vld [vmem:[%s341 + $0x18] sm:$0xff]
        %v6869 = vld [vmem:[%s341 + $0x20] sm:$0xff]
        %v6870 = vld [vmem:[%s341 + $0x28] sm:$0xff]
        %v6871 = vld [vmem:[%s341 + $0x30] sm:$0xff]
        %v6872 = vld [vmem:[%s341 + $0x38] sm:$0xff]
        %v6873 = vcombine.low %v6865, %v6869
        %v6874 = vcombine.high %v6865, %v6869
        %v6876 = vunpack.c.l.s4 1983009808
        %v6877 = vunpack.c.0.s8 %v6876
        %v6878 = vlaneseq
        %v6879 = vshrl.u32 %v6878, 7
        %v6880 = vsub.s32 %v6877, %v6879
        %v6881 = vrot.slane %v6873, %v6880
        %v6883 = vunpack.c.l.s4 1983009808
        %v6884 = vunpack.c.0.s8 %v6883
        %v6885 = vlaneseq
        %v6886 = vshrl.u32 %v6885, 7
        %v6887 = vsub.s32 %v6884, %v6886
        %v6888 = vrot.slane %v6874, %v6887
        %v6889 = vcombine.low %v6867, %v6871
        %v6890 = vcombine.high %v6867, %v6871
        %v6892 = vunpack.c.l.s4 1983009808
        %v6893 = vunpack.c.0.s8 %v6892
        %v6894 = vlaneseq
        %v6895 = vshrl.u32 %v6894, 7
        %v6896 = vsub.s32 %v6893, %v6895
        %v6897 = vrot.slane %v6889, %v6896
        %v6899 = vunpack.c.l.s4 1983009808
        %v6900 = vunpack.c.0.s8 %v6899
        %v6901 = vlaneseq
        %v6902 = vshrl.u32 %v6901, 7
        %v6903 = vsub.s32 %v6900, %v6902
        %v6904 = vrot.slane %v6890, %v6903
        %v6905 = vcombine.low %v6881, %v6897
        %v6906 = vcombine.high %v6881, %v6897
        %v6908 = vunpack.c.l.s4 1934713408
        %v6909 = vunpack.c.0.s8 %v6908
        %v6910 = vlaneseq
        %v6911 = vshrl.u32 %v6910, 7
        %v6912 = vsub.s32 %v6909, %v6911
        %v6913 = vrot.slane %v6905, %v6912
        %v6915 = vunpack.c.l.s4 1934713408
        %v6916 = vunpack.c.0.s8 %v6915
        %v6917 = vlaneseq
        %v6918 = vshrl.u32 %v6917, 7
        %v6919 = vsub.s32 %v6916, %v6918
        %v6920 = vrot.slane %v6906, %v6919
        %v6921 = vcombine.low %v6888, %v6904
        %v6922 = vcombine.high %v6888, %v6904
        %v6924 = vunpack.c.l.s4 1934713408
        %v6925 = vunpack.c.0.s8 %v6924
        %v6926 = vlaneseq
        %v6927 = vshrl.u32 %v6926, 7
        %v6928 = vsub.s32 %v6925, %v6927
        %v6929 = vrot.slane %v6921, %v6928
        %v6931 = vunpack.c.l.s4 1934713408
        %v6932 = vunpack.c.0.s8 %v6931
        %v6933 = vlaneseq
        %v6934 = vshrl.u32 %v6933, 7
        %v6935 = vsub.s32 %v6932, %v6934
        %v6936 = vrot.slane %v6922, %v6935
        %v6937 = vcombine.high %v6913, 0.0
        %v6938 = vcombine.high %v6920, 0.0
        %v6939 = vcombine.high %v6929, 0.0
        %v6940 = vcombine.high %v6936, 0.0
        %v6941 = vcombine.low %v6866, %v6870
        %v6942 = vcombine.high %v6866, %v6870
        %v6944 = vunpack.c.l.s4 1983009808
        %v6945 = vunpack.c.0.s8 %v6944
        %v6946 = vlaneseq
        %v6947 = vshrl.u32 %v6946, 7
        %v6948 = vsub.s32 %v6945, %v6947
        %v6949 = vrot.slane %v6941, %v6948
        %v6951 = vunpack.c.l.s4 1983009808
        %v6952 = vunpack.c.0.s8 %v6951
        %v6953 = vlaneseq
        %v6954 = vshrl.u32 %v6953, 7
        %v6955 = vsub.s32 %v6952, %v6954
        %v6956 = vrot.slane %v6942, %v6955
        %v6957 = vcombine.low %v6868, %v6872
        %v6958 = vcombine.high %v6868, %v6872
        %v6960 = vunpack.c.l.s4 1983009808
        %v6961 = vunpack.c.0.s8 %v6960
        %v6962 = vlaneseq
        %v6963 = vshrl.u32 %v6962, 7
        %v6964 = vsub.s32 %v6961, %v6963
        %v6965 = vrot.slane %v6957, %v6964
        %v6967 = vunpack.c.l.s4 1983009808
        %v6968 = vunpack.c.0.s8 %v6967
        %v6969 = vlaneseq
        %v6970 = vshrl.u32 %v6969, 7
        %v6971 = vsub.s32 %v6968, %v6970
        %v6972 = vrot.slane %v6958, %v6971
        %v6973 = vcombine.low %v6949, %v6965
        %v6974 = vcombine.high %v6949, %v6965
        %v6976 = vunpack.c.l.s4 1934713408
        %v6977 = vunpack.c.0.s8 %v6976
        %v6978 = vlaneseq
        %v6979 = vshrl.u32 %v6978, 7
        %v6980 = vsub.s32 %v6977, %v6979
        %v6981 = vrot.slane %v6973, %v6980
        %v6983 = vunpack.c.l.s4 1934713408
        %v6984 = vunpack.c.0.s8 %v6983
        %v6985 = vlaneseq
        %v6986 = vshrl.u32 %v6985, 7
        %v6987 = vsub.s32 %v6984, %v6986
        %v6988 = vrot.slane %v6974, %v6987
        %v6989 = vcombine.low %v6956, %v6972
        %v6990 = vcombine.high %v6956, %v6972
        %v6992 = vunpack.c.l.s4 1934713408
        %v6993 = vunpack.c.0.s8 %v6992
        %v6994 = vlaneseq
        %v6995 = vshrl.u32 %v6994, 7
        %v6996 = vsub.s32 %v6993, %v6995
        %v6997 = vrot.slane %v6989, %v6996
        %v6999 = vunpack.c.l.s4 1934713408
        %v7000 = vunpack.c.0.s8 %v6999
        %v7001 = vlaneseq
        %v7002 = vshrl.u32 %v7001, 7
        %v7003 = vsub.s32 %v7000, %v7002
        %v7004 = vrot.slane %v6990, %v7003
        %v7005 = vcombine.high %v6981, 0.0
        %v7006 = vcombine.high %v6988, 0.0
        %v7007 = vcombine.high %v6997, 0.0
        %v7008 = vcombine.high %v7004, 0.0
        %7010 = vrot.lane.b32.xlu0 %v6937, 16
        %v7011 = vpop.permute.xlu0 %7010
        %7014 = vrot.lane.b32.xlu0 %v6920, 32
        %v7015 = vpop.permute.xlu0 %7014
        %7018 = vrot.lane.b32.xlu0 %v6938, 48
        %v7019 = vpop.permute.xlu0 %7018
        %7022 = vrot.lane.b32.xlu0 %v6929, 64
        %v7023 = vpop.permute.xlu0 %7022
        %7026 = vrot.lane.b32.xlu0 %v6939, 80
        %v7027 = vpop.permute.xlu0 %7026
        %7030 = vrot.lane.b32.xlu0 %v6936, 96
        %v7031 = vpop.permute.xlu0 %7030
        %7034 = vrot.lane.b32.xlu0 %v6940, 112
        %v7035 = vpop.permute.xlu0 %7034
        %7038 = vrot.lane.b32.xlu0 %v7005, 16
        %v7039 = vpop.permute.xlu0 %7038
        %7042 = vrot.lane.b32.xlu0 %v6988, 32
        %v7043 = vpop.permute.xlu0 %7042
        %7046 = vrot.lane.b32.xlu0 %v7006, 48
        %v7047 = vpop.permute.xlu0 %7046
        %7050 = vrot.lane.b32.xlu0 %v6997, 64
        %v7051 = vpop.permute.xlu0 %7050
        %7054 = vrot.lane.b32.xlu0 %v7007, 80
        %v7055 = vpop.permute.xlu0 %7054
        %7058 = vrot.lane.b32.xlu0 %v7004, 96
        %v7059 = vpop.permute.xlu0 %7058
        %7062 = vrot.lane.b32.xlu0 %v7008, 112
        %v7063 = vpop.permute.xlu0 %7062
        %v7065 = vsel %vm646, %v6913, %v7011
        %v7066 = vsel %vm648, %v7065, %v7015
        %v7067 = vsel %vm650, %v7066, %v7019
        %v7068 = vsel %vm652, %v7067, %v7023
        %v7069 = vsel %vm654, %v7068, %v7027
        %v7070 = vsel %vm656, %v7069, %v7031
        %v7071 = vsel %vm658, %v7070, %v7035
        %v7072 = vsel %vm646, %v6981, %v7039
        %v7073 = vsel %vm648, %v7072, %v7043
        %v7074 = vsel %vm650, %v7073, %v7047
        %v7075 = vsel %vm652, %v7074, %v7051
        %v7076 = vsel %vm654, %v7075, %v7055
        %v7077 = vsel %vm656, %v7076, %v7059
        %v7078 = vsel %vm658, %v7077, %v7063
        %v7079 = vld [vmem:[%s3] sm:$0xf]
        %v7080 = vpack.c.bf16 %v7071, %v7071
        %v7081 = vpack.c.bf16 %v7078, %v7078
        %vm7082 = vcmask 31744
        %v7084 = vsel %vm7082, %v7079, 0
        %v7087 = vsel %vm2649, %v7080, 0
        %v7090 = vsel %vm2649, %v7081, 0
        %7092 = vmatprep.subr.bf16.mxu0 0
        %7093 = vmatpush1.bf16.msra.mxu0 0
        %7094 = vmatprep.subr.bf16.mxu0 0
        %7095 = vmatpush1.bf16.msra.mxu0 0
        %7096 = vmatprep.subr.bf16.mxu0 0
        %7097 = vmatpush1.bf16.msra.mxu0 0
        %7098 = vmatprep.subr.bf16.mxu0 0
        %7099 = vmatpush1.bf16.msra.mxu0 0
        %7100 = vmatprep.subr.bf16.mxu0 0
        %7101 = vmatpush1.bf16.msra.mxu0 0
        %7102 = vmatprep.subr.bf16.mxu0 0
        %7103 = vmatpush1.bf16.msra.mxu0 0
        %7104 = vmatprep.subr.bf16.mxu0 0
        %7105 = vmatpush1.bf16.msra.mxu0 0
        %7106 = vmatprep.subr.bf16.mxu0 %v7090
        %7107 = vmatpush1.bf16.msra.mxu0 %v7087
        %7108 = vmatprep.subr.bf16.mxu0 0
        %7109 = vmatpush2.bf16.msra.mxu0 0
        %7110 = vmatprep.subr.bf16.mxu0 0
        %7111 = vmatpush2.bf16.msra.mxu0 0
        %7112 = vmatprep.subr.bf16.mxu0 0
        %7113 = vmatpush2.bf16.msra.mxu0 0
        %7114 = vmatprep.subr.bf16.mxu0 0
        %7115 = vmatpush2.bf16.msra.mxu0 0
        %7116 = vmatprep.subr.bf16.mxu0 0
        %7117 = vmatpush2.bf16.msra.mxu0 0
        %7118 = vmatprep.subr.bf16.mxu0 0
        %7119 = vmatpush2.bf16.msra.mxu0 0
        %7120 = vmatprep.subr.bf16.mxu0 0
        %7121 = vmatpush2.bf16.msra.mxu0 0
        %7122 = vmatprep.subr.bf16.mxu0 0
        %7123 = vmatpush2.bf16.msra.mxu0 0
        %7124 = vmatprep.mubr.bf16.mxu0 0
        %7125 = vmatmul.mubr.bf16.gmra.mxu0 %v7084
        %v7126 = vpop.f32.mrf.mxu0
        %v7127 = vadd.f32 0.0, %v7126
        %v7128 = vpop.f32.mrf.mxu0
        %v7129 = vadd.f32 0.0, %v7128
        %v7130 = vpop.f32.mrf.mxu0
        %v7131 = vpop.f32.mrf.mxu0
        %7132 = vdwg.mxu0
        %v7133 = vld [vmem:[%s8] sm:$0xff]
        %7135 = vset.pattern.permute.xlu0 0
        %7136 = vperm.xlu0 %7135, %v7133
        %v7137 = vpop.permute.xlu0 %7136
        %v7139 = vmul.f32 %v7127, %v7137
        %v7140 = vmul.f32 %v7129, %v7137
        %v7141 = vld [vmem:[%s9] sm:$0xff]
        %7143 = vset.pattern.permute.xlu0 0
        %7144 = vperm.xlu0 %7143, %v7141
        %v7145 = vpop.permute.xlu0 %7144
        %v7147 = vadd.f32 %v7139, %v7145
        %v7148 = vadd.f32 %v7140, %v7145
        %v7149 = vadd.f32 %v6863, %v7147
        %v7150 = vadd.f32 %v6864, %v7148
        %v7151 = vmax.f32 %v7149, 0.0
        %v7152 = vmax.f32 %v7150, 0.0
        %7153 = vst [vmem:[%s377] sm:$0xff] %v7151
        %7154 = vst [vmem:[%s377 + $0x8] sm:$0xff] %v7152
        %s7155 = sand.u32 %s250, 1
        %s7156 = scalar_lea.sflag [#allocation8], %s7155
        %s7157 = sand.u32 %s250, 1
        %s7158 = smul.addr %s7157, 16
        %s7159 = scalar_lea.vmem [#allocation9], %s7158
        // Predicated region
        $region65: #{tpu_custom_call.1} parent=59 // pred_check
          %p7160 = pneg %p260
        $region66: #{tpu_custom_call.1} parent=59 // pred_check_branch
          %7162 = sbr.rel (%p7160) target = $region68
        $region67: #{tpu_custom_call.1} parent=59 // pred_region
          %s7164 = ssub.s32 256, 256
          %7165 = vsyncadd %s7156, %s7164
          %s7166 = smul.addr %s27, 2
          %s7167 = smul.addr %s7166, 128
          %s7168 = scalar_lea.hbm %s10, %s7167
          %s7170 = sshll.u32 %s7159, 4
          %s7171 = int_to_ptr.vmem [resolvable:$true] %s7170
          %7173 = dma.vmem_to_hbm [thread:$0]  %s7171, 256, %s7168, %s7156
        $region68: #{tpu_custom_call.1} parent=59 // pred_fallthru
          _
      $region60: #{tpu_custom_call.1} parent=5 // pred_fallthru
        _
      %p7174 = scmp.le.s32.totalorder 2, %s22
      // Predicated region
      $region69: #{tpu_custom_call.1} parent=5 // pred_check
        %p7175 = pneg %p7174
      $region70: #{tpu_custom_call.1} parent=5 // pred_check_branch
        %7177 = sbr.rel (%p7175) target = $region72
      $region71: #{tpu_custom_call.1} parent=5 // pred_region
        %s7178 = ssub.s32 %s22, 2
        // Predicated region
        $region73: #{tpu_custom_call.1} parent=71 // pred_check
          %p7179 = pneg %p266
        $region74: #{tpu_custom_call.1} parent=71 // pred_check_branch
          %7181 = sbr.rel (%p7179) target = $region76
        $region75: #{tpu_custom_call.1} parent=71 // pred_region
          %s7182 = sand.u32 %s251, 1
          %s7183 = scalar_lea.sflag [#allocation8], %s7182
          %s7184 = sand.u32 %s251, 1
          %s7185 = smul.addr %s7184, 16
          %s7186 = scalar_lea.vmem [#allocation9], %s7185
          %7187 = dma.done %s7183, 256
        $region76: #{tpu_custom_call.1} parent=71 // pred_fallthru
          _
      $region72: #{tpu_custom_call.1} parent=5 // pred_fallthru
        _
    $region6: #{tpu_custom_call.1} parent=1 // loop_footer
      %s26 = sadd.s32 1, %s22
    $region7: #{tpu_custom_call.1} parent=1 // loop_footer_branch
      %21 = sbr.rel target = $region3
    $region8: #{tpu_custom_call.1} parent=1 // loop_exit
      _
    %7188 = vsyncpa [#allocation7], 1
    %s7189 = scalar_lea.sflag [#allocation7], 1
    %7190 = vsyncpa %s7189, 1
    %7191 = vsyncpa [#allocation8], 1
    %s7192 = scalar_lea.sflag [#allocation8], 1
    %7193 = vsyncpa %s7192, 1

</llo_original>
